<compile_context>
chip_gen: v5e
topology: v5e:2x2
jax: 0.10.0
libtpu: 0.0.40
codegen_flags: <defaults>
</compile_context>

<pallas_src>
import jax
import jax.numpy as jnp
from jax.experimental import pallas as pl
from jax.experimental.pallas import tpu as pltpu

LANE = 128
SUBLANE = 8
MAX_TILE_B = 256  # multiple of the MXU M dim on v5e/v6e/v7x


def _round_up(n, m):
    return ((n + m - 1) // m) * m


def _pad2d(a, rows, cols):
    return jnp.pad(a, ((0, rows - a.shape[0]), (0, cols - a.shape[1])))


def mlp_kernel(x_ref, w1_ref, b1_ref, w2_ref, b2_ref, w3_ref, b3_ref,
               w4_ref, b4_ref, o_ref):
    # fc1 + ReLU  (bf16 operands, f32 accumulate, f32 bias)
    h = jnp.dot(x_ref[...], w1_ref[...],
                preferred_element_type=jnp.float32) + b1_ref[...]
    h = jnp.maximum(h, 0.0).astype(w2_ref.dtype)
    # fc2 + ReLU
    h = jnp.dot(h, w2_ref[...],
                preferred_element_type=jnp.float32) + b2_ref[...]
    h = jnp.maximum(h, 0.0).astype(w3_ref.dtype)
    # fc3 + ReLU
    h = jnp.dot(h, w3_ref[...],
                preferred_element_type=jnp.float32) + b3_ref[...]
    h = jnp.maximum(h, 0.0).astype(w4_ref.dtype)
    # fc4 (no activation)
    out = jnp.dot(h, w4_ref[...],
                  preferred_element_type=jnp.float32) + b4_ref[...]
    o_ref[...] = out.astype(o_ref.dtype)


@jax.jit
def neural_net_forward(x, params):
    w1, b1, w2, b2, w3, b3, w4, b4 = params
    B, in_dim = x.shape
    hid = w1.shape[1]
    ncls = w4.shape[1]

    # Lane-aligned (padded) dims -- zero padding is mathematically exact here.
    in_p = _round_up(in_dim, LANE)
    hid_p = _round_up(hid, LANE)
    out_p = _round_up(ncls, LANE)

    # Batch tiling: large tile for MXU fill; pad batch to a tile multiple.
    b_pad = _round_up(B, SUBLANE)
    tile_b = min(MAX_TILE_B, b_pad)
    b_pad = _round_up(b_pad, tile_b)
    grid = (b_pad // tile_b,)

    # Pad + cast operands (bf16 matmul operands, f32 biases).
    xb = _pad2d(x, b_pad, in_p).astype(jnp.bfloat16)
    w1p = _pad2d(w1, in_p, hid_p).astype(jnp.bfloat16)
    w2p = _pad2d(w2, hid_p, hid_p).astype(jnp.bfloat16)
    w3p = _pad2d(w3, hid_p, hid_p).astype(jnp.bfloat16)
    w4p = _pad2d(w4, hid_p, out_p).astype(jnp.bfloat16)
    b1p = _pad2d(b1.reshape(1, -1), 1, hid_p).astype(jnp.float32)
    b2p = _pad2d(b2.reshape(1, -1), 1, hid_p).astype(jnp.float32)
    b3p = _pad2d(b3.reshape(1, -1), 1, hid_p).astype(jnp.float32)
    b4p = _pad2d(b4.reshape(1, -1), 1, out_p).astype(jnp.float32)

    # Grid-invariant (resident) operands: single-buffered, same block each step.
    def resident(shape):
        return pl.BlockSpec(shape, lambda i: (0, 0),
                            pipeline_mode=pl.Buffered(1))

    # VMEM budget: resident weights/biases + double-buffered x/out tiles
    # + headroom for intermediates; capped well under v7x's 64 MiB.
    weight_bytes = 2 * (in_p * hid_p + 2 * hid_p * hid_p + hid_p * out_p)
    bias_bytes = 4 * (3 * hid_p + out_p)
    io_bytes = 2 * (tile_b * in_p * 2) + 2 * (tile_b * out_p * 4)
    interm_bytes = 2 * tile_b * hid_p * 4
    needed = weight_bytes + bias_bytes + io_bytes + interm_bytes + (4 << 20)
    vmem_limit = int(min(max(needed * 3 // 2, 32 << 20), 48 << 20))

    flops = 2 * b_pad * (in_p * hid_p + 2 * hid_p * hid_p + hid_p * out_p)
    bytes_accessed = (xb.size * 2 + weight_bytes + bias_bytes
                      + b_pad * out_p * 4)
    cost = pl.CostEstimate(flops=flops, transcendentals=0,
                           bytes_accessed=bytes_accessed)

    out_padded = pl.pallas_call(
        mlp_kernel,
        out_shape=jax.ShapeDtypeStruct((b_pad, out_p), jnp.float32),
        grid_spec=pltpu.PrefetchScalarGridSpec(
            num_scalar_prefetch=0,
            grid=grid,
            in_specs=[
                pl.BlockSpec((tile_b, in_p), lambda i: (i, 0)),   # x tile
                resident((in_p, hid_p)), resident((1, hid_p)),    # fc1
                resident((hid_p, hid_p)), resident((1, hid_p)),   # fc2
                resident((hid_p, hid_p)), resident((1, hid_p)),   # fc3
                resident((hid_p, out_p)), resident((1, out_p)),   # fc4
            ],
            out_specs=pl.BlockSpec((tile_b, out_p), lambda i: (i, 0)),
        ),
        compiler_params=pltpu.CompilerParams(
            dimension_semantics=("parallel",),
            vmem_limit_bytes=vmem_limit,
        ),
        cost_estimate=cost,
    )(xb, w1p, b1p, w2p, b2p, w3p, b3p, w4p, b4p)

    return out_padded[:B, :ncls]


def init_linear(key, fan_in, fan_out):
    """Deterministic init mimicking torch nn.Linear (uniform +/- 1/sqrt(fan_in))."""
    kw, kb = jax.random.split(key)
    bound = 1.0 / jnp.sqrt(jnp.float32(fan_in))
    w = jax.random.uniform(kw, (fan_in, fan_out), jnp.float32, -bound, bound)
    b = jax.random.uniform(kb, (1, fan_out), jnp.float32, -bound, bound)
    return w, b


def reference_forward(x, params):
    """Reference with the same numerics as the kernel (bf16 operands, f32 acc)."""
    w1, b1, w2, b2, w3, b3, w4, b4 = params

    def lin(h, w, b):
        return jnp.dot(h.astype(jnp.bfloat16), w.astype(jnp.bfloat16),
                       preferred_element_type=jnp.float32) + b.astype(jnp.float32)

    h = jnp.maximum(lin(x, w1, b1), 0.0)
    h = jnp.maximum(lin(h, w2, b2), 0.0)
    h = jnp.maximum(lin(h, w3, b3), 0.0)
    return lin(h, w4, b4)


if __name__ == "__main__":
    # Small shapes consistent with the module (input_size=3072, num_classes=10;
    # hidden shrunk from 3000 to 256 for the smoke test).
    batch = 16
    input_size = 3072
    hidden_size = 256
    num_classes = 10

    key = jax.random.PRNGKey(0)
    kx, k1, k2, k3, k4 = jax.random.split(key, 5)

    x = jax.random.normal(kx, (batch, input_size), jnp.float32)
    w1, b1 = init_linear(k1, input_size, hidden_size)
    w2, b2 = init_linear(k2, hidden_size, hidden_size)
    w3, b3 = init_linear(k3, hidden_size, hidden_size)
    w4, b4 = init_linear(k4, hidden_size, num_classes)
    params = (w1, b1, w2, b2, w3, b3, w4, b4)

    out = neural_net_forward(x, params)
    out = jax.block_until_ready(out)

    ref = reference_forward(x, params)
    assert out.shape == (batch, num_classes)
    assert jnp.allclose(out, ref, rtol=2e-2, atol=2e-2), "mismatch vs reference"

    print("KERNEL_OK")
</pallas_src>

<mosaic_0001>
module attributes {stable_mosaic.version = 11 : i64} {
  func.func @mlp_kernel(%arg0: i32, %arg1: memref<16x3072xbf16, #tpu.memory_space<vmem>>, %arg2: memref<3072x256xbf16, #tpu.memory_space<vmem>>, %arg3: memref<1x256xf32, #tpu.memory_space<vmem>>, %arg4: memref<256x256xbf16, #tpu.memory_space<vmem>>, %arg5: memref<1x256xf32, #tpu.memory_space<vmem>>, %arg6: memref<256x256xbf16, #tpu.memory_space<vmem>>, %arg7: memref<1x256xf32, #tpu.memory_space<vmem>>, %arg8: memref<256x128xbf16, #tpu.memory_space<vmem>>, %arg9: memref<1x128xf32, #tpu.memory_space<vmem>>, %arg10: memref<16x128xf32, #tpu.memory_space<vmem>>) attributes {dimension_semantics = [#tpu.dimension_semantics<parallel>], iteration_bounds = array<i64: 1>, scalar_prefetch = 0 : i64, scratch_operands = 0 : i64, tpu.core_type = #tpu.core_type<tc>, window_params = [{transform_indices = @transform_0, window_bounds = array<i64: 16, 3072>}, {pipeline_mode = #tpu.pipeline_mode<synchronous>, transform_indices = @transform_1, window_bounds = array<i64: 3072, 256>}, {pipeline_mode = #tpu.pipeline_mode<synchronous>, transform_indices = @transform_2, window_bounds = array<i64: 1, 256>}, {pipeline_mode = #tpu.pipeline_mode<synchronous>, transform_indices = @transform_3, window_bounds = array<i64: 256, 256>}, {pipeline_mode = #tpu.pipeline_mode<synchronous>, transform_indices = @transform_4, window_bounds = array<i64: 1, 256>}, {pipeline_mode = #tpu.pipeline_mode<synchronous>, transform_indices = @transform_5, window_bounds = array<i64: 256, 256>}, {pipeline_mode = #tpu.pipeline_mode<synchronous>, transform_indices = @transform_6, window_bounds = array<i64: 1, 256>}, {pipeline_mode = #tpu.pipeline_mode<synchronous>, transform_indices = @transform_7, window_bounds = array<i64: 256, 128>}, {pipeline_mode = #tpu.pipeline_mode<synchronous>, transform_indices = @transform_8, window_bounds = array<i64: 1, 128>}, {transform_indices = @transform_9, window_bounds = array<i64: 16, 128>}]} {
    %c0 = arith.constant 0 : index
    %c0_0 = arith.constant 0 : index
    %0 = vector.load %arg1[%c0, %c0_0] : memref<16x3072xbf16, #tpu.memory_space<vmem>>, vector<16x3072xbf16>
    %c0_1 = arith.constant 0 : index
    %c0_2 = arith.constant 0 : index
    %1 = vector.load %arg2[%c0_1, %c0_2] : memref<3072x256xbf16, #tpu.memory_space<vmem>>, vector<3072x256xbf16>
    %cst = arith.constant dense<0.000000e+00> : vector<16x256xf32>
    %2 = tpu.matmul %0, %1, %cst {dimension_numbers = #tpu.dot_dimension_numbers<[1], [0], [0], [1], [0, 0, 1, 1], [], []>} : vector<16x3072xbf16>, vector<3072x256xbf16>, vector<16x256xf32> -> vector<16x256xf32>
    %c0_3 = arith.constant 0 : index
    %c0_4 = arith.constant 0 : index
    %3 = vector.load %arg3[%c0_3, %c0_4] : memref<1x256xf32, #tpu.memory_space<vmem>>, vector<1x256xf32>
    %4 = vector.broadcast %3 : vector<1x256xf32> to vector<16x256xf32>
    %5 = arith.addf %2, %4 : vector<16x256xf32>
    %cst_5 = arith.constant 0.000000e+00 : f32
    %6 = vector.broadcast %cst_5 : f32 to vector<16x256xf32>
    %7 = arith.maximumf %5, %6 : vector<16x256xf32>
    %8 = arith.truncf %7 : vector<16x256xf32> to vector<16x256xbf16>
    %c0_6 = arith.constant 0 : index
    %c0_7 = arith.constant 0 : index
    %9 = vector.load %arg4[%c0_6, %c0_7] : memref<256x256xbf16, #tpu.memory_space<vmem>>, vector<256x256xbf16>
    %cst_8 = arith.constant dense<0.000000e+00> : vector<16x256xf32>
    %10 = tpu.matmul %8, %9, %cst_8 {dimension_numbers = #tpu.dot_dimension_numbers<[1], [0], [0], [1], [0, 0, 1, 1], [], []>} : vector<16x256xbf16>, vector<256x256xbf16>, vector<16x256xf32> -> vector<16x256xf32>
    %c0_9 = arith.constant 0 : index
    %c0_10 = arith.constant 0 : index
    %11 = vector.load %arg5[%c0_9, %c0_10] : memref<1x256xf32, #tpu.memory_space<vmem>>, vector<1x256xf32>
    %12 = vector.broadcast %11 : vector<1x256xf32> to vector<16x256xf32>
    %13 = arith.addf %10, %12 : vector<16x256xf32>
    %cst_11 = arith.constant 0.000000e+00 : f32
    %14 = vector.broadcast %cst_11 : f32 to vector<16x256xf32>
    %15 = arith.maximumf %13, %14 : vector<16x256xf32>
    %16 = arith.truncf %15 : vector<16x256xf32> to vector<16x256xbf16>
    %c0_12 = arith.constant 0 : index
    %c0_13 = arith.constant 0 : index
    %17 = vector.load %arg6[%c0_12, %c0_13] : memref<256x256xbf16, #tpu.memory_space<vmem>>, vector<256x256xbf16>
    %cst_14 = arith.constant dense<0.000000e+00> : vector<16x256xf32>
    %18 = tpu.matmul %16, %17, %cst_14 {dimension_numbers = #tpu.dot_dimension_numbers<[1], [0], [0], [1], [0, 0, 1, 1], [], []>} : vector<16x256xbf16>, vector<256x256xbf16>, vector<16x256xf32> -> vector<16x256xf32>
    %c0_15 = arith.constant 0 : index
    %c0_16 = arith.constant 0 : index
    %19 = vector.load %arg7[%c0_15, %c0_16] : memref<1x256xf32, #tpu.memory_space<vmem>>, vector<1x256xf32>
    %20 = vector.broadcast %19 : vector<1x256xf32> to vector<16x256xf32>
    %21 = arith.addf %18, %20 : vector<16x256xf32>
    %cst_17 = arith.constant 0.000000e+00 : f32
    %22 = vector.broadcast %cst_17 : f32 to vector<16x256xf32>
    %23 = arith.maximumf %21, %22 : vector<16x256xf32>
    %24 = arith.truncf %23 : vector<16x256xf32> to vector<16x256xbf16>
    %c0_18 = arith.constant 0 : index
    %c0_19 = arith.constant 0 : index
    %25 = vector.load %arg8[%c0_18, %c0_19] : memref<256x128xbf16, #tpu.memory_space<vmem>>, vector<256x128xbf16>
    %cst_20 = arith.constant dense<0.000000e+00> : vector<16x128xf32>
    %26 = tpu.matmul %24, %25, %cst_20 {dimension_numbers = #tpu.dot_dimension_numbers<[1], [0], [0], [1], [0, 0, 1, 1], [], []>} : vector<16x256xbf16>, vector<256x128xbf16>, vector<16x128xf32> -> vector<16x128xf32>
    %c0_21 = arith.constant 0 : index
    %c0_22 = arith.constant 0 : index
    %27 = vector.load %arg9[%c0_21, %c0_22] : memref<1x128xf32, #tpu.memory_space<vmem>>, vector<1x128xf32>
    %28 = vector.broadcast %27 : vector<1x128xf32> to vector<16x128xf32>
    %29 = arith.addf %26, %28 : vector<16x128xf32>
    %c0_23 = arith.constant 0 : index
    %c0_24 = arith.constant 0 : index
    %30 = vector.load %arg10[%c0_23, %c0_24] : memref<16x128xf32, #tpu.memory_space<vmem>>, vector<16x128xf32>
    tpu.vector_store %arg10[%c0_23, %c0_24], %29 {strides = array<i32>} : memref<16x128xf32, #tpu.memory_space<vmem>>, vector<16x128xf32>,
    return
  }
  func.func @transform_0(%arg0: i32) -> (i32, i32) {
    %c0_i32 = arith.constant 0 : i32
    %c0_i32_0 = arith.constant 0 : i32
    return %arg0, %c0_i32 : i32, i32
  }
  func.func @transform_1(%arg0: i32) -> (i32, i32) {
    %c0_i32 = arith.constant 0 : i32
    %c0_i32_0 = arith.constant 0 : i32
    %c0_i32_1 = arith.constant 0 : i32
    return %c0_i32, %c0_i32_0 : i32, i32
  }
  func.func @transform_2(%arg0: i32) -> (i32, i32) {
    %c0_i32 = arith.constant 0 : i32
    %c0_i32_0 = arith.constant 0 : i32
    %c0_i32_1 = arith.constant 0 : i32
    return %c0_i32, %c0_i32_0 : i32, i32
  }
  func.func @transform_3(%arg0: i32) -> (i32, i32) {
    %c0_i32 = arith.constant 0 : i32
    %c0_i32_0 = arith.constant 0 : i32
    %c0_i32_1 = arith.constant 0 : i32
    return %c0_i32, %c0_i32_0 : i32, i32
  }
  func.func @transform_4(%arg0: i32) -> (i32, i32) {
    %c0_i32 = arith.constant 0 : i32
    %c0_i32_0 = arith.constant 0 : i32
    %c0_i32_1 = arith.constant 0 : i32
    return %c0_i32, %c0_i32_0 : i32, i32
  }
  func.func @transform_5(%arg0: i32) -> (i32, i32) {
    %c0_i32 = arith.constant 0 : i32
    %c0_i32_0 = arith.constant 0 : i32
    %c0_i32_1 = arith.constant 0 : i32
    return %c0_i32, %c0_i32_0 : i32, i32
  }
  func.func @transform_6(%arg0: i32) -> (i32, i32) {
    %c0_i32 = arith.constant 0 : i32
    %c0_i32_0 = arith.constant 0 : i32
    %c0_i32_1 = arith.constant 0 : i32
    return %c0_i32, %c0_i32_0 : i32, i32
  }
  func.func @transform_7(%arg0: i32) -> (i32, i32) {
    %c0_i32 = arith.constant 0 : i32
    %c0_i32_0 = arith.constant 0 : i32
    %c0_i32_1 = arith.constant 0 : i32
    return %c0_i32, %c0_i32_0 : i32, i32
  }
  func.func @transform_8(%arg0: i32) -> (i32, i32) {
    %c0_i32 = arith.constant 0 : i32
    %c0_i32_0 = arith.constant 0 : i32
    %c0_i32_1 = arith.constant 0 : i32
    return %c0_i32, %c0_i32_0 : i32, i32
  }
  func.func @transform_9(%arg0: i32) -> (i32, i32) {
    %c0_i32 = arith.constant 0 : i32
    %c0_i32_0 = arith.constant 0 : i32
    return %arg0, %c0_i32 : i32, i32
  }
}

</mosaic_0001>

<llo_original>
// kernel: neural_net_forward.1
$region0: #{neural_net_forward.1}
  #allocation0 [shape = 'u32[]', space=smem, size = 0x4, offset = 0x4, fixed_abs, tag = 'smem constant byte address 0x4 - core index']
  #allocation1 [shape = 'u32[72,128]{1,0:T(1,128)}', space=vmem, size = 0x9000, scoped, tag = 'internal scratch']
  %s0 = inlined_call_operand.vmem [shape: bf16[16,3072], index: 0, kind: input, shape index: {}]
  %s1 = inlined_call_operand.vmem [shape: bf16[3072,256], index: 1, kind: input, shape index: {}]
  %s2 = inlined_call_operand.vmem [shape: f32[1,256], index: 2, kind: input, shape index: {}]
  %s3 = inlined_call_operand.vmem [shape: bf16[256,256], index: 3, kind: input, shape index: {}]
  %s4 = inlined_call_operand.vmem [shape: f32[1,256], index: 4, kind: input, shape index: {}]
  %s5 = inlined_call_operand.vmem [shape: bf16[256,256], index: 5, kind: input, shape index: {}]
  %s6 = inlined_call_operand.vmem [shape: f32[1,256], index: 6, kind: input, shape index: {}]
  %s7 = inlined_call_operand.vmem [shape: bf16[256,128], index: 7, kind: input, shape index: {}]
  %s8 = inlined_call_operand.vmem [shape: f32[1,128], index: 8, kind: input, shape index: {}]
  %s9 = inlined_call_operand.hbm [shape: f32[16,128], index: 9, kind: output, shape index: {}]
  %s10 = sld [smem:[#allocation0]]
  $region46: #{neural_net_forward.1} parent=0
    _
  %s12 = ssub.s32 1, %s10
  %s13 = scalar_select 0, %s12, %s10
  $region1: #{neural_net_forward.1} parent=0
    #allocation2 [shape = 'u8[8192]{0}', space=vmem, size = 0x2000, scoped, tag = 'output window, operand 0, single buffered']
    #allocation3 [shape = 's32[1]{0}', space=sflag, size = 0x4, scoped, tag = 'scoped memory for neural_net_forward.1']
    %14 = vsyncpa [#allocation3], 0
    // Predicated region
    $region2: #{neural_net_forward.1} parent=1 // pred_check
      _
    $region3: #{neural_net_forward.1} parent=1 // pred_check_branch
      %16 = sbr.rel (0) target = $region5
    $region4: #{neural_net_forward.1} parent=1 // pred_region
      _
    $region5: #{neural_net_forward.1} parent=1 // pred_fallthru
      _
    // Predicated region
    $region6: #{neural_net_forward.1} parent=1 // pred_check
      _
    $region7: #{neural_net_forward.1} parent=1 // pred_check_branch
      %18 = sbr.rel (0) target = $region9
    $region8: #{neural_net_forward.1} parent=1 // pred_region
      _
    $region9: #{neural_net_forward.1} parent=1 // pred_fallthru
      _
    // Predicated region
    $region10: #{neural_net_forward.1} parent=1 // pred_check
      _
    $region11: #{neural_net_forward.1} parent=1 // pred_check_branch
      %20 = sbr.rel (0) target = $region13
    $region12: #{neural_net_forward.1} parent=1 // pred_region
      _
    $region13: #{neural_net_forward.1} parent=1 // pred_fallthru
      _
    // Predicated region
    $region14: #{neural_net_forward.1} parent=1 // pred_check
      _
    $region15: #{neural_net_forward.1} parent=1 // pred_check_branch
      %22 = sbr.rel (0) target = $region17
    $region16: #{neural_net_forward.1} parent=1 // pred_region
      _
    $region17: #{neural_net_forward.1} parent=1 // pred_fallthru
      _
    // Predicated region
    $region18: #{neural_net_forward.1} parent=1 // pred_check
      _
    $region19: #{neural_net_forward.1} parent=1 // pred_check_branch
      %24 = sbr.rel (0) target = $region21
    $region20: #{neural_net_forward.1} parent=1 // pred_region
      _
    $region21: #{neural_net_forward.1} parent=1 // pred_fallthru
      _
    // Predicated region
    $region22: #{neural_net_forward.1} parent=1 // pred_check
      _
    $region23: #{neural_net_forward.1} parent=1 // pred_check_branch
      %26 = sbr.rel (0) target = $region25
    $region24: #{neural_net_forward.1} parent=1 // pred_region
      _
    $region25: #{neural_net_forward.1} parent=1 // pred_fallthru
      _
    // Predicated region
    $region26: #{neural_net_forward.1} parent=1 // pred_check
      _
    $region27: #{neural_net_forward.1} parent=1 // pred_check_branch
      %28 = sbr.rel (0) target = $region29
    $region28: #{neural_net_forward.1} parent=1 // pred_region
      _
    $region29: #{neural_net_forward.1} parent=1 // pred_fallthru
      _
    // Predicated region
    $region30: #{neural_net_forward.1} parent=1 // pred_check
      _
    $region31: #{neural_net_forward.1} parent=1 // pred_check_branch
      %30 = sbr.rel (0) target = $region33
    $region32: #{neural_net_forward.1} parent=1 // pred_region
      _
    $region33: #{neural_net_forward.1} parent=1 // pred_fallthru
      _
    // Predicated region
    $region34: #{neural_net_forward.1} parent=1 // pred_check
      _
    $region35: #{neural_net_forward.1} parent=1 // pred_check_branch
      %32 = sbr.rel (0) target = $region37
    $region36: #{neural_net_forward.1} parent=1 // pred_region
      _
    $region37: #{neural_net_forward.1} parent=1 // pred_fallthru
      _
    %v33 = vld [vmem:[%s0] sm:$0xff]
    %v34 = vld [vmem:[%s0 + $0x8] sm:$0xff]
    %v35 = vld [vmem:[%s0 + $0x10] sm:$0xff]
    %v36 = vld [vmem:[%s0 + $0x18] sm:$0xff]
    %v37 = vld [vmem:[%s0 + $0x20] sm:$0xff]
    %v38 = vld [vmem:[%s0 + $0x28] sm:$0xff]
    %v39 = vld [vmem:[%s0 + $0x30] sm:$0xff]
    %v40 = vld [vmem:[%s0 + $0x38] sm:$0xff]
    %v41 = vld [vmem:[%s0 + $0x40] sm:$0xff]
    %v42 = vld [vmem:[%s0 + $0x48] sm:$0xff]
    %v43 = vld [vmem:[%s0 + $0x50] sm:$0xff]
    %v44 = vld [vmem:[%s0 + $0x58] sm:$0xff]
    %v45 = vld [vmem:[%s0 + $0x60] sm:$0xff]
    %v46 = vld [vmem:[%s0 + $0x68] sm:$0xff]
    %v47 = vld [vmem:[%s0 + $0x70] sm:$0xff]
    %v48 = vld [vmem:[%s0 + $0x78] sm:$0xff]
    %v49 = vld [vmem:[%s0 + $0x80] sm:$0xff]
    %v50 = vld [vmem:[%s0 + $0x88] sm:$0xff]
    %v51 = vld [vmem:[%s0 + $0x90] sm:$0xff]
    %v52 = vld [vmem:[%s0 + $0x98] sm:$0xff]
    %v53 = vld [vmem:[%s0 + $0xa0] sm:$0xff]
    %v54 = vld [vmem:[%s0 + $0xa8] sm:$0xff]
    %v55 = vld [vmem:[%s0 + $0xb0] sm:$0xff]
    %v56 = vld [vmem:[%s0 + $0xb8] sm:$0xff]
    %v57 = vld [vmem:[%s1] sm:$0xff]
    %v58 = vld [vmem:[%s1 + $0x8] sm:$0xff]
    %v59 = vld [vmem:[%s1 + $0x10] sm:$0xff]
    %v60 = vld [vmem:[%s1 + $0x18] sm:$0xff]
    %v61 = vld [vmem:[%s1 + $0x20] sm:$0xff]
    %v62 = vld [vmem:[%s1 + $0x28] sm:$0xff]
    %v63 = vld [vmem:[%s1 + $0x30] sm:$0xff]
    %v64 = vld [vmem:[%s1 + $0x38] sm:$0xff]
    %v65 = vld [vmem:[%s1 + $0x40] sm:$0xff]
    %v66 = vld [vmem:[%s1 + $0x48] sm:$0xff]
    %v67 = vld [vmem:[%s1 + $0x50] sm:$0xff]
    %v68 = vld [vmem:[%s1 + $0x58] sm:$0xff]
    %v69 = vld [vmem:[%s1 + $0x60] sm:$0xff]
    %v70 = vld [vmem:[%s1 + $0x68] sm:$0xff]
    %v71 = vld [vmem:[%s1 + $0x70] sm:$0xff]
    %v72 = vld [vmem:[%s1 + $0x78] sm:$0xff]
    %v73 = vld [vmem:[%s1 + $0x80] sm:$0xff]
    %v74 = vld [vmem:[%s1 + $0x88] sm:$0xff]
    %v75 = vld [vmem:[%s1 + $0x90] sm:$0xff]
    %v76 = vld [vmem:[%s1 + $0x98] sm:$0xff]
    %v77 = vld [vmem:[%s1 + $0xa0] sm:$0xff]
    %v78 = vld [vmem:[%s1 + $0xa8] sm:$0xff]
    %v79 = vld [vmem:[%s1 + $0xb0] sm:$0xff]
    %v80 = vld [vmem:[%s1 + $0xb8] sm:$0xff]
    %v81 = vld [vmem:[%s1 + $0xc0] sm:$0xff]
    %v82 = vld [vmem:[%s1 + $0xc8] sm:$0xff]
    %v83 = vld [vmem:[%s1 + $0xd0] sm:$0xff]
    %v84 = vld [vmem:[%s1 + $0xd8] sm:$0xff]
    %v85 = vld [vmem:[%s1 + $0xe0] sm:$0xff]
    %v86 = vld [vmem:[%s1 + $0xe8] sm:$0xff]
    %v87 = vld [vmem:[%s1 + $0xf0] sm:$0xff]
    %v88 = vld [vmem:[%s1 + $0xf8] sm:$0xff]
    %v89 = vld [vmem:[%s1 + $0x100] sm:$0xff]
    %v90 = vld [vmem:[%s1 + $0x108] sm:$0xff]
    %v91 = vld [vmem:[%s1 + $0x110] sm:$0xff]
    %v92 = vld [vmem:[%s1 + $0x118] sm:$0xff]
    %v93 = vld [vmem:[%s1 + $0x120] sm:$0xff]
    %v94 = vld [vmem:[%s1 + $0x128] sm:$0xff]
    %v95 = vld [vmem:[%s1 + $0x130] sm:$0xff]
    %v96 = vld [vmem:[%s1 + $0x138] sm:$0xff]
    %v97 = vld [vmem:[%s1 + $0x140] sm:$0xff]
    %v98 = vld [vmem:[%s1 + $0x148] sm:$0xff]
    %v99 = vld [vmem:[%s1 + $0x150] sm:$0xff]
    %v100 = vld [vmem:[%s1 + $0x158] sm:$0xff]
    %v101 = vld [vmem:[%s1 + $0x160] sm:$0xff]
    %v102 = vld [vmem:[%s1 + $0x168] sm:$0xff]
    %v103 = vld [vmem:[%s1 + $0x170] sm:$0xff]
    %v104 = vld [vmem:[%s1 + $0x178] sm:$0xff]
    %v105 = vld [vmem:[%s1 + $0x180] sm:$0xff]
    %v106 = vld [vmem:[%s1 + $0x188] sm:$0xff]
    %v107 = vld [vmem:[%s1 + $0x190] sm:$0xff]
    %v108 = vld [vmem:[%s1 + $0x198] sm:$0xff]
    %v109 = vld [vmem:[%s1 + $0x1a0] sm:$0xff]
    %v110 = vld [vmem:[%s1 + $0x1a8] sm:$0xff]
    %v111 = vld [vmem:[%s1 + $0x1b0] sm:$0xff]
    %v112 = vld [vmem:[%s1 + $0x1b8] sm:$0xff]
    %v113 = vld [vmem:[%s1 + $0x1c0] sm:$0xff]
    %v114 = vld [vmem:[%s1 + $0x1c8] sm:$0xff]
    %v115 = vld [vmem:[%s1 + $0x1d0] sm:$0xff]
    %v116 = vld [vmem:[%s1 + $0x1d8] sm:$0xff]
    %v117 = vld [vmem:[%s1 + $0x1e0] sm:$0xff]
    %v118 = vld [vmem:[%s1 + $0x1e8] sm:$0xff]
    %v119 = vld [vmem:[%s1 + $0x1f0] sm:$0xff]
    %v120 = vld [vmem:[%s1 + $0x1f8] sm:$0xff]
    %v121 = vld [vmem:[%s1 + $0x200] sm:$0xff]
    %v122 = vld [vmem:[%s1 + $0x208] sm:$0xff]
    %v123 = vld [vmem:[%s1 + $0x210] sm:$0xff]
    %v124 = vld [vmem:[%s1 + $0x218] sm:$0xff]
    %v125 = vld [vmem:[%s1 + $0x220] sm:$0xff]
    %v126 = vld [vmem:[%s1 + $0x228] sm:$0xff]
    %v127 = vld [vmem:[%s1 + $0x230] sm:$0xff]
    %v128 = vld [vmem:[%s1 + $0x238] sm:$0xff]
    %v129 = vld [vmem:[%s1 + $0x240] sm:$0xff]
    %v130 = vld [vmem:[%s1 + $0x248] sm:$0xff]
    %v131 = vld [vmem:[%s1 + $0x250] sm:$0xff]
    %v132 = vld [vmem:[%s1 + $0x258] sm:$0xff]
    %v133 = vld [vmem:[%s1 + $0x260] sm:$0xff]
    %v134 = vld [vmem:[%s1 + $0x268] sm:$0xff]
    %v135 = vld [vmem:[%s1 + $0x270] sm:$0xff]
    %v136 = vld [vmem:[%s1 + $0x278] sm:$0xff]
    %v137 = vld [vmem:[%s1 + $0x280] sm:$0xff]
    %v138 = vld [vmem:[%s1 + $0x288] sm:$0xff]
    %v139 = vld [vmem:[%s1 + $0x290] sm:$0xff]
    %v140 = vld [vmem:[%s1 + $0x298] sm:$0xff]
    %v141 = vld [vmem:[%s1 + $0x2a0] sm:$0xff]
    %v142 = vld [vmem:[%s1 + $0x2a8] sm:$0xff]
    %v143 = vld [vmem:[%s1 + $0x2b0] sm:$0xff]
    %v144 = vld [vmem:[%s1 + $0x2b8] sm:$0xff]
    %v145 = vld [vmem:[%s1 + $0x2c0] sm:$0xff]
    %v146 = vld [vmem:[%s1 + $0x2c8] sm:$0xff]
    %v147 = vld [vmem:[%s1 + $0x2d0] sm:$0xff]
    %v148 = vld [vmem:[%s1 + $0x2d8] sm:$0xff]
    %v149 = vld [vmem:[%s1 + $0x2e0] sm:$0xff]
    %v150 = vld [vmem:[%s1 + $0x2e8] sm:$0xff]
    %v151 = vld [vmem:[%s1 + $0x2f0] sm:$0xff]
    %v152 = vld [vmem:[%s1 + $0x2f8] sm:$0xff]
    %v153 = vld [vmem:[%s1 + $0x300] sm:$0xff]
    %v154 = vld [vmem:[%s1 + $0x308] sm:$0xff]
    %v155 = vld [vmem:[%s1 + $0x310] sm:$0xff]
    %v156 = vld [vmem:[%s1 + $0x318] sm:$0xff]
    %v157 = vld [vmem:[%s1 + $0x320] sm:$0xff]
    %v158 = vld [vmem:[%s1 + $0x328] sm:$0xff]
    %v159 = vld [vmem:[%s1 + $0x330] sm:$0xff]
    %v160 = vld [vmem:[%s1 + $0x338] sm:$0xff]
    %v161 = vld [vmem:[%s1 + $0x340] sm:$0xff]
    %v162 = vld [vmem:[%s1 + $0x348] sm:$0xff]
    %v163 = vld [vmem:[%s1 + $0x350] sm:$0xff]
    %v164 = vld [vmem:[%s1 + $0x358] sm:$0xff]
    %v165 = vld [vmem:[%s1 + $0x360] sm:$0xff]
    %v166 = vld [vmem:[%s1 + $0x368] sm:$0xff]
    %v167 = vld [vmem:[%s1 + $0x370] sm:$0xff]
    %v168 = vld [vmem:[%s1 + $0x378] sm:$0xff]
    %v169 = vld [vmem:[%s1 + $0x380] sm:$0xff]
    %v170 = vld [vmem:[%s1 + $0x388] sm:$0xff]
    %v171 = vld [vmem:[%s1 + $0x390] sm:$0xff]
    %v172 = vld [vmem:[%s1 + $0x398] sm:$0xff]
    %v173 = vld [vmem:[%s1 + $0x3a0] sm:$0xff]
    %v174 = vld [vmem:[%s1 + $0x3a8] sm:$0xff]
    %v175 = vld [vmem:[%s1 + $0x3b0] sm:$0xff]
    %v176 = vld [vmem:[%s1 + $0x3b8] sm:$0xff]
    %v177 = vld [vmem:[%s1 + $0x3c0] sm:$0xff]
    %v178 = vld [vmem:[%s1 + $0x3c8] sm:$0xff]
    %v179 = vld [vmem:[%s1 + $0x3d0] sm:$0xff]
    %v180 = vld [vmem:[%s1 + $0x3d8] sm:$0xff]
    %v181 = vld [vmem:[%s1 + $0x3e0] sm:$0xff]
    %v182 = vld [vmem:[%s1 + $0x3e8] sm:$0xff]
    %v183 = vld [vmem:[%s1 + $0x3f0] sm:$0xff]
    %v184 = vld [vmem:[%s1 + $0x3f8] sm:$0xff]
    %v185 = vld [vmem:[%s1 + $0x400] sm:$0xff]
    %v186 = vld [vmem:[%s1 + $0x408] sm:$0xff]
    %v187 = vld [vmem:[%s1 + $0x410] sm:$0xff]
    %v188 = vld [vmem:[%s1 + $0x418] sm:$0xff]
    %v189 = vld [vmem:[%s1 + $0x420] sm:$0xff]
    %v190 = vld [vmem:[%s1 + $0x428] sm:$0xff]
    %v191 = vld [vmem:[%s1 + $0x430] sm:$0xff]
    %v192 = vld [vmem:[%s1 + $0x438] sm:$0xff]
    %v193 = vld [vmem:[%s1 + $0x440] sm:$0xff]
    %v194 = vld [vmem:[%s1 + $0x448] sm:$0xff]
    %v195 = vld [vmem:[%s1 + $0x450] sm:$0xff]
    %v196 = vld [vmem:[%s1 + $0x458] sm:$0xff]
    %v197 = vld [vmem:[%s1 + $0x460] sm:$0xff]
    %v198 = vld [vmem:[%s1 + $0x468] sm:$0xff]
    %v199 = vld [vmem:[%s1 + $0x470] sm:$0xff]
    %v200 = vld [vmem:[%s1 + $0x478] sm:$0xff]
    %v201 = vld [vmem:[%s1 + $0x480] sm:$0xff]
    %v202 = vld [vmem:[%s1 + $0x488] sm:$0xff]
    %v203 = vld [vmem:[%s1 + $0x490] sm:$0xff]
    %v204 = vld [vmem:[%s1 + $0x498] sm:$0xff]
    %v205 = vld [vmem:[%s1 + $0x4a0] sm:$0xff]
    %v206 = vld [vmem:[%s1 + $0x4a8] sm:$0xff]
    %v207 = vld [vmem:[%s1 + $0x4b0] sm:$0xff]
    %v208 = vld [vmem:[%s1 + $0x4b8] sm:$0xff]
    %v209 = vld [vmem:[%s1 + $0x4c0] sm:$0xff]
    %v210 = vld [vmem:[%s1 + $0x4c8] sm:$0xff]
    %v211 = vld [vmem:[%s1 + $0x4d0] sm:$0xff]
    %v212 = vld [vmem:[%s1 + $0x4d8] sm:$0xff]
    %v213 = vld [vmem:[%s1 + $0x4e0] sm:$0xff]
    %v214 = vld [vmem:[%s1 + $0x4e8] sm:$0xff]
    %v215 = vld [vmem:[%s1 + $0x4f0] sm:$0xff]
    %v216 = vld [vmem:[%s1 + $0x4f8] sm:$0xff]
    %v217 = vld [vmem:[%s1 + $0x500] sm:$0xff]
    %v218 = vld [vmem:[%s1 + $0x508] sm:$0xff]
    %v219 = vld [vmem:[%s1 + $0x510] sm:$0xff]
    %v220 = vld [vmem:[%s1 + $0x518] sm:$0xff]
    %v221 = vld [vmem:[%s1 + $0x520] sm:$0xff]
    %v222 = vld [vmem:[%s1 + $0x528] sm:$0xff]
    %v223 = vld [vmem:[%s1 + $0x530] sm:$0xff]
    %v224 = vld [vmem:[%s1 + $0x538] sm:$0xff]
    %v225 = vld [vmem:[%s1 + $0x540] sm:$0xff]
    %v226 = vld [vmem:[%s1 + $0x548] sm:$0xff]
    %v227 = vld [vmem:[%s1 + $0x550] sm:$0xff]
    %v228 = vld [vmem:[%s1 + $0x558] sm:$0xff]
    %v229 = vld [vmem:[%s1 + $0x560] sm:$0xff]
    %v230 = vld [vmem:[%s1 + $0x568] sm:$0xff]
    %v231 = vld [vmem:[%s1 + $0x570] sm:$0xff]
    %v232 = vld [vmem:[%s1 + $0x578] sm:$0xff]
    %v233 = vld [vmem:[%s1 + $0x580] sm:$0xff]
    %v234 = vld [vmem:[%s1 + $0x588] sm:$0xff]
    %v235 = vld [vmem:[%s1 + $0x590] sm:$0xff]
    %v236 = vld [vmem:[%s1 + $0x598] sm:$0xff]
    %v237 = vld [vmem:[%s1 + $0x5a0] sm:$0xff]
    %v238 = vld [vmem:[%s1 + $0x5a8] sm:$0xff]
    %v239 = vld [vmem:[%s1 + $0x5b0] sm:$0xff]
    %v240 = vld [vmem:[%s1 + $0x5b8] sm:$0xff]
    %v241 = vld [vmem:[%s1 + $0x5c0] sm:$0xff]
    %v242 = vld [vmem:[%s1 + $0x5c8] sm:$0xff]
    %v243 = vld [vmem:[%s1 + $0x5d0] sm:$0xff]
    %v244 = vld [vmem:[%s1 + $0x5d8] sm:$0xff]
    %v245 = vld [vmem:[%s1 + $0x5e0] sm:$0xff]
    %v246 = vld [vmem:[%s1 + $0x5e8] sm:$0xff]
    %v247 = vld [vmem:[%s1 + $0x5f0] sm:$0xff]
    %v248 = vld [vmem:[%s1 + $0x5f8] sm:$0xff]
    %v249 = vld [vmem:[%s1 + $0x600] sm:$0xff]
    %v250 = vld [vmem:[%s1 + $0x608] sm:$0xff]
    %v251 = vld [vmem:[%s1 + $0x610] sm:$0xff]
    %v252 = vld [vmem:[%s1 + $0x618] sm:$0xff]
    %v253 = vld [vmem:[%s1 + $0x620] sm:$0xff]
    %v254 = vld [vmem:[%s1 + $0x628] sm:$0xff]
    %v255 = vld [vmem:[%s1 + $0x630] sm:$0xff]
    %v256 = vld [vmem:[%s1 + $0x638] sm:$0xff]
    %v257 = vld [vmem:[%s1 + $0x640] sm:$0xff]
    %v258 = vld [vmem:[%s1 + $0x648] sm:$0xff]
    %v259 = vld [vmem:[%s1 + $0x650] sm:$0xff]
    %v260 = vld [vmem:[%s1 + $0x658] sm:$0xff]
    %v261 = vld [vmem:[%s1 + $0x660] sm:$0xff]
    %v262 = vld [vmem:[%s1 + $0x668] sm:$0xff]
    %v263 = vld [vmem:[%s1 + $0x670] sm:$0xff]
    %v264 = vld [vmem:[%s1 + $0x678] sm:$0xff]
    %v265 = vld [vmem:[%s1 + $0x680] sm:$0xff]
    %v266 = vld [vmem:[%s1 + $0x688] sm:$0xff]
    %v267 = vld [vmem:[%s1 + $0x690] sm:$0xff]
    %v268 = vld [vmem:[%s1 + $0x698] sm:$0xff]
    %v269 = vld [vmem:[%s1 + $0x6a0] sm:$0xff]
    %v270 = vld [vmem:[%s1 + $0x6a8] sm:$0xff]
    %v271 = vld [vmem:[%s1 + $0x6b0] sm:$0xff]
    %v272 = vld [vmem:[%s1 + $0x6b8] sm:$0xff]
    %v273 = vld [vmem:[%s1 + $0x6c0] sm:$0xff]
    %v274 = vld [vmem:[%s1 + $0x6c8] sm:$0xff]
    %v275 = vld [vmem:[%s1 + $0x6d0] sm:$0xff]
    %v276 = vld [vmem:[%s1 + $0x6d8] sm:$0xff]
    %v277 = vld [vmem:[%s1 + $0x6e0] sm:$0xff]
    %v278 = vld [vmem:[%s1 + $0x6e8] sm:$0xff]
    %v279 = vld [vmem:[%s1 + $0x6f0] sm:$0xff]
    %v280 = vld [vmem:[%s1 + $0x6f8] sm:$0xff]
    %v281 = vld [vmem:[%s1 + $0x700] sm:$0xff]
    %v282 = vld [vmem:[%s1 + $0x708] sm:$0xff]
    %v283 = vld [vmem:[%s1 + $0x710] sm:$0xff]
    %v284 = vld [vmem:[%s1 + $0x718] sm:$0xff]
    %v285 = vld [vmem:[%s1 + $0x720] sm:$0xff]
    %v286 = vld [vmem:[%s1 + $0x728] sm:$0xff]
    %v287 = vld [vmem:[%s1 + $0x730] sm:$0xff]
    %v288 = vld [vmem:[%s1 + $0x738] sm:$0xff]
    %v289 = vld [vmem:[%s1 + $0x740] sm:$0xff]
    %v290 = vld [vmem:[%s1 + $0x748] sm:$0xff]
    %v291 = vld [vmem:[%s1 + $0x750] sm:$0xff]
    %v292 = vld [vmem:[%s1 + $0x758] sm:$0xff]
    %v293 = vld [vmem:[%s1 + $0x760] sm:$0xff]
    %v294 = vld [vmem:[%s1 + $0x768] sm:$0xff]
    %v295 = vld [vmem:[%s1 + $0x770] sm:$0xff]
    %v296 = vld [vmem:[%s1 + $0x778] sm:$0xff]
    %v297 = vld [vmem:[%s1 + $0x780] sm:$0xff]
    %v298 = vld [vmem:[%s1 + $0x788] sm:$0xff]
    %v299 = vld [vmem:[%s1 + $0x790] sm:$0xff]
    %v300 = vld [vmem:[%s1 + $0x798] sm:$0xff]
    %v301 = vld [vmem:[%s1 + $0x7a0] sm:$0xff]
    %v302 = vld [vmem:[%s1 + $0x7a8] sm:$0xff]
    %v303 = vld [vmem:[%s1 + $0x7b0] sm:$0xff]
    %v304 = vld [vmem:[%s1 + $0x7b8] sm:$0xff]
    %v305 = vld [vmem:[%s1 + $0x7c0] sm:$0xff]
    %v306 = vld [vmem:[%s1 + $0x7c8] sm:$0xff]
    %v307 = vld [vmem:[%s1 + $0x7d0] sm:$0xff]
    %v308 = vld [vmem:[%s1 + $0x7d8] sm:$0xff]
    %v309 = vld [vmem:[%s1 + $0x7e0] sm:$0xff]
    %v310 = vld [vmem:[%s1 + $0x7e8] sm:$0xff]
    %v311 = vld [vmem:[%s1 + $0x7f0] sm:$0xff]
    %v312 = vld [vmem:[%s1 + $0x7f8] sm:$0xff]
    %v313 = vld [vmem:[%s1 + $0x800] sm:$0xff]
    %v314 = vld [vmem:[%s1 + $0x808] sm:$0xff]
    %v315 = vld [vmem:[%s1 + $0x810] sm:$0xff]
    %v316 = vld [vmem:[%s1 + $0x818] sm:$0xff]
    %v317 = vld [vmem:[%s1 + $0x820] sm:$0xff]
    %v318 = vld [vmem:[%s1 + $0x828] sm:$0xff]
    %v319 = vld [vmem:[%s1 + $0x830] sm:$0xff]
    %v320 = vld [vmem:[%s1 + $0x838] sm:$0xff]
    %v321 = vld [vmem:[%s1 + $0x840] sm:$0xff]
    %v322 = vld [vmem:[%s1 + $0x848] sm:$0xff]
    %v323 = vld [vmem:[%s1 + $0x850] sm:$0xff]
    %v324 = vld [vmem:[%s1 + $0x858] sm:$0xff]
    %v325 = vld [vmem:[%s1 + $0x860] sm:$0xff]
    %v326 = vld [vmem:[%s1 + $0x868] sm:$0xff]
    %v327 = vld [vmem:[%s1 + $0x870] sm:$0xff]
    %v328 = vld [vmem:[%s1 + $0x878] sm:$0xff]
    %v329 = vld [vmem:[%s1 + $0x880] sm:$0xff]
    %v330 = vld [vmem:[%s1 + $0x888] sm:$0xff]
    %v331 = vld [vmem:[%s1 + $0x890] sm:$0xff]
    %v332 = vld [vmem:[%s1 + $0x898] sm:$0xff]
    %v333 = vld [vmem:[%s1 + $0x8a0] sm:$0xff]
    %v334 = vld [vmem:[%s1 + $0x8a8] sm:$0xff]
    %v335 = vld [vmem:[%s1 + $0x8b0] sm:$0xff]
    %v336 = vld [vmem:[%s1 + $0x8b8] sm:$0xff]
    %v337 = vld [vmem:[%s1 + $0x8c0] sm:$0xff]
    %v338 = vld [vmem:[%s1 + $0x8c8] sm:$0xff]
    %v339 = vld [vmem:[%s1 + $0x8d0] sm:$0xff]
    %v340 = vld [vmem:[%s1 + $0x8d8] sm:$0xff]
    %v341 = vld [vmem:[%s1 + $0x8e0] sm:$0xff]
    %v342 = vld [vmem:[%s1 + $0x8e8] sm:$0xff]
    %v343 = vld [vmem:[%s1 + $0x8f0] sm:$0xff]
    %v344 = vld [vmem:[%s1 + $0x8f8] sm:$0xff]
    %v345 = vld [vmem:[%s1 + $0x900] sm:$0xff]
    %v346 = vld [vmem:[%s1 + $0x908] sm:$0xff]
    %v347 = vld [vmem:[%s1 + $0x910] sm:$0xff]
    %v348 = vld [vmem:[%s1 + $0x918] sm:$0xff]
    %v349 = vld [vmem:[%s1 + $0x920] sm:$0xff]
    %v350 = vld [vmem:[%s1 + $0x928] sm:$0xff]
    %v351 = vld [vmem:[%s1 + $0x930] sm:$0xff]
    %v352 = vld [vmem:[%s1 + $0x938] sm:$0xff]
    %v353 = vld [vmem:[%s1 + $0x940] sm:$0xff]
    %v354 = vld [vmem:[%s1 + $0x948] sm:$0xff]
    %v355 = vld [vmem:[%s1 + $0x950] sm:$0xff]
    %v356 = vld [vmem:[%s1 + $0x958] sm:$0xff]
    %v357 = vld [vmem:[%s1 + $0x960] sm:$0xff]
    %v358 = vld [vmem:[%s1 + $0x968] sm:$0xff]
    %v359 = vld [vmem:[%s1 + $0x970] sm:$0xff]
    %v360 = vld [vmem:[%s1 + $0x978] sm:$0xff]
    %v361 = vld [vmem:[%s1 + $0x980] sm:$0xff]
    %v362 = vld [vmem:[%s1 + $0x988] sm:$0xff]
    %v363 = vld [vmem:[%s1 + $0x990] sm:$0xff]
    %v364 = vld [vmem:[%s1 + $0x998] sm:$0xff]
    %v365 = vld [vmem:[%s1 + $0x9a0] sm:$0xff]
    %v366 = vld [vmem:[%s1 + $0x9a8] sm:$0xff]
    %v367 = vld [vmem:[%s1 + $0x9b0] sm:$0xff]
    %v368 = vld [vmem:[%s1 + $0x9b8] sm:$0xff]
    %v369 = vld [vmem:[%s1 + $0x9c0] sm:$0xff]
    %v370 = vld [vmem:[%s1 + $0x9c8] sm:$0xff]
    %v371 = vld [vmem:[%s1 + $0x9d0] sm:$0xff]
    %v372 = vld [vmem:[%s1 + $0x9d8] sm:$0xff]
    %v373 = vld [vmem:[%s1 + $0x9e0] sm:$0xff]
    %v374 = vld [vmem:[%s1 + $0x9e8] sm:$0xff]
    %v375 = vld [vmem:[%s1 + $0x9f0] sm:$0xff]
    %v376 = vld [vmem:[%s1 + $0x9f8] sm:$0xff]
    %v377 = vld [vmem:[%s1 + $0xa00] sm:$0xff]
    %v378 = vld [vmem:[%s1 + $0xa08] sm:$0xff]
    %v379 = vld [vmem:[%s1 + $0xa10] sm:$0xff]
    %v380 = vld [vmem:[%s1 + $0xa18] sm:$0xff]
    %v381 = vld [vmem:[%s1 + $0xa20] sm:$0xff]
    %v382 = vld [vmem:[%s1 + $0xa28] sm:$0xff]
    %v383 = vld [vmem:[%s1 + $0xa30] sm:$0xff]
    %v384 = vld [vmem:[%s1 + $0xa38] sm:$0xff]
    %v385 = vld [vmem:[%s1 + $0xa40] sm:$0xff]
    %v386 = vld [vmem:[%s1 + $0xa48] sm:$0xff]
    %v387 = vld [vmem:[%s1 + $0xa50] sm:$0xff]
    %v388 = vld [vmem:[%s1 + $0xa58] sm:$0xff]
    %v389 = vld [vmem:[%s1 + $0xa60] sm:$0xff]
    %v390 = vld [vmem:[%s1 + $0xa68] sm:$0xff]
    %v391 = vld [vmem:[%s1 + $0xa70] sm:$0xff]
    %v392 = vld [vmem:[%s1 + $0xa78] sm:$0xff]
    %v393 = vld [vmem:[%s1 + $0xa80] sm:$0xff]
    %v394 = vld [vmem:[%s1 + $0xa88] sm:$0xff]
    %v395 = vld [vmem:[%s1 + $0xa90] sm:$0xff]
    %v396 = vld [vmem:[%s1 + $0xa98] sm:$0xff]
    %v397 = vld [vmem:[%s1 + $0xaa0] sm:$0xff]
    %v398 = vld [vmem:[%s1 + $0xaa8] sm:$0xff]
    %v399 = vld [vmem:[%s1 + $0xab0] sm:$0xff]
    %v400 = vld [vmem:[%s1 + $0xab8] sm:$0xff]
    %v401 = vld [vmem:[%s1 + $0xac0] sm:$0xff]
    %v402 = vld [vmem:[%s1 + $0xac8] sm:$0xff]
    %v403 = vld [vmem:[%s1 + $0xad0] sm:$0xff]
    %v404 = vld [vmem:[%s1 + $0xad8] sm:$0xff]
    %v405 = vld [vmem:[%s1 + $0xae0] sm:$0xff]
    %v406 = vld [vmem:[%s1 + $0xae8] sm:$0xff]
    %v407 = vld [vmem:[%s1 + $0xaf0] sm:$0xff]
    %v408 = vld [vmem:[%s1 + $0xaf8] sm:$0xff]
    %v409 = vld [vmem:[%s1 + $0xb00] sm:$0xff]
    %v410 = vld [vmem:[%s1 + $0xb08] sm:$0xff]
    %v411 = vld [vmem:[%s1 + $0xb10] sm:$0xff]
    %v412 = vld [vmem:[%s1 + $0xb18] sm:$0xff]
    %v413 = vld [vmem:[%s1 + $0xb20] sm:$0xff]
    %v414 = vld [vmem:[%s1 + $0xb28] sm:$0xff]
    %v415 = vld [vmem:[%s1 + $0xb30] sm:$0xff]
    %v416 = vld [vmem:[%s1 + $0xb38] sm:$0xff]
    %v417 = vld [vmem:[%s1 + $0xb40] sm:$0xff]
    %v418 = vld [vmem:[%s1 + $0xb48] sm:$0xff]
    %v419 = vld [vmem:[%s1 + $0xb50] sm:$0xff]
    %v420 = vld [vmem:[%s1 + $0xb58] sm:$0xff]
    %v421 = vld [vmem:[%s1 + $0xb60] sm:$0xff]
    %v422 = vld [vmem:[%s1 + $0xb68] sm:$0xff]
    %v423 = vld [vmem:[%s1 + $0xb70] sm:$0xff]
    %v424 = vld [vmem:[%s1 + $0xb78] sm:$0xff]
    %v425 = vld [vmem:[%s1 + $0xb80] sm:$0xff]
    %v426 = vld [vmem:[%s1 + $0xb88] sm:$0xff]
    %v427 = vld [vmem:[%s1 + $0xb90] sm:$0xff]
    %v428 = vld [vmem:[%s1 + $0xb98] sm:$0xff]
    %v429 = vld [vmem:[%s1 + $0xba0] sm:$0xff]
    %v430 = vld [vmem:[%s1 + $0xba8] sm:$0xff]
    %v431 = vld [vmem:[%s1 + $0xbb0] sm:$0xff]
    %v432 = vld [vmem:[%s1 + $0xbb8] sm:$0xff]
    %v433 = vld [vmem:[%s1 + $0xbc0] sm:$0xff]
    %v434 = vld [vmem:[%s1 + $0xbc8] sm:$0xff]
    %v435 = vld [vmem:[%s1 + $0xbd0] sm:$0xff]
    %v436 = vld [vmem:[%s1 + $0xbd8] sm:$0xff]
    %v437 = vld [vmem:[%s1 + $0xbe0] sm:$0xff]
    %v438 = vld [vmem:[%s1 + $0xbe8] sm:$0xff]
    %v439 = vld [vmem:[%s1 + $0xbf0] sm:$0xff]
    %v440 = vld [vmem:[%s1 + $0xbf8] sm:$0xff]
    %v441 = vld [vmem:[%s2] sm:$0x3]
    %v443 = vperm.slane %v441, 0
    %v444 = vperm.slane %v441, 1
    %v471 = vunpack.c.l.b16 %v33
    %v472 = vunpack.c.h.b16 %v33
    %v473 = vunpack.c.l.b16 %v34
    %v474 = vunpack.c.h.b16 %v34
    %v475 = vunpack.c.l.b16 %v35
    %v476 = vunpack.c.h.b16 %v35
    %v477 = vunpack.c.l.b16 %v36
    %v478 = vunpack.c.h.b16 %v36
    %v479 = vunpack.c.l.b16 %v37
    %v480 = vunpack.c.h.b16 %v37
    %v481 = vunpack.c.l.b16 %v38
    %v482 = vunpack.c.h.b16 %v38
    %v483 = vunpack.c.l.b16 %v39
    %v484 = vunpack.c.h.b16 %v39
    %v485 = vunpack.c.l.b16 %v40
    %v486 = vunpack.c.h.b16 %v40
    %v487 = vunpack.c.l.b16 %v41
    %v488 = vunpack.c.h.b16 %v41
    %v489 = vunpack.c.l.b16 %v42
    %v490 = vunpack.c.h.b16 %v42
    %v491 = vunpack.c.l.b16 %v43
    %v492 = vunpack.c.h.b16 %v43
    %v493 = vunpack.c.l.b16 %v44
    %v494 = vunpack.c.h.b16 %v44
    %v495 = vunpack.c.l.b16 %v45
    %v496 = vunpack.c.h.b16 %v45
    %v497 = vunpack.c.l.b16 %v46
    %v498 = vunpack.c.h.b16 %v46
    %v499 = vunpack.c.l.b16 %v47
    %v500 = vunpack.c.h.b16 %v47
    %v501 = vunpack.c.l.b16 %v48
    %v502 = vunpack.c.h.b16 %v48
    %v503 = vunpack.c.l.b16 %v49
    %v504 = vunpack.c.h.b16 %v49
    %v505 = vunpack.c.l.b16 %v50
    %v506 = vunpack.c.h.b16 %v50
    %v507 = vunpack.c.l.b16 %v51
    %v508 = vunpack.c.h.b16 %v51
    %v509 = vunpack.c.l.b16 %v52
    %v510 = vunpack.c.h.b16 %v52
    %v511 = vunpack.c.l.b16 %v53
    %v512 = vunpack.c.h.b16 %v53
    %v513 = vunpack.c.l.b16 %v54
    %v514 = vunpack.c.h.b16 %v54
    %v515 = vunpack.c.l.b16 %v55
    %v516 = vunpack.c.h.b16 %v55
    %v517 = vunpack.c.l.b16 %v56
    %v518 = vunpack.c.h.b16 %v56
    %v519 = vpack.c.b16 %v495, %v471
    %v520 = vpack.c.b16 %v496, %v472
    %v521 = vpack.c.b16 %v497, %v473
    %v522 = vpack.c.b16 %v498, %v474
    %v523 = vpack.c.b16 %v499, %v475
    %v524 = vpack.c.b16 %v500, %v476
    %v525 = vpack.c.b16 %v501, %v477
    %v526 = vpack.c.b16 %v502, %v478
    %v527 = vpack.c.b16 %v503, %v479
    %v528 = vpack.c.b16 %v504, %v480
    %v529 = vpack.c.b16 %v505, %v481
    %v530 = vpack.c.b16 %v506, %v482
    %v531 = vpack.c.b16 %v507, %v483
    %v532 = vpack.c.b16 %v508, %v484
    %v533 = vpack.c.b16 %v509, %v485
    %v534 = vpack.c.b16 %v510, %v486
    %v535 = vpack.c.b16 %v511, %v487
    %v536 = vpack.c.b16 %v512, %v488
    %v537 = vpack.c.b16 %v513, %v489
    %v538 = vpack.c.b16 %v514, %v490
    %v539 = vpack.c.b16 %v515, %v491
    %v540 = vpack.c.b16 %v516, %v492
    %v541 = vpack.c.b16 %v517, %v493
    %v542 = vpack.c.b16 %v518, %v494
    %v951 = vunpack.c.l.b16 %v57
    %v952 = vunpack.c.h.b16 %v57
    %v953 = vunpack.c.l.b16 %v58
    %v954 = vunpack.c.h.b16 %v58
    %v955 = vunpack.c.l.b16 %v59
    %v956 = vunpack.c.h.b16 %v59
    %v957 = vunpack.c.l.b16 %v60
    %v958 = vunpack.c.h.b16 %v60
    %v959 = vunpack.c.l.b16 %v61
    %v960 = vunpack.c.h.b16 %v61
    %v961 = vunpack.c.l.b16 %v62
    %v962 = vunpack.c.h.b16 %v62
    %v963 = vunpack.c.l.b16 %v63
    %v964 = vunpack.c.h.b16 %v63
    %v965 = vunpack.c.l.b16 %v64
    %v966 = vunpack.c.h.b16 %v64
    %v967 = vunpack.c.l.b16 %v65
    %v968 = vunpack.c.h.b16 %v65
    %v969 = vunpack.c.l.b16 %v66
    %v970 = vunpack.c.h.b16 %v66
    %v971 = vunpack.c.l.b16 %v67
    %v972 = vunpack.c.h.b16 %v67
    %v973 = vunpack.c.l.b16 %v68
    %v974 = vunpack.c.h.b16 %v68
    %v975 = vunpack.c.l.b16 %v69
    %v976 = vunpack.c.h.b16 %v69
    %v977 = vunpack.c.l.b16 %v70
    %v978 = vunpack.c.h.b16 %v70
    %v979 = vunpack.c.l.b16 %v71
    %v980 = vunpack.c.h.b16 %v71
    %v981 = vunpack.c.l.b16 %v72
    %v982 = vunpack.c.h.b16 %v72
    %v983 = vunpack.c.l.b16 %v73
    %v984 = vunpack.c.h.b16 %v73
    %v985 = vunpack.c.l.b16 %v74
    %v986 = vunpack.c.h.b16 %v74
    %v987 = vunpack.c.l.b16 %v75
    %v988 = vunpack.c.h.b16 %v75
    %v989 = vunpack.c.l.b16 %v76
    %v990 = vunpack.c.h.b16 %v76
    %v991 = vunpack.c.l.b16 %v77
    %v992 = vunpack.c.h.b16 %v77
    %v993 = vunpack.c.l.b16 %v78
    %v994 = vunpack.c.h.b16 %v78
    %v995 = vunpack.c.l.b16 %v79
    %v996 = vunpack.c.h.b16 %v79
    %v997 = vunpack.c.l.b16 %v80
    %v998 = vunpack.c.h.b16 %v80
    %v999 = vunpack.c.l.b16 %v81
    %v1000 = vunpack.c.h.b16 %v81
    %v1001 = vunpack.c.l.b16 %v82
    %v1002 = vunpack.c.h.b16 %v82
    %v1003 = vunpack.c.l.b16 %v83
    %v1004 = vunpack.c.h.b16 %v83
    %v1005 = vunpack.c.l.b16 %v84
    %v1006 = vunpack.c.h.b16 %v84
    %v1007 = vunpack.c.l.b16 %v85
    %v1008 = vunpack.c.h.b16 %v85
    %v1009 = vunpack.c.l.b16 %v86
    %v1010 = vunpack.c.h.b16 %v86
    %v1011 = vunpack.c.l.b16 %v87
    %v1012 = vunpack.c.h.b16 %v87
    %v1013 = vunpack.c.l.b16 %v88
    %v1014 = vunpack.c.h.b16 %v88
    %v1015 = vunpack.c.l.b16 %v89
    %v1016 = vunpack.c.h.b16 %v89
    %v1017 = vunpack.c.l.b16 %v90
    %v1018 = vunpack.c.h.b16 %v90
    %v1019 = vunpack.c.l.b16 %v91
    %v1020 = vunpack.c.h.b16 %v91
    %v1021 = vunpack.c.l.b16 %v92
    %v1022 = vunpack.c.h.b16 %v92
    %v1023 = vunpack.c.l.b16 %v93
    %v1024 = vunpack.c.h.b16 %v93
    %v1025 = vunpack.c.l.b16 %v94
    %v1026 = vunpack.c.h.b16 %v94
    %v1027 = vunpack.c.l.b16 %v95
    %v1028 = vunpack.c.h.b16 %v95
    %v1029 = vunpack.c.l.b16 %v96
    %v1030 = vunpack.c.h.b16 %v96
    %v1031 = vunpack.c.l.b16 %v97
    %v1032 = vunpack.c.h.b16 %v97
    %v1033 = vunpack.c.l.b16 %v98
    %v1034 = vunpack.c.h.b16 %v98
    %v1035 = vunpack.c.l.b16 %v99
    %v1036 = vunpack.c.h.b16 %v99
    %v1037 = vunpack.c.l.b16 %v100
    %v1038 = vunpack.c.h.b16 %v100
    %v1039 = vunpack.c.l.b16 %v101
    %v1040 = vunpack.c.h.b16 %v101
    %v1041 = vunpack.c.l.b16 %v102
    %v1042 = vunpack.c.h.b16 %v102
    %v1043 = vunpack.c.l.b16 %v103
    %v1044 = vunpack.c.h.b16 %v103
    %v1045 = vunpack.c.l.b16 %v104
    %v1046 = vunpack.c.h.b16 %v104
    %v1047 = vunpack.c.l.b16 %v105
    %v1048 = vunpack.c.h.b16 %v105
    %v1049 = vunpack.c.l.b16 %v106
    %v1050 = vunpack.c.h.b16 %v106
    %v1051 = vunpack.c.l.b16 %v107
    %v1052 = vunpack.c.h.b16 %v107
    %v1053 = vunpack.c.l.b16 %v108
    %v1054 = vunpack.c.h.b16 %v108
    %v1055 = vunpack.c.l.b16 %v109
    %v1056 = vunpack.c.h.b16 %v109
    %v1057 = vunpack.c.l.b16 %v110
    %v1058 = vunpack.c.h.b16 %v110
    %v1059 = vunpack.c.l.b16 %v111
    %v1060 = vunpack.c.h.b16 %v111
    %v1061 = vunpack.c.l.b16 %v112
    %v1062 = vunpack.c.h.b16 %v112
    %v1063 = vunpack.c.l.b16 %v113
    %v1064 = vunpack.c.h.b16 %v113
    %v1065 = vunpack.c.l.b16 %v114
    %v1066 = vunpack.c.h.b16 %v114
    %v1067 = vunpack.c.l.b16 %v115
    %v1068 = vunpack.c.h.b16 %v115
    %v1069 = vunpack.c.l.b16 %v116
    %v1070 = vunpack.c.h.b16 %v116
    %v1071 = vunpack.c.l.b16 %v117
    %v1072 = vunpack.c.h.b16 %v117
    %v1073 = vunpack.c.l.b16 %v118
    %v1074 = vunpack.c.h.b16 %v118
    %v1075 = vunpack.c.l.b16 %v119
    %v1076 = vunpack.c.h.b16 %v119
    %v1077 = vunpack.c.l.b16 %v120
    %v1078 = vunpack.c.h.b16 %v120
    %v1079 = vunpack.c.l.b16 %v121
    %v1080 = vunpack.c.h.b16 %v121
    %v1081 = vunpack.c.l.b16 %v122
    %v1082 = vunpack.c.h.b16 %v122
    %v1083 = vunpack.c.l.b16 %v123
    %v1084 = vunpack.c.h.b16 %v123
    %v1085 = vunpack.c.l.b16 %v124
    %v1086 = vunpack.c.h.b16 %v124
    %v1087 = vunpack.c.l.b16 %v125
    %v1088 = vunpack.c.h.b16 %v125
    %v1089 = vunpack.c.l.b16 %v126
    %v1090 = vunpack.c.h.b16 %v126
    %v1091 = vunpack.c.l.b16 %v127
    %v1092 = vunpack.c.h.b16 %v127
    %v1093 = vunpack.c.l.b16 %v128
    %v1094 = vunpack.c.h.b16 %v128
    %v1095 = vunpack.c.l.b16 %v129
    %v1096 = vunpack.c.h.b16 %v129
    %v1097 = vunpack.c.l.b16 %v130
    %v1098 = vunpack.c.h.b16 %v130
    %v1099 = vunpack.c.l.b16 %v131
    %v1100 = vunpack.c.h.b16 %v131
    %v1101 = vunpack.c.l.b16 %v132
    %v1102 = vunpack.c.h.b16 %v132
    %v1103 = vunpack.c.l.b16 %v133
    %v1104 = vunpack.c.h.b16 %v133
    %v1105 = vunpack.c.l.b16 %v134
    %v1106 = vunpack.c.h.b16 %v134
    %v1107 = vunpack.c.l.b16 %v135
    %v1108 = vunpack.c.h.b16 %v135
    %v1109 = vunpack.c.l.b16 %v136
    %v1110 = vunpack.c.h.b16 %v136
    %v1111 = vunpack.c.l.b16 %v137
    %v1112 = vunpack.c.h.b16 %v137
    %v1113 = vunpack.c.l.b16 %v138
    %v1114 = vunpack.c.h.b16 %v138
    %v1115 = vunpack.c.l.b16 %v139
    %v1116 = vunpack.c.h.b16 %v139
    %v1117 = vunpack.c.l.b16 %v140
    %v1118 = vunpack.c.h.b16 %v140
    %v1119 = vunpack.c.l.b16 %v141
    %v1120 = vunpack.c.h.b16 %v141
    %v1121 = vunpack.c.l.b16 %v142
    %v1122 = vunpack.c.h.b16 %v142
    %v1123 = vunpack.c.l.b16 %v143
    %v1124 = vunpack.c.h.b16 %v143
    %v1125 = vunpack.c.l.b16 %v144
    %v1126 = vunpack.c.h.b16 %v144
    %v1127 = vunpack.c.l.b16 %v145
    %v1128 = vunpack.c.h.b16 %v145
    %v1129 = vunpack.c.l.b16 %v146
    %v1130 = vunpack.c.h.b16 %v146
    %v1131 = vunpack.c.l.b16 %v147
    %v1132 = vunpack.c.h.b16 %v147
    %v1133 = vunpack.c.l.b16 %v148
    %v1134 = vunpack.c.h.b16 %v148
    %v1135 = vunpack.c.l.b16 %v149
    %v1136 = vunpack.c.h.b16 %v149
    %v1137 = vunpack.c.l.b16 %v150
    %v1138 = vunpack.c.h.b16 %v150
    %v1139 = vunpack.c.l.b16 %v151
    %v1140 = vunpack.c.h.b16 %v151
    %v1141 = vunpack.c.l.b16 %v152
    %v1142 = vunpack.c.h.b16 %v152
    %v1143 = vunpack.c.l.b16 %v153
    %v1144 = vunpack.c.h.b16 %v153
    %v1145 = vunpack.c.l.b16 %v154
    %v1146 = vunpack.c.h.b16 %v154
    %v1147 = vunpack.c.l.b16 %v155
    %v1148 = vunpack.c.h.b16 %v155
    %v1149 = vunpack.c.l.b16 %v156
    %v1150 = vunpack.c.h.b16 %v156
    %v1151 = vunpack.c.l.b16 %v157
    %v1152 = vunpack.c.h.b16 %v157
    %v1153 = vunpack.c.l.b16 %v158
    %v1154 = vunpack.c.h.b16 %v158
    %v1155 = vunpack.c.l.b16 %v159
    %v1156 = vunpack.c.h.b16 %v159
    %v1157 = vunpack.c.l.b16 %v160
    %v1158 = vunpack.c.h.b16 %v160
    %v1159 = vunpack.c.l.b16 %v161
    %v1160 = vunpack.c.h.b16 %v161
    %v1161 = vunpack.c.l.b16 %v162
    %v1162 = vunpack.c.h.b16 %v162
    %v1163 = vunpack.c.l.b16 %v163
    %v1164 = vunpack.c.h.b16 %v163
    %v1165 = vunpack.c.l.b16 %v164
    %v1166 = vunpack.c.h.b16 %v164
    %v1167 = vunpack.c.l.b16 %v165
    %v1168 = vunpack.c.h.b16 %v165
    %v1169 = vunpack.c.l.b16 %v166
    %v1170 = vunpack.c.h.b16 %v166
    %v1171 = vunpack.c.l.b16 %v167
    %v1172 = vunpack.c.h.b16 %v167
    %v1173 = vunpack.c.l.b16 %v168
    %v1174 = vunpack.c.h.b16 %v168
    %v1175 = vunpack.c.l.b16 %v169
    %v1176 = vunpack.c.h.b16 %v169
    %v1177 = vunpack.c.l.b16 %v170
    %v1178 = vunpack.c.h.b16 %v170
    %v1179 = vunpack.c.l.b16 %v171
    %v1180 = vunpack.c.h.b16 %v171
    %v1181 = vunpack.c.l.b16 %v172
    %v1182 = vunpack.c.h.b16 %v172
    %v1183 = vunpack.c.l.b16 %v173
    %v1184 = vunpack.c.h.b16 %v173
    %v1185 = vunpack.c.l.b16 %v174
    %v1186 = vunpack.c.h.b16 %v174
    %v1187 = vunpack.c.l.b16 %v175
    %v1188 = vunpack.c.h.b16 %v175
    %v1189 = vunpack.c.l.b16 %v176
    %v1190 = vunpack.c.h.b16 %v176
    %v1191 = vunpack.c.l.b16 %v177
    %v1192 = vunpack.c.h.b16 %v177
    %v1193 = vunpack.c.l.b16 %v178
    %v1194 = vunpack.c.h.b16 %v178
    %v1195 = vunpack.c.l.b16 %v179
    %v1196 = vunpack.c.h.b16 %v179
    %v1197 = vunpack.c.l.b16 %v180
    %v1198 = vunpack.c.h.b16 %v180
    %v1199 = vunpack.c.l.b16 %v181
    %v1200 = vunpack.c.h.b16 %v181
    %v1201 = vunpack.c.l.b16 %v182
    %v1202 = vunpack.c.h.b16 %v182
    %v1203 = vunpack.c.l.b16 %v183
    %v1204 = vunpack.c.h.b16 %v183
    %v1205 = vunpack.c.l.b16 %v184
    %v1206 = vunpack.c.h.b16 %v184
    %v1207 = vunpack.c.l.b16 %v185
    %v1208 = vunpack.c.h.b16 %v185
    %v1209 = vunpack.c.l.b16 %v186
    %v1210 = vunpack.c.h.b16 %v186
    %v1211 = vunpack.c.l.b16 %v187
    %v1212 = vunpack.c.h.b16 %v187
    %v1213 = vunpack.c.l.b16 %v188
    %v1214 = vunpack.c.h.b16 %v188
    %v1215 = vunpack.c.l.b16 %v189
    %v1216 = vunpack.c.h.b16 %v189
    %v1217 = vunpack.c.l.b16 %v190
    %v1218 = vunpack.c.h.b16 %v190
    %v1219 = vunpack.c.l.b16 %v191
    %v1220 = vunpack.c.h.b16 %v191
    %v1221 = vunpack.c.l.b16 %v192
    %v1222 = vunpack.c.h.b16 %v192
    %v1223 = vunpack.c.l.b16 %v193
    %v1224 = vunpack.c.h.b16 %v193
    %v1225 = vunpack.c.l.b16 %v194
    %v1226 = vunpack.c.h.b16 %v194
    %v1227 = vunpack.c.l.b16 %v195
    %v1228 = vunpack.c.h.b16 %v195
    %v1229 = vunpack.c.l.b16 %v196
    %v1230 = vunpack.c.h.b16 %v196
    %v1231 = vunpack.c.l.b16 %v197
    %v1232 = vunpack.c.h.b16 %v197
    %v1233 = vunpack.c.l.b16 %v198
    %v1234 = vunpack.c.h.b16 %v198
    %v1235 = vunpack.c.l.b16 %v199
    %v1236 = vunpack.c.h.b16 %v199
    %v1237 = vunpack.c.l.b16 %v200
    %v1238 = vunpack.c.h.b16 %v200
    %v1239 = vunpack.c.l.b16 %v201
    %v1240 = vunpack.c.h.b16 %v201
    %v1241 = vunpack.c.l.b16 %v202
    %v1242 = vunpack.c.h.b16 %v202
    %v1243 = vunpack.c.l.b16 %v203
    %v1244 = vunpack.c.h.b16 %v203
    %v1245 = vunpack.c.l.b16 %v204
    %v1246 = vunpack.c.h.b16 %v204
    %v1247 = vunpack.c.l.b16 %v205
    %v1248 = vunpack.c.h.b16 %v205
    %v1249 = vunpack.c.l.b16 %v206
    %v1250 = vunpack.c.h.b16 %v206
    %v1251 = vunpack.c.l.b16 %v207
    %v1252 = vunpack.c.h.b16 %v207
    %v1253 = vunpack.c.l.b16 %v208
    %v1254 = vunpack.c.h.b16 %v208
    %v1255 = vunpack.c.l.b16 %v209
    %v1256 = vunpack.c.h.b16 %v209
    %v1257 = vunpack.c.l.b16 %v210
    %v1258 = vunpack.c.h.b16 %v210
    %v1259 = vunpack.c.l.b16 %v211
    %v1260 = vunpack.c.h.b16 %v211
    %v1261 = vunpack.c.l.b16 %v212
    %v1262 = vunpack.c.h.b16 %v212
    %v1263 = vunpack.c.l.b16 %v213
    %v1264 = vunpack.c.h.b16 %v213
    %v1265 = vunpack.c.l.b16 %v214
    %v1266 = vunpack.c.h.b16 %v214
    %v1267 = vunpack.c.l.b16 %v215
    %v1268 = vunpack.c.h.b16 %v215
    %v1269 = vunpack.c.l.b16 %v216
    %v1270 = vunpack.c.h.b16 %v216
    %v1271 = vunpack.c.l.b16 %v217
    %v1272 = vunpack.c.h.b16 %v217
    %v1273 = vunpack.c.l.b16 %v218
    %v1274 = vunpack.c.h.b16 %v218
    %v1275 = vunpack.c.l.b16 %v219
    %v1276 = vunpack.c.h.b16 %v219
    %v1277 = vunpack.c.l.b16 %v220
    %v1278 = vunpack.c.h.b16 %v220
    %v1279 = vunpack.c.l.b16 %v221
    %v1280 = vunpack.c.h.b16 %v221
    %v1281 = vunpack.c.l.b16 %v222
    %v1282 = vunpack.c.h.b16 %v222
    %v1283 = vunpack.c.l.b16 %v223
    %v1284 = vunpack.c.h.b16 %v223
    %v1285 = vunpack.c.l.b16 %v224
    %v1286 = vunpack.c.h.b16 %v224
    %v1287 = vunpack.c.l.b16 %v225
    %v1288 = vunpack.c.h.b16 %v225
    %v1289 = vunpack.c.l.b16 %v226
    %v1290 = vunpack.c.h.b16 %v226
    %v1291 = vunpack.c.l.b16 %v227
    %v1292 = vunpack.c.h.b16 %v227
    %v1293 = vunpack.c.l.b16 %v228
    %v1294 = vunpack.c.h.b16 %v228
    %v1295 = vunpack.c.l.b16 %v229
    %v1296 = vunpack.c.h.b16 %v229
    %v1297 = vunpack.c.l.b16 %v230
    %v1298 = vunpack.c.h.b16 %v230
    %v1299 = vunpack.c.l.b16 %v231
    %v1300 = vunpack.c.h.b16 %v231
    %v1301 = vunpack.c.l.b16 %v232
    %v1302 = vunpack.c.h.b16 %v232
    %v1303 = vunpack.c.l.b16 %v233
    %v1304 = vunpack.c.h.b16 %v233
    %v1305 = vunpack.c.l.b16 %v234
    %v1306 = vunpack.c.h.b16 %v234
    %v1307 = vunpack.c.l.b16 %v235
    %v1308 = vunpack.c.h.b16 %v235
    %v1309 = vunpack.c.l.b16 %v236
    %v1310 = vunpack.c.h.b16 %v236
    %v1311 = vunpack.c.l.b16 %v237
    %v1312 = vunpack.c.h.b16 %v237
    %v1313 = vunpack.c.l.b16 %v238
    %v1314 = vunpack.c.h.b16 %v238
    %v1315 = vunpack.c.l.b16 %v239
    %v1316 = vunpack.c.h.b16 %v239
    %v1317 = vunpack.c.l.b16 %v240
    %v1318 = vunpack.c.h.b16 %v240
    %v1319 = vunpack.c.l.b16 %v241
    %v1320 = vunpack.c.h.b16 %v241
    %v1321 = vunpack.c.l.b16 %v242
    %v1322 = vunpack.c.h.b16 %v242
    %v1323 = vunpack.c.l.b16 %v243
    %v1324 = vunpack.c.h.b16 %v243
    %v1325 = vunpack.c.l.b16 %v244
    %v1326 = vunpack.c.h.b16 %v244
    %v1327 = vunpack.c.l.b16 %v245
    %v1328 = vunpack.c.h.b16 %v245
    %v1329 = vunpack.c.l.b16 %v246
    %v1330 = vunpack.c.h.b16 %v246
    %v1331 = vunpack.c.l.b16 %v247
    %v1332 = vunpack.c.h.b16 %v247
    %v1333 = vunpack.c.l.b16 %v248
    %v1334 = vunpack.c.h.b16 %v248
    %v1335 = vunpack.c.l.b16 %v249
    %v1336 = vunpack.c.h.b16 %v249
    %v1337 = vunpack.c.l.b16 %v250
    %v1338 = vunpack.c.h.b16 %v250
    %v1339 = vunpack.c.l.b16 %v251
    %v1340 = vunpack.c.h.b16 %v251
    %v1341 = vunpack.c.l.b16 %v252
    %v1342 = vunpack.c.h.b16 %v252
    %v1343 = vunpack.c.l.b16 %v253
    %v1344 = vunpack.c.h.b16 %v253
    %v1345 = vunpack.c.l.b16 %v254
    %v1346 = vunpack.c.h.b16 %v254
    %v1347 = vunpack.c.l.b16 %v255
    %v1348 = vunpack.c.h.b16 %v255
    %v1349 = vunpack.c.l.b16 %v256
    %v1350 = vunpack.c.h.b16 %v256
    %v1351 = vunpack.c.l.b16 %v257
    %v1352 = vunpack.c.h.b16 %v257
    %v1353 = vunpack.c.l.b16 %v258
    %v1354 = vunpack.c.h.b16 %v258
    %v1355 = vunpack.c.l.b16 %v259
    %v1356 = vunpack.c.h.b16 %v259
    %v1357 = vunpack.c.l.b16 %v260
    %v1358 = vunpack.c.h.b16 %v260
    %v1359 = vunpack.c.l.b16 %v261
    %v1360 = vunpack.c.h.b16 %v261
    %v1361 = vunpack.c.l.b16 %v262
    %v1362 = vunpack.c.h.b16 %v262
    %v1363 = vunpack.c.l.b16 %v263
    %v1364 = vunpack.c.h.b16 %v263
    %v1365 = vunpack.c.l.b16 %v264
    %v1366 = vunpack.c.h.b16 %v264
    %v1367 = vunpack.c.l.b16 %v265
    %v1368 = vunpack.c.h.b16 %v265
    %v1369 = vunpack.c.l.b16 %v266
    %v1370 = vunpack.c.h.b16 %v266
    %v1371 = vunpack.c.l.b16 %v267
    %v1372 = vunpack.c.h.b16 %v267
    %v1373 = vunpack.c.l.b16 %v268
    %v1374 = vunpack.c.h.b16 %v268
    %v1375 = vunpack.c.l.b16 %v269
    %v1376 = vunpack.c.h.b16 %v269
    %v1377 = vunpack.c.l.b16 %v270
    %v1378 = vunpack.c.h.b16 %v270
    %v1379 = vunpack.c.l.b16 %v271
    %v1380 = vunpack.c.h.b16 %v271
    %v1381 = vunpack.c.l.b16 %v272
    %v1382 = vunpack.c.h.b16 %v272
    %v1383 = vunpack.c.l.b16 %v273
    %v1384 = vunpack.c.h.b16 %v273
    %v1385 = vunpack.c.l.b16 %v274
    %v1386 = vunpack.c.h.b16 %v274
    %v1387 = vunpack.c.l.b16 %v275
    %v1388 = vunpack.c.h.b16 %v275
    %v1389 = vunpack.c.l.b16 %v276
    %v1390 = vunpack.c.h.b16 %v276
    %v1391 = vunpack.c.l.b16 %v277
    %v1392 = vunpack.c.h.b16 %v277
    %v1393 = vunpack.c.l.b16 %v278
    %v1394 = vunpack.c.h.b16 %v278
    %v1395 = vunpack.c.l.b16 %v279
    %v1396 = vunpack.c.h.b16 %v279
    %v1397 = vunpack.c.l.b16 %v280
    %v1398 = vunpack.c.h.b16 %v280
    %v1399 = vunpack.c.l.b16 %v281
    %v1400 = vunpack.c.h.b16 %v281
    %v1401 = vunpack.c.l.b16 %v282
    %v1402 = vunpack.c.h.b16 %v282
    %v1403 = vunpack.c.l.b16 %v283
    %v1404 = vunpack.c.h.b16 %v283
    %v1405 = vunpack.c.l.b16 %v284
    %v1406 = vunpack.c.h.b16 %v284
    %v1407 = vunpack.c.l.b16 %v285
    %v1408 = vunpack.c.h.b16 %v285
    %v1409 = vunpack.c.l.b16 %v286
    %v1410 = vunpack.c.h.b16 %v286
    %v1411 = vunpack.c.l.b16 %v287
    %v1412 = vunpack.c.h.b16 %v287
    %v1413 = vunpack.c.l.b16 %v288
    %v1414 = vunpack.c.h.b16 %v288
    %v1415 = vunpack.c.l.b16 %v289
    %v1416 = vunpack.c.h.b16 %v289
    %v1417 = vunpack.c.l.b16 %v290
    %v1418 = vunpack.c.h.b16 %v290
    %v1419 = vunpack.c.l.b16 %v291
    %v1420 = vunpack.c.h.b16 %v291
    %v1421 = vunpack.c.l.b16 %v292
    %v1422 = vunpack.c.h.b16 %v292
    %v1423 = vunpack.c.l.b16 %v293
    %v1424 = vunpack.c.h.b16 %v293
    %v1425 = vunpack.c.l.b16 %v294
    %v1426 = vunpack.c.h.b16 %v294
    %v1427 = vunpack.c.l.b16 %v295
    %v1428 = vunpack.c.h.b16 %v295
    %v1429 = vunpack.c.l.b16 %v296
    %v1430 = vunpack.c.h.b16 %v296
    %v1431 = vunpack.c.l.b16 %v297
    %v1432 = vunpack.c.h.b16 %v297
    %v1433 = vunpack.c.l.b16 %v298
    %v1434 = vunpack.c.h.b16 %v298
    %v1435 = vunpack.c.l.b16 %v299
    %v1436 = vunpack.c.h.b16 %v299
    %v1437 = vunpack.c.l.b16 %v300
    %v1438 = vunpack.c.h.b16 %v300
    %v1439 = vunpack.c.l.b16 %v301
    %v1440 = vunpack.c.h.b16 %v301
    %v1441 = vunpack.c.l.b16 %v302
    %v1442 = vunpack.c.h.b16 %v302
    %v1443 = vunpack.c.l.b16 %v303
    %v1444 = vunpack.c.h.b16 %v303
    %v1445 = vunpack.c.l.b16 %v304
    %v1446 = vunpack.c.h.b16 %v304
    %v1447 = vunpack.c.l.b16 %v305
    %v1448 = vunpack.c.h.b16 %v305
    %v1449 = vunpack.c.l.b16 %v306
    %v1450 = vunpack.c.h.b16 %v306
    %v1451 = vunpack.c.l.b16 %v307
    %v1452 = vunpack.c.h.b16 %v307
    %v1453 = vunpack.c.l.b16 %v308
    %v1454 = vunpack.c.h.b16 %v308
    %v1455 = vunpack.c.l.b16 %v309
    %v1456 = vunpack.c.h.b16 %v309
    %v1457 = vunpack.c.l.b16 %v310
    %v1458 = vunpack.c.h.b16 %v310
    %v1459 = vunpack.c.l.b16 %v311
    %v1460 = vunpack.c.h.b16 %v311
    %v1461 = vunpack.c.l.b16 %v312
    %v1462 = vunpack.c.h.b16 %v312
    %v1463 = vunpack.c.l.b16 %v313
    %v1464 = vunpack.c.h.b16 %v313
    %v1465 = vunpack.c.l.b16 %v314
    %v1466 = vunpack.c.h.b16 %v314
    %v1467 = vunpack.c.l.b16 %v315
    %v1468 = vunpack.c.h.b16 %v315
    %v1469 = vunpack.c.l.b16 %v316
    %v1470 = vunpack.c.h.b16 %v316
    %v1471 = vunpack.c.l.b16 %v317
    %v1472 = vunpack.c.h.b16 %v317
    %v1473 = vunpack.c.l.b16 %v318
    %v1474 = vunpack.c.h.b16 %v318
    %v1475 = vunpack.c.l.b16 %v319
    %v1476 = vunpack.c.h.b16 %v319
    %v1477 = vunpack.c.l.b16 %v320
    %v1478 = vunpack.c.h.b16 %v320
    %v1479 = vunpack.c.l.b16 %v321
    %v1480 = vunpack.c.h.b16 %v321
    %v1481 = vunpack.c.l.b16 %v322
    %v1482 = vunpack.c.h.b16 %v322
    %v1483 = vunpack.c.l.b16 %v323
    %v1484 = vunpack.c.h.b16 %v323
    %v1485 = vunpack.c.l.b16 %v324
    %v1486 = vunpack.c.h.b16 %v324
    %v1487 = vunpack.c.l.b16 %v325
    %v1488 = vunpack.c.h.b16 %v325
    %v1489 = vunpack.c.l.b16 %v326
    %v1490 = vunpack.c.h.b16 %v326
    %v1491 = vunpack.c.l.b16 %v327
    %v1492 = vunpack.c.h.b16 %v327
    %v1493 = vunpack.c.l.b16 %v328
    %v1494 = vunpack.c.h.b16 %v328
    %v1495 = vunpack.c.l.b16 %v329
    %v1496 = vunpack.c.h.b16 %v329
    %v1497 = vunpack.c.l.b16 %v330
    %v1498 = vunpack.c.h.b16 %v330
    %v1499 = vunpack.c.l.b16 %v331
    %v1500 = vunpack.c.h.b16 %v331
    %v1501 = vunpack.c.l.b16 %v332
    %v1502 = vunpack.c.h.b16 %v332
    %v1503 = vunpack.c.l.b16 %v333
    %v1504 = vunpack.c.h.b16 %v333
    %v1505 = vunpack.c.l.b16 %v334
    %v1506 = vunpack.c.h.b16 %v334
    %v1507 = vunpack.c.l.b16 %v335
    %v1508 = vunpack.c.h.b16 %v335
    %v1509 = vunpack.c.l.b16 %v336
    %v1510 = vunpack.c.h.b16 %v336
    %v1511 = vunpack.c.l.b16 %v337
    %v1512 = vunpack.c.h.b16 %v337
    %v1513 = vunpack.c.l.b16 %v338
    %v1514 = vunpack.c.h.b16 %v338
    %v1515 = vunpack.c.l.b16 %v339
    %v1516 = vunpack.c.h.b16 %v339
    %v1517 = vunpack.c.l.b16 %v340
    %v1518 = vunpack.c.h.b16 %v340
    %v1519 = vunpack.c.l.b16 %v341
    %v1520 = vunpack.c.h.b16 %v341
    %v1521 = vunpack.c.l.b16 %v342
    %v1522 = vunpack.c.h.b16 %v342
    %v1523 = vunpack.c.l.b16 %v343
    %v1524 = vunpack.c.h.b16 %v343
    %v1525 = vunpack.c.l.b16 %v344
    %v1526 = vunpack.c.h.b16 %v344
    %v1527 = vunpack.c.l.b16 %v345
    %v1528 = vunpack.c.h.b16 %v345
    %v1529 = vunpack.c.l.b16 %v346
    %v1530 = vunpack.c.h.b16 %v346
    %v1531 = vunpack.c.l.b16 %v347
    %v1532 = vunpack.c.h.b16 %v347
    %v1533 = vunpack.c.l.b16 %v348
    %v1534 = vunpack.c.h.b16 %v348
    %v1535 = vunpack.c.l.b16 %v349
    %v1536 = vunpack.c.h.b16 %v349
    %v1537 = vunpack.c.l.b16 %v350
    %v1538 = vunpack.c.h.b16 %v350
    %v1539 = vunpack.c.l.b16 %v351
    %v1540 = vunpack.c.h.b16 %v351
    %v1541 = vunpack.c.l.b16 %v352
    %v1542 = vunpack.c.h.b16 %v352
    %v1543 = vunpack.c.l.b16 %v353
    %v1544 = vunpack.c.h.b16 %v353
    %v1545 = vunpack.c.l.b16 %v354
    %v1546 = vunpack.c.h.b16 %v354
    %v1547 = vunpack.c.l.b16 %v355
    %v1548 = vunpack.c.h.b16 %v355
    %v1549 = vunpack.c.l.b16 %v356
    %v1550 = vunpack.c.h.b16 %v356
    %v1551 = vunpack.c.l.b16 %v357
    %v1552 = vunpack.c.h.b16 %v357
    %v1553 = vunpack.c.l.b16 %v358
    %v1554 = vunpack.c.h.b16 %v358
    %v1555 = vunpack.c.l.b16 %v359
    %v1556 = vunpack.c.h.b16 %v359
    %v1557 = vunpack.c.l.b16 %v360
    %v1558 = vunpack.c.h.b16 %v360
    %v1559 = vunpack.c.l.b16 %v361
    %v1560 = vunpack.c.h.b16 %v361
    %v1561 = vunpack.c.l.b16 %v362
    %v1562 = vunpack.c.h.b16 %v362
    %v1563 = vunpack.c.l.b16 %v363
    %v1564 = vunpack.c.h.b16 %v363
    %v1565 = vunpack.c.l.b16 %v364
    %v1566 = vunpack.c.h.b16 %v364
    %v1567 = vunpack.c.l.b16 %v365
    %v1568 = vunpack.c.h.b16 %v365
    %v1569 = vunpack.c.l.b16 %v366
    %v1570 = vunpack.c.h.b16 %v366
    %v1571 = vunpack.c.l.b16 %v367
    %v1572 = vunpack.c.h.b16 %v367
    %v1573 = vunpack.c.l.b16 %v368
    %v1574 = vunpack.c.h.b16 %v368
    %v1575 = vunpack.c.l.b16 %v369
    %v1576 = vunpack.c.h.b16 %v369
    %v1577 = vunpack.c.l.b16 %v370
    %v1578 = vunpack.c.h.b16 %v370
    %v1579 = vunpack.c.l.b16 %v371
    %v1580 = vunpack.c.h.b16 %v371
    %v1581 = vunpack.c.l.b16 %v372
    %v1582 = vunpack.c.h.b16 %v372
    %v1583 = vunpack.c.l.b16 %v373
    %v1584 = vunpack.c.h.b16 %v373
    %v1585 = vunpack.c.l.b16 %v374
    %v1586 = vunpack.c.h.b16 %v374
    %v1587 = vunpack.c.l.b16 %v375
    %v1588 = vunpack.c.h.b16 %v375
    %v1589 = vunpack.c.l.b16 %v376
    %v1590 = vunpack.c.h.b16 %v376
    %v1591 = vunpack.c.l.b16 %v377
    %v1592 = vunpack.c.h.b16 %v377
    %v1593 = vunpack.c.l.b16 %v378
    %v1594 = vunpack.c.h.b16 %v378
    %v1595 = vunpack.c.l.b16 %v379
    %v1596 = vunpack.c.h.b16 %v379
    %v1597 = vunpack.c.l.b16 %v380
    %v1598 = vunpack.c.h.b16 %v380
    %v1599 = vunpack.c.l.b16 %v381
    %v1600 = vunpack.c.h.b16 %v381
    %v1601 = vunpack.c.l.b16 %v382
    %v1602 = vunpack.c.h.b16 %v382
    %v1603 = vunpack.c.l.b16 %v383
    %v1604 = vunpack.c.h.b16 %v383
    %v1605 = vunpack.c.l.b16 %v384
    %v1606 = vunpack.c.h.b16 %v384
    %v1607 = vunpack.c.l.b16 %v385
    %v1608 = vunpack.c.h.b16 %v385
    %v1609 = vunpack.c.l.b16 %v386
    %v1610 = vunpack.c.h.b16 %v386
    %v1611 = vunpack.c.l.b16 %v387
    %v1612 = vunpack.c.h.b16 %v387
    %v1613 = vunpack.c.l.b16 %v388
    %v1614 = vunpack.c.h.b16 %v388
    %v1615 = vunpack.c.l.b16 %v389
    %v1616 = vunpack.c.h.b16 %v389
    %v1617 = vunpack.c.l.b16 %v390
    %v1618 = vunpack.c.h.b16 %v390
    %v1619 = vunpack.c.l.b16 %v391
    %v1620 = vunpack.c.h.b16 %v391
    %v1621 = vunpack.c.l.b16 %v392
    %v1622 = vunpack.c.h.b16 %v392
    %v1623 = vunpack.c.l.b16 %v393
    %v1624 = vunpack.c.h.b16 %v393
    %v1625 = vunpack.c.l.b16 %v394
    %v1626 = vunpack.c.h.b16 %v394
    %v1627 = vunpack.c.l.b16 %v395
    %v1628 = vunpack.c.h.b16 %v395
    %v1629 = vunpack.c.l.b16 %v396
    %v1630 = vunpack.c.h.b16 %v396
    %v1631 = vunpack.c.l.b16 %v397
    %v1632 = vunpack.c.h.b16 %v397
    %v1633 = vunpack.c.l.b16 %v398
    %v1634 = vunpack.c.h.b16 %v398
    %v1635 = vunpack.c.l.b16 %v399
    %v1636 = vunpack.c.h.b16 %v399
    %v1637 = vunpack.c.l.b16 %v400
    %v1638 = vunpack.c.h.b16 %v400
    %v1639 = vunpack.c.l.b16 %v401
    %v1640 = vunpack.c.h.b16 %v401
    %v1641 = vunpack.c.l.b16 %v402
    %v1642 = vunpack.c.h.b16 %v402
    %v1643 = vunpack.c.l.b16 %v403
    %v1644 = vunpack.c.h.b16 %v403
    %v1645 = vunpack.c.l.b16 %v404
    %v1646 = vunpack.c.h.b16 %v404
    %v1647 = vunpack.c.l.b16 %v405
    %v1648 = vunpack.c.h.b16 %v405
    %v1649 = vunpack.c.l.b16 %v406
    %v1650 = vunpack.c.h.b16 %v406
    %v1651 = vunpack.c.l.b16 %v407
    %v1652 = vunpack.c.h.b16 %v407
    %v1653 = vunpack.c.l.b16 %v408
    %v1654 = vunpack.c.h.b16 %v408
    %v1655 = vunpack.c.l.b16 %v409
    %v1656 = vunpack.c.h.b16 %v409
    %v1657 = vunpack.c.l.b16 %v410
    %v1658 = vunpack.c.h.b16 %v410
    %v1659 = vunpack.c.l.b16 %v411
    %v1660 = vunpack.c.h.b16 %v411
    %v1661 = vunpack.c.l.b16 %v412
    %v1662 = vunpack.c.h.b16 %v412
    %v1663 = vunpack.c.l.b16 %v413
    %v1664 = vunpack.c.h.b16 %v413
    %v1665 = vunpack.c.l.b16 %v414
    %v1666 = vunpack.c.h.b16 %v414
    %v1667 = vunpack.c.l.b16 %v415
    %v1668 = vunpack.c.h.b16 %v415
    %v1669 = vunpack.c.l.b16 %v416
    %v1670 = vunpack.c.h.b16 %v416
    %v1671 = vunpack.c.l.b16 %v417
    %v1672 = vunpack.c.h.b16 %v417
    %v1673 = vunpack.c.l.b16 %v418
    %v1674 = vunpack.c.h.b16 %v418
    %v1675 = vunpack.c.l.b16 %v419
    %v1676 = vunpack.c.h.b16 %v419
    %v1677 = vunpack.c.l.b16 %v420
    %v1678 = vunpack.c.h.b16 %v420
    %v1679 = vunpack.c.l.b16 %v421
    %v1680 = vunpack.c.h.b16 %v421
    %v1681 = vunpack.c.l.b16 %v422
    %v1682 = vunpack.c.h.b16 %v422
    %v1683 = vunpack.c.l.b16 %v423
    %v1684 = vunpack.c.h.b16 %v423
    %v1685 = vunpack.c.l.b16 %v424
    %v1686 = vunpack.c.h.b16 %v424
    %v1687 = vunpack.c.l.b16 %v425
    %v1688 = vunpack.c.h.b16 %v425
    %v1689 = vunpack.c.l.b16 %v426
    %v1690 = vunpack.c.h.b16 %v426
    %v1691 = vunpack.c.l.b16 %v427
    %v1692 = vunpack.c.h.b16 %v427
    %v1693 = vunpack.c.l.b16 %v428
    %v1694 = vunpack.c.h.b16 %v428
    %v1695 = vunpack.c.l.b16 %v429
    %v1696 = vunpack.c.h.b16 %v429
    %v1697 = vunpack.c.l.b16 %v430
    %v1698 = vunpack.c.h.b16 %v430
    %v1699 = vunpack.c.l.b16 %v431
    %v1700 = vunpack.c.h.b16 %v431
    %v1701 = vunpack.c.l.b16 %v432
    %v1702 = vunpack.c.h.b16 %v432
    %v1703 = vunpack.c.l.b16 %v433
    %v1704 = vunpack.c.h.b16 %v433
    %v1705 = vunpack.c.l.b16 %v434
    %v1706 = vunpack.c.h.b16 %v434
    %v1707 = vunpack.c.l.b16 %v435
    %v1708 = vunpack.c.h.b16 %v435
    %v1709 = vunpack.c.l.b16 %v436
    %v1710 = vunpack.c.h.b16 %v436
    %v1711 = vunpack.c.l.b16 %v437
    %v1712 = vunpack.c.h.b16 %v437
    %v1713 = vunpack.c.l.b16 %v438
    %v1714 = vunpack.c.h.b16 %v438
    %v1715 = vunpack.c.l.b16 %v439
    %v1716 = vunpack.c.h.b16 %v439
    %v1717 = vunpack.c.l.b16 %v440
    %v1718 = vunpack.c.h.b16 %v440
    %v1719 = vpack.c.b16 %v953, %v951
    %v1720 = vpack.c.b16 %v954, %v952
    %v1721 = vpack.c.b16 %v957, %v955
    %v1722 = vpack.c.b16 %v958, %v956
    %v1723 = vpack.c.b16 %v961, %v959
    %v1724 = vpack.c.b16 %v962, %v960
    %v1725 = vpack.c.b16 %v965, %v963
    %v1726 = vpack.c.b16 %v966, %v964
    %v1727 = vpack.c.b16 %v969, %v967
    %v1728 = vpack.c.b16 %v970, %v968
    %v1729 = vpack.c.b16 %v973, %v971
    %v1730 = vpack.c.b16 %v974, %v972
    %v1731 = vpack.c.b16 %v977, %v975
    %v1732 = vpack.c.b16 %v978, %v976
    %v1733 = vpack.c.b16 %v981, %v979
    %v1734 = vpack.c.b16 %v982, %v980
    %v1735 = vpack.c.b16 %v985, %v983
    %v1736 = vpack.c.b16 %v986, %v984
    %v1737 = vpack.c.b16 %v989, %v987
    %v1738 = vpack.c.b16 %v990, %v988
    %v1739 = vpack.c.b16 %v993, %v991
    %v1740 = vpack.c.b16 %v994, %v992
    %v1741 = vpack.c.b16 %v997, %v995
    %v1742 = vpack.c.b16 %v998, %v996
    %v1743 = vpack.c.b16 %v1001, %v999
    %v1744 = vpack.c.b16 %v1002, %v1000
    %v1745 = vpack.c.b16 %v1005, %v1003
    %v1746 = vpack.c.b16 %v1006, %v1004
    %v1747 = vpack.c.b16 %v1009, %v1007
    %v1748 = vpack.c.b16 %v1010, %v1008
    %v1749 = vpack.c.b16 %v1013, %v1011
    %v1750 = vpack.c.b16 %v1014, %v1012
    %v1751 = vpack.c.b16 %v1017, %v1015
    %v1752 = vpack.c.b16 %v1018, %v1016
    %v1753 = vpack.c.b16 %v1021, %v1019
    %v1754 = vpack.c.b16 %v1022, %v1020
    %v1755 = vpack.c.b16 %v1025, %v1023
    %v1756 = vpack.c.b16 %v1026, %v1024
    %v1757 = vpack.c.b16 %v1029, %v1027
    %v1758 = vpack.c.b16 %v1030, %v1028
    %v1759 = vpack.c.b16 %v1033, %v1031
    %v1760 = vpack.c.b16 %v1034, %v1032
    %v1761 = vpack.c.b16 %v1037, %v1035
    %v1762 = vpack.c.b16 %v1038, %v1036
    %v1763 = vpack.c.b16 %v1041, %v1039
    %v1764 = vpack.c.b16 %v1042, %v1040
    %v1765 = vpack.c.b16 %v1045, %v1043
    %v1766 = vpack.c.b16 %v1046, %v1044
    %v1767 = vpack.c.b16 %v1049, %v1047
    %v1768 = vpack.c.b16 %v1050, %v1048
    %v1769 = vpack.c.b16 %v1053, %v1051
    %v1770 = vpack.c.b16 %v1054, %v1052
    %v1771 = vpack.c.b16 %v1057, %v1055
    %v1772 = vpack.c.b16 %v1058, %v1056
    %v1773 = vpack.c.b16 %v1061, %v1059
    %v1774 = vpack.c.b16 %v1062, %v1060
    %v1775 = vpack.c.b16 %v1065, %v1063
    %v1776 = vpack.c.b16 %v1066, %v1064
    %v1777 = vpack.c.b16 %v1069, %v1067
    %v1778 = vpack.c.b16 %v1070, %v1068
    %v1779 = vpack.c.b16 %v1073, %v1071
    %v1780 = vpack.c.b16 %v1074, %v1072
    %v1781 = vpack.c.b16 %v1077, %v1075
    %v1782 = vpack.c.b16 %v1078, %v1076
    %v1783 = vpack.c.b16 %v1081, %v1079
    %v1784 = vpack.c.b16 %v1082, %v1080
    %v1785 = vpack.c.b16 %v1085, %v1083
    %v1786 = vpack.c.b16 %v1086, %v1084
    %v1787 = vpack.c.b16 %v1089, %v1087
    %v1788 = vpack.c.b16 %v1090, %v1088
    %v1789 = vpack.c.b16 %v1093, %v1091
    %v1790 = vpack.c.b16 %v1094, %v1092
    %v1791 = vpack.c.b16 %v1097, %v1095
    %v1792 = vpack.c.b16 %v1098, %v1096
    %v1793 = vpack.c.b16 %v1101, %v1099
    %v1794 = vpack.c.b16 %v1102, %v1100
    %v1795 = vpack.c.b16 %v1105, %v1103
    %v1796 = vpack.c.b16 %v1106, %v1104
    %v1797 = vpack.c.b16 %v1109, %v1107
    %v1798 = vpack.c.b16 %v1110, %v1108
    %v1799 = vpack.c.b16 %v1113, %v1111
    %v1800 = vpack.c.b16 %v1114, %v1112
    %v1801 = vpack.c.b16 %v1117, %v1115
    %v1802 = vpack.c.b16 %v1118, %v1116
    %v1803 = vpack.c.b16 %v1121, %v1119
    %v1804 = vpack.c.b16 %v1122, %v1120
    %v1805 = vpack.c.b16 %v1125, %v1123
    %v1806 = vpack.c.b16 %v1126, %v1124
    %v1807 = vpack.c.b16 %v1129, %v1127
    %v1808 = vpack.c.b16 %v1130, %v1128
    %v1809 = vpack.c.b16 %v1133, %v1131
    %v1810 = vpack.c.b16 %v1134, %v1132
    %v1811 = vpack.c.b16 %v1137, %v1135
    %v1812 = vpack.c.b16 %v1138, %v1136
    %v1813 = vpack.c.b16 %v1141, %v1139
    %v1814 = vpack.c.b16 %v1142, %v1140
    %v1815 = vpack.c.b16 %v1145, %v1143
    %v1816 = vpack.c.b16 %v1146, %v1144
    %v1817 = vpack.c.b16 %v1149, %v1147
    %v1818 = vpack.c.b16 %v1150, %v1148
    %v1819 = vpack.c.b16 %v1153, %v1151
    %v1820 = vpack.c.b16 %v1154, %v1152
    %v1821 = vpack.c.b16 %v1157, %v1155
    %v1822 = vpack.c.b16 %v1158, %v1156
    %v1823 = vpack.c.b16 %v1161, %v1159
    %v1824 = vpack.c.b16 %v1162, %v1160
    %v1825 = vpack.c.b16 %v1165, %v1163
    %v1826 = vpack.c.b16 %v1166, %v1164
    %v1827 = vpack.c.b16 %v1169, %v1167
    %v1828 = vpack.c.b16 %v1170, %v1168
    %v1829 = vpack.c.b16 %v1173, %v1171
    %v1830 = vpack.c.b16 %v1174, %v1172
    %v1831 = vpack.c.b16 %v1177, %v1175
    %v1832 = vpack.c.b16 %v1178, %v1176
    %v1833 = vpack.c.b16 %v1181, %v1179
    %v1834 = vpack.c.b16 %v1182, %v1180
    %v1835 = vpack.c.b16 %v1185, %v1183
    %v1836 = vpack.c.b16 %v1186, %v1184
    %v1837 = vpack.c.b16 %v1189, %v1187
    %v1838 = vpack.c.b16 %v1190, %v1188
    %v1839 = vpack.c.b16 %v1193, %v1191
    %v1840 = vpack.c.b16 %v1194, %v1192
    %v1841 = vpack.c.b16 %v1197, %v1195
    %v1842 = vpack.c.b16 %v1198, %v1196
    %v1843 = vpack.c.b16 %v1201, %v1199
    %v1844 = vpack.c.b16 %v1202, %v1200
    %v1845 = vpack.c.b16 %v1205, %v1203
    %v1846 = vpack.c.b16 %v1206, %v1204
    %v1847 = vpack.c.b16 %v1209, %v1207
    %v1848 = vpack.c.b16 %v1210, %v1208
    %v1849 = vpack.c.b16 %v1213, %v1211
    %v1850 = vpack.c.b16 %v1214, %v1212
    %v1851 = vpack.c.b16 %v1217, %v1215
    %v1852 = vpack.c.b16 %v1218, %v1216
    %v1853 = vpack.c.b16 %v1221, %v1219
    %v1854 = vpack.c.b16 %v1222, %v1220
    %v1855 = vpack.c.b16 %v1225, %v1223
    %v1856 = vpack.c.b16 %v1226, %v1224
    %v1857 = vpack.c.b16 %v1229, %v1227
    %v1858 = vpack.c.b16 %v1230, %v1228
    %v1859 = vpack.c.b16 %v1233, %v1231
    %v1860 = vpack.c.b16 %v1234, %v1232
    %v1861 = vpack.c.b16 %v1237, %v1235
    %v1862 = vpack.c.b16 %v1238, %v1236
    %v1863 = vpack.c.b16 %v1241, %v1239
    %v1864 = vpack.c.b16 %v1242, %v1240
    %v1865 = vpack.c.b16 %v1245, %v1243
    %v1866 = vpack.c.b16 %v1246, %v1244
    %v1867 = vpack.c.b16 %v1249, %v1247
    %v1868 = vpack.c.b16 %v1250, %v1248
    %v1869 = vpack.c.b16 %v1253, %v1251
    %v1870 = vpack.c.b16 %v1254, %v1252
    %v1871 = vpack.c.b16 %v1257, %v1255
    %v1872 = vpack.c.b16 %v1258, %v1256
    %v1873 = vpack.c.b16 %v1261, %v1259
    %v1874 = vpack.c.b16 %v1262, %v1260
    %v1875 = vpack.c.b16 %v1265, %v1263
    %v1876 = vpack.c.b16 %v1266, %v1264
    %v1877 = vpack.c.b16 %v1269, %v1267
    %v1878 = vpack.c.b16 %v1270, %v1268
    %v1879 = vpack.c.b16 %v1273, %v1271
    %v1880 = vpack.c.b16 %v1274, %v1272
    %v1881 = vpack.c.b16 %v1277, %v1275
    %v1882 = vpack.c.b16 %v1278, %v1276
    %v1883 = vpack.c.b16 %v1281, %v1279
    %v1884 = vpack.c.b16 %v1282, %v1280
    %v1885 = vpack.c.b16 %v1285, %v1283
    %v1886 = vpack.c.b16 %v1286, %v1284
    %v1887 = vpack.c.b16 %v1289, %v1287
    %v1888 = vpack.c.b16 %v1290, %v1288
    %v1889 = vpack.c.b16 %v1293, %v1291
    %v1890 = vpack.c.b16 %v1294, %v1292
    %v1891 = vpack.c.b16 %v1297, %v1295
    %v1892 = vpack.c.b16 %v1298, %v1296
    %v1893 = vpack.c.b16 %v1301, %v1299
    %v1894 = vpack.c.b16 %v1302, %v1300
    %v1895 = vpack.c.b16 %v1305, %v1303
    %v1896 = vpack.c.b16 %v1306, %v1304
    %v1897 = vpack.c.b16 %v1309, %v1307
    %v1898 = vpack.c.b16 %v1310, %v1308
    %v1899 = vpack.c.b16 %v1313, %v1311
    %v1900 = vpack.c.b16 %v1314, %v1312
    %v1901 = vpack.c.b16 %v1317, %v1315
    %v1902 = vpack.c.b16 %v1318, %v1316
    %v1903 = vpack.c.b16 %v1321, %v1319
    %v1904 = vpack.c.b16 %v1322, %v1320
    %v1905 = vpack.c.b16 %v1325, %v1323
    %v1906 = vpack.c.b16 %v1326, %v1324
    %v1907 = vpack.c.b16 %v1329, %v1327
    %v1908 = vpack.c.b16 %v1330, %v1328
    %v1909 = vpack.c.b16 %v1333, %v1331
    %v1910 = vpack.c.b16 %v1334, %v1332
    %v1911 = vpack.c.b16 %v1337, %v1335
    %v1912 = vpack.c.b16 %v1338, %v1336
    %v1913 = vpack.c.b16 %v1341, %v1339
    %v1914 = vpack.c.b16 %v1342, %v1340
    %v1915 = vpack.c.b16 %v1345, %v1343
    %v1916 = vpack.c.b16 %v1346, %v1344
    %v1917 = vpack.c.b16 %v1349, %v1347
    %v1918 = vpack.c.b16 %v1350, %v1348
    %v1919 = vpack.c.b16 %v1353, %v1351
    %v1920 = vpack.c.b16 %v1354, %v1352
    %v1921 = vpack.c.b16 %v1357, %v1355
    %v1922 = vpack.c.b16 %v1358, %v1356
    %v1923 = vpack.c.b16 %v1361, %v1359
    %v1924 = vpack.c.b16 %v1362, %v1360
    %v1925 = vpack.c.b16 %v1365, %v1363
    %v1926 = vpack.c.b16 %v1366, %v1364
    %v1927 = vpack.c.b16 %v1369, %v1367
    %v1928 = vpack.c.b16 %v1370, %v1368
    %v1929 = vpack.c.b16 %v1373, %v1371
    %v1930 = vpack.c.b16 %v1374, %v1372
    %v1931 = vpack.c.b16 %v1377, %v1375
    %v1932 = vpack.c.b16 %v1378, %v1376
    %v1933 = vpack.c.b16 %v1381, %v1379
    %v1934 = vpack.c.b16 %v1382, %v1380
    %v1935 = vpack.c.b16 %v1385, %v1383
    %v1936 = vpack.c.b16 %v1386, %v1384
    %v1937 = vpack.c.b16 %v1389, %v1387
    %v1938 = vpack.c.b16 %v1390, %v1388
    %v1939 = vpack.c.b16 %v1393, %v1391
    %v1940 = vpack.c.b16 %v1394, %v1392
    %v1941 = vpack.c.b16 %v1397, %v1395
    %v1942 = vpack.c.b16 %v1398, %v1396
    %v1943 = vpack.c.b16 %v1401, %v1399
    %v1944 = vpack.c.b16 %v1402, %v1400
    %v1945 = vpack.c.b16 %v1405, %v1403
    %v1946 = vpack.c.b16 %v1406, %v1404
    %v1947 = vpack.c.b16 %v1409, %v1407
    %v1948 = vpack.c.b16 %v1410, %v1408
    %v1949 = vpack.c.b16 %v1413, %v1411
    %v1950 = vpack.c.b16 %v1414, %v1412
    %v1951 = vpack.c.b16 %v1417, %v1415
    %v1952 = vpack.c.b16 %v1418, %v1416
    %v1953 = vpack.c.b16 %v1421, %v1419
    %v1954 = vpack.c.b16 %v1422, %v1420
    %v1955 = vpack.c.b16 %v1425, %v1423
    %v1956 = vpack.c.b16 %v1426, %v1424
    %v1957 = vpack.c.b16 %v1429, %v1427
    %v1958 = vpack.c.b16 %v1430, %v1428
    %v1959 = vpack.c.b16 %v1433, %v1431
    %v1960 = vpack.c.b16 %v1434, %v1432
    %v1961 = vpack.c.b16 %v1437, %v1435
    %v1962 = vpack.c.b16 %v1438, %v1436
    %v1963 = vpack.c.b16 %v1441, %v1439
    %v1964 = vpack.c.b16 %v1442, %v1440
    %v1965 = vpack.c.b16 %v1445, %v1443
    %v1966 = vpack.c.b16 %v1446, %v1444
    %v1967 = vpack.c.b16 %v1449, %v1447
    %v1968 = vpack.c.b16 %v1450, %v1448
    %v1969 = vpack.c.b16 %v1453, %v1451
    %v1970 = vpack.c.b16 %v1454, %v1452
    %v1971 = vpack.c.b16 %v1457, %v1455
    %v1972 = vpack.c.b16 %v1458, %v1456
    %v1973 = vpack.c.b16 %v1461, %v1459
    %v1974 = vpack.c.b16 %v1462, %v1460
    %v1975 = vpack.c.b16 %v1465, %v1463
    %v1976 = vpack.c.b16 %v1466, %v1464
    %v1977 = vpack.c.b16 %v1469, %v1467
    %v1978 = vpack.c.b16 %v1470, %v1468
    %v1979 = vpack.c.b16 %v1473, %v1471
    %v1980 = vpack.c.b16 %v1474, %v1472
    %v1981 = vpack.c.b16 %v1477, %v1475
    %v1982 = vpack.c.b16 %v1478, %v1476
    %v1983 = vpack.c.b16 %v1481, %v1479
    %v1984 = vpack.c.b16 %v1482, %v1480
    %v1985 = vpack.c.b16 %v1485, %v1483
    %v1986 = vpack.c.b16 %v1486, %v1484
    %v1987 = vpack.c.b16 %v1489, %v1487
    %v1988 = vpack.c.b16 %v1490, %v1488
    %v1989 = vpack.c.b16 %v1493, %v1491
    %v1990 = vpack.c.b16 %v1494, %v1492
    %v1991 = vpack.c.b16 %v1497, %v1495
    %v1992 = vpack.c.b16 %v1498, %v1496
    %v1993 = vpack.c.b16 %v1501, %v1499
    %v1994 = vpack.c.b16 %v1502, %v1500
    %v1995 = vpack.c.b16 %v1505, %v1503
    %v1996 = vpack.c.b16 %v1506, %v1504
    %v1997 = vpack.c.b16 %v1509, %v1507
    %v1998 = vpack.c.b16 %v1510, %v1508
    %v1999 = vpack.c.b16 %v1513, %v1511
    %v2000 = vpack.c.b16 %v1514, %v1512
    %v2001 = vpack.c.b16 %v1517, %v1515
    %v2002 = vpack.c.b16 %v1518, %v1516
    %v2003 = vpack.c.b16 %v1521, %v1519
    %v2004 = vpack.c.b16 %v1522, %v1520
    %v2005 = vpack.c.b16 %v1525, %v1523
    %v2006 = vpack.c.b16 %v1526, %v1524
    %v2007 = vpack.c.b16 %v1529, %v1527
    %v2008 = vpack.c.b16 %v1530, %v1528
    %v2009 = vpack.c.b16 %v1533, %v1531
    %v2010 = vpack.c.b16 %v1534, %v1532
    %v2011 = vpack.c.b16 %v1537, %v1535
    %v2012 = vpack.c.b16 %v1538, %v1536
    %v2013 = vpack.c.b16 %v1541, %v1539
    %v2014 = vpack.c.b16 %v1542, %v1540
    %v2015 = vpack.c.b16 %v1545, %v1543
    %v2016 = vpack.c.b16 %v1546, %v1544
    %v2017 = vpack.c.b16 %v1549, %v1547
    %v2018 = vpack.c.b16 %v1550, %v1548
    %v2019 = vpack.c.b16 %v1553, %v1551
    %v2020 = vpack.c.b16 %v1554, %v1552
    %v2021 = vpack.c.b16 %v1557, %v1555
    %v2022 = vpack.c.b16 %v1558, %v1556
    %v2023 = vpack.c.b16 %v1561, %v1559
    %v2024 = vpack.c.b16 %v1562, %v1560
    %v2025 = vpack.c.b16 %v1565, %v1563
    %v2026 = vpack.c.b16 %v1566, %v1564
    %v2027 = vpack.c.b16 %v1569, %v1567
    %v2028 = vpack.c.b16 %v1570, %v1568
    %v2029 = vpack.c.b16 %v1573, %v1571
    %v2030 = vpack.c.b16 %v1574, %v1572
    %v2031 = vpack.c.b16 %v1577, %v1575
    %v2032 = vpack.c.b16 %v1578, %v1576
    %v2033 = vpack.c.b16 %v1581, %v1579
    %v2034 = vpack.c.b16 %v1582, %v1580
    %v2035 = vpack.c.b16 %v1585, %v1583
    %v2036 = vpack.c.b16 %v1586, %v1584
    %v2037 = vpack.c.b16 %v1589, %v1587
    %v2038 = vpack.c.b16 %v1590, %v1588
    %v2039 = vpack.c.b16 %v1593, %v1591
    %v2040 = vpack.c.b16 %v1594, %v1592
    %v2041 = vpack.c.b16 %v1597, %v1595
    %v2042 = vpack.c.b16 %v1598, %v1596
    %v2043 = vpack.c.b16 %v1601, %v1599
    %v2044 = vpack.c.b16 %v1602, %v1600
    %v2045 = vpack.c.b16 %v1605, %v1603
    %v2046 = vpack.c.b16 %v1606, %v1604
    %v2047 = vpack.c.b16 %v1609, %v1607
    %v2048 = vpack.c.b16 %v1610, %v1608
    %v2049 = vpack.c.b16 %v1613, %v1611
    %v2050 = vpack.c.b16 %v1614, %v1612
    %v2051 = vpack.c.b16 %v1617, %v1615
    %v2052 = vpack.c.b16 %v1618, %v1616
    %v2053 = vpack.c.b16 %v1621, %v1619
    %v2054 = vpack.c.b16 %v1622, %v1620
    %v2055 = vpack.c.b16 %v1625, %v1623
    %v2056 = vpack.c.b16 %v1626, %v1624
    %v2057 = vpack.c.b16 %v1629, %v1627
    %v2058 = vpack.c.b16 %v1630, %v1628
    %v2059 = vpack.c.b16 %v1633, %v1631
    %v2060 = vpack.c.b16 %v1634, %v1632
    %v2061 = vpack.c.b16 %v1637, %v1635
    %v2062 = vpack.c.b16 %v1638, %v1636
    %v2063 = vpack.c.b16 %v1641, %v1639
    %v2064 = vpack.c.b16 %v1642, %v1640
    %v2065 = vpack.c.b16 %v1645, %v1643
    %v2066 = vpack.c.b16 %v1646, %v1644
    %v2067 = vpack.c.b16 %v1649, %v1647
    %v2068 = vpack.c.b16 %v1650, %v1648
    %v2069 = vpack.c.b16 %v1653, %v1651
    %v2070 = vpack.c.b16 %v1654, %v1652
    %v2071 = vpack.c.b16 %v1657, %v1655
    %v2072 = vpack.c.b16 %v1658, %v1656
    %v2073 = vpack.c.b16 %v1661, %v1659
    %v2074 = vpack.c.b16 %v1662, %v1660
    %v2075 = vpack.c.b16 %v1665, %v1663
    %v2076 = vpack.c.b16 %v1666, %v1664
    %v2077 = vpack.c.b16 %v1669, %v1667
    %v2078 = vpack.c.b16 %v1670, %v1668
    %v2079 = vpack.c.b16 %v1673, %v1671
    %v2080 = vpack.c.b16 %v1674, %v1672
    %v2081 = vpack.c.b16 %v1677, %v1675
    %v2082 = vpack.c.b16 %v1678, %v1676
    %v2083 = vpack.c.b16 %v1681, %v1679
    %v2084 = vpack.c.b16 %v1682, %v1680
    %v2085 = vpack.c.b16 %v1685, %v1683
    %v2086 = vpack.c.b16 %v1686, %v1684
    %v2087 = vpack.c.b16 %v1689, %v1687
    %v2088 = vpack.c.b16 %v1690, %v1688
    %v2089 = vpack.c.b16 %v1693, %v1691
    %v2090 = vpack.c.b16 %v1694, %v1692
    %v2091 = vpack.c.b16 %v1697, %v1695
    %v2092 = vpack.c.b16 %v1698, %v1696
    %v2093 = vpack.c.b16 %v1701, %v1699
    %v2094 = vpack.c.b16 %v1702, %v1700
    %v2095 = vpack.c.b16 %v1705, %v1703
    %v2096 = vpack.c.b16 %v1706, %v1704
    %v2097 = vpack.c.b16 %v1709, %v1707
    %v2098 = vpack.c.b16 %v1710, %v1708
    %v2099 = vpack.c.b16 %v1713, %v1711
    %v2100 = vpack.c.b16 %v1714, %v1712
    %v2101 = vpack.c.b16 %v1717, %v1715
    %v2102 = vpack.c.b16 %v1718, %v1716
    %2487 = vmatpush.bf16.msra.mxu0 %v1733
    %2488 = vmatpush.bf16.msra.mxu0 %v1731
    %2489 = vmatpush.bf16.msra.mxu0 %v1729
    %2490 = vmatpush.bf16.msra.mxu0 %v1727
    %2491 = vmatpush.bf16.msra.mxu0 %v1725
    %2492 = vmatpush.bf16.msra.mxu0 %v1723
    %2493 = vmatpush.bf16.msra.mxu0 %v1721
    %2494 = vmatpush.bf16.msra.mxu0 %v1719
    %2495 = vmatmul.bf16.gmra.mxu0 %v519
    %v2496 = vpop.f32.mrf.mxu0
    %v2497 = vadd.f32 %v443, %v2496
    %v2498 = vpop.f32.mrf.mxu0
    %v2499 = vadd.f32 %v443, %v2498
    %2500 = vdwg.mxu0
    %2501 = vmatpush.bf16.msra.mxu0 %v1749
    %2502 = vmatpush.bf16.msra.mxu0 %v1747
    %2503 = vmatpush.bf16.msra.mxu0 %v1745
    %2504 = vmatpush.bf16.msra.mxu0 %v1743
    %2505 = vmatpush.bf16.msra.mxu0 %v1741
    %2506 = vmatpush.bf16.msra.mxu0 %v1739
    %2507 = vmatpush.bf16.msra.mxu0 %v1737
    %2508 = vmatpush.bf16.msra.mxu0 %v1735
    %2509 = vmatmul.bf16.gmra.mxu0 %v520
    %v2510 = vpop.f32.mrf.mxu0
    %v2511 = vadd.f32 %v2497, %v2510
    %v2512 = vpop.f32.mrf.mxu0
    %v2513 = vadd.f32 %v2499, %v2512
    %2514 = vdwg.mxu0
    %2515 = vmatpush.bf16.msra.mxu0 %v1765
    %2516 = vmatpush.bf16.msra.mxu0 %v1763
    %2517 = vmatpush.bf16.msra.mxu0 %v1761
    %2518 = vmatpush.bf16.msra.mxu0 %v1759
    %2519 = vmatpush.bf16.msra.mxu0 %v1757
    %2520 = vmatpush.bf16.msra.mxu0 %v1755
    %2521 = vmatpush.bf16.msra.mxu0 %v1753
    %2522 = vmatpush.bf16.msra.mxu0 %v1751
    %2523 = vmatmul.bf16.gmra.mxu0 %v521
    %v2524 = vpop.f32.mrf.mxu0
    %v2525 = vadd.f32 %v2511, %v2524
    %v2526 = vpop.f32.mrf.mxu0
    %v2527 = vadd.f32 %v2513, %v2526
    %2528 = vdwg.mxu0
    %2529 = vmatpush.bf16.msra.mxu0 %v1781
    %2530 = vmatpush.bf16.msra.mxu0 %v1779
    %2531 = vmatpush.bf16.msra.mxu0 %v1777
    %2532 = vmatpush.bf16.msra.mxu0 %v1775
    %2533 = vmatpush.bf16.msra.mxu0 %v1773
    %2534 = vmatpush.bf16.msra.mxu0 %v1771
    %2535 = vmatpush.bf16.msra.mxu0 %v1769
    %2536 = vmatpush.bf16.msra.mxu0 %v1767
    %2537 = vmatmul.bf16.gmra.mxu0 %v522
    %v2538 = vpop.f32.mrf.mxu0
    %v2539 = vadd.f32 %v2525, %v2538
    %v2540 = vpop.f32.mrf.mxu0
    %v2541 = vadd.f32 %v2527, %v2540
    %2542 = vdwg.mxu0
    %2543 = vmatpush.bf16.msra.mxu0 %v1797
    %2544 = vmatpush.bf16.msra.mxu0 %v1795
    %2545 = vmatpush.bf16.msra.mxu0 %v1793
    %2546 = vmatpush.bf16.msra.mxu0 %v1791
    %2547 = vmatpush.bf16.msra.mxu0 %v1789
    %2548 = vmatpush.bf16.msra.mxu0 %v1787
    %2549 = vmatpush.bf16.msra.mxu0 %v1785
    %2550 = vmatpush.bf16.msra.mxu0 %v1783
    %2551 = vmatmul.bf16.gmra.mxu0 %v523
    %v2552 = vpop.f32.mrf.mxu0
    %v2553 = vadd.f32 %v2539, %v2552
    %v2554 = vpop.f32.mrf.mxu0
    %v2555 = vadd.f32 %v2541, %v2554
    %2556 = vdwg.mxu0
    %2557 = vmatpush.bf16.msra.mxu0 %v1813
    %2558 = vmatpush.bf16.msra.mxu0 %v1811
    %2559 = vmatpush.bf16.msra.mxu0 %v1809
    %2560 = vmatpush.bf16.msra.mxu0 %v1807
    %2561 = vmatpush.bf16.msra.mxu0 %v1805
    %2562 = vmatpush.bf16.msra.mxu0 %v1803
    %2563 = vmatpush.bf16.msra.mxu0 %v1801
    %2564 = vmatpush.bf16.msra.mxu0 %v1799
    %2565 = vmatmul.bf16.gmra.mxu0 %v524
    %v2566 = vpop.f32.mrf.mxu0
    %v2567 = vadd.f32 %v2553, %v2566
    %v2568 = vpop.f32.mrf.mxu0
    %v2569 = vadd.f32 %v2555, %v2568
    %2570 = vdwg.mxu0
    %2571 = vmatpush.bf16.msra.mxu0 %v1829
    %2572 = vmatpush.bf16.msra.mxu0 %v1827
    %2573 = vmatpush.bf16.msra.mxu0 %v1825
    %2574 = vmatpush.bf16.msra.mxu0 %v1823
    %2575 = vmatpush.bf16.msra.mxu0 %v1821
    %2576 = vmatpush.bf16.msra.mxu0 %v1819
    %2577 = vmatpush.bf16.msra.mxu0 %v1817
    %2578 = vmatpush.bf16.msra.mxu0 %v1815
    %2579 = vmatmul.bf16.gmra.mxu0 %v525
    %v2580 = vpop.f32.mrf.mxu0
    %v2581 = vadd.f32 %v2567, %v2580
    %v2582 = vpop.f32.mrf.mxu0
    %v2583 = vadd.f32 %v2569, %v2582
    %2584 = vdwg.mxu0
    %2585 = vmatpush.bf16.msra.mxu0 %v1845
    %2586 = vmatpush.bf16.msra.mxu0 %v1843
    %2587 = vmatpush.bf16.msra.mxu0 %v1841
    %2588 = vmatpush.bf16.msra.mxu0 %v1839
    %2589 = vmatpush.bf16.msra.mxu0 %v1837
    %2590 = vmatpush.bf16.msra.mxu0 %v1835
    %2591 = vmatpush.bf16.msra.mxu0 %v1833
    %2592 = vmatpush.bf16.msra.mxu0 %v1831
    %2593 = vmatmul.bf16.gmra.mxu0 %v526
    %v2594 = vpop.f32.mrf.mxu0
    %v2595 = vadd.f32 %v2581, %v2594
    %v2596 = vpop.f32.mrf.mxu0
    %v2597 = vadd.f32 %v2583, %v2596
    %2598 = vdwg.mxu0
    %2599 = vmatpush.bf16.msra.mxu0 %v1861
    %2600 = vmatpush.bf16.msra.mxu0 %v1859
    %2601 = vmatpush.bf16.msra.mxu0 %v1857
    %2602 = vmatpush.bf16.msra.mxu0 %v1855
    %2603 = vmatpush.bf16.msra.mxu0 %v1853
    %2604 = vmatpush.bf16.msra.mxu0 %v1851
    %2605 = vmatpush.bf16.msra.mxu0 %v1849
    %2606 = vmatpush.bf16.msra.mxu0 %v1847
    %2607 = vmatmul.bf16.gmra.mxu0 %v527
    %v2608 = vpop.f32.mrf.mxu0
    %v2609 = vadd.f32 %v2595, %v2608
    %v2610 = vpop.f32.mrf.mxu0
    %v2611 = vadd.f32 %v2597, %v2610
    %2612 = vdwg.mxu0
    %2613 = vmatpush.bf16.msra.mxu0 %v1877
    %2614 = vmatpush.bf16.msra.mxu0 %v1875
    %2615 = vmatpush.bf16.msra.mxu0 %v1873
    %2616 = vmatpush.bf16.msra.mxu0 %v1871
    %2617 = vmatpush.bf16.msra.mxu0 %v1869
    %2618 = vmatpush.bf16.msra.mxu0 %v1867
    %2619 = vmatpush.bf16.msra.mxu0 %v1865
    %2620 = vmatpush.bf16.msra.mxu0 %v1863
    %2621 = vmatmul.bf16.gmra.mxu0 %v528
    %v2622 = vpop.f32.mrf.mxu0
    %v2623 = vadd.f32 %v2609, %v2622
    %v2624 = vpop.f32.mrf.mxu0
    %v2625 = vadd.f32 %v2611, %v2624
    %2626 = vdwg.mxu0
    %2627 = vmatpush.bf16.msra.mxu0 %v1893
    %2628 = vmatpush.bf16.msra.mxu0 %v1891
    %2629 = vmatpush.bf16.msra.mxu0 %v1889
    %2630 = vmatpush.bf16.msra.mxu0 %v1887
    %2631 = vmatpush.bf16.msra.mxu0 %v1885
    %2632 = vmatpush.bf16.msra.mxu0 %v1883
    %2633 = vmatpush.bf16.msra.mxu0 %v1881
    %2634 = vmatpush.bf16.msra.mxu0 %v1879
    %2635 = vmatmul.bf16.gmra.mxu0 %v529
    %v2636 = vpop.f32.mrf.mxu0
    %v2637 = vadd.f32 %v2623, %v2636
    %v2638 = vpop.f32.mrf.mxu0
    %v2639 = vadd.f32 %v2625, %v2638
    %2640 = vdwg.mxu0
    %2641 = vmatpush.bf16.msra.mxu0 %v1909
    %2642 = vmatpush.bf16.msra.mxu0 %v1907
    %2643 = vmatpush.bf16.msra.mxu0 %v1905
    %2644 = vmatpush.bf16.msra.mxu0 %v1903
    %2645 = vmatpush.bf16.msra.mxu0 %v1901
    %2646 = vmatpush.bf16.msra.mxu0 %v1899
    %2647 = vmatpush.bf16.msra.mxu0 %v1897
    %2648 = vmatpush.bf16.msra.mxu0 %v1895
    %2649 = vmatmul.bf16.gmra.mxu0 %v530
    %v2650 = vpop.f32.mrf.mxu0
    %v2651 = vadd.f32 %v2637, %v2650
    %v2652 = vpop.f32.mrf.mxu0
    %v2653 = vadd.f32 %v2639, %v2652
    %2654 = vdwg.mxu0
    %2655 = vmatpush.bf16.msra.mxu0 %v1925
    %2656 = vmatpush.bf16.msra.mxu0 %v1923
    %2657 = vmatpush.bf16.msra.mxu0 %v1921
    %2658 = vmatpush.bf16.msra.mxu0 %v1919
    %2659 = vmatpush.bf16.msra.mxu0 %v1917
    %2660 = vmatpush.bf16.msra.mxu0 %v1915
    %2661 = vmatpush.bf16.msra.mxu0 %v1913
    %2662 = vmatpush.bf16.msra.mxu0 %v1911
    %2663 = vmatmul.bf16.gmra.mxu0 %v531
    %v2664 = vpop.f32.mrf.mxu0
    %v2665 = vadd.f32 %v2651, %v2664
    %v2666 = vpop.f32.mrf.mxu0
    %v2667 = vadd.f32 %v2653, %v2666
    %2668 = vdwg.mxu0
    %2669 = vmatpush.bf16.msra.mxu0 %v1941
    %2670 = vmatpush.bf16.msra.mxu0 %v1939
    %2671 = vmatpush.bf16.msra.mxu0 %v1937
    %2672 = vmatpush.bf16.msra.mxu0 %v1935
    %2673 = vmatpush.bf16.msra.mxu0 %v1933
    %2674 = vmatpush.bf16.msra.mxu0 %v1931
    %2675 = vmatpush.bf16.msra.mxu0 %v1929
    %2676 = vmatpush.bf16.msra.mxu0 %v1927
    %2677 = vmatmul.bf16.gmra.mxu0 %v532
    %v2678 = vpop.f32.mrf.mxu0
    %v2679 = vadd.f32 %v2665, %v2678
    %v2680 = vpop.f32.mrf.mxu0
    %v2681 = vadd.f32 %v2667, %v2680
    %2682 = vdwg.mxu0
    %2683 = vmatpush.bf16.msra.mxu0 %v1957
    %2684 = vmatpush.bf16.msra.mxu0 %v1955
    %2685 = vmatpush.bf16.msra.mxu0 %v1953
    %2686 = vmatpush.bf16.msra.mxu0 %v1951
    %2687 = vmatpush.bf16.msra.mxu0 %v1949
    %2688 = vmatpush.bf16.msra.mxu0 %v1947
    %2689 = vmatpush.bf16.msra.mxu0 %v1945
    %2690 = vmatpush.bf16.msra.mxu0 %v1943
    %2691 = vmatmul.bf16.gmra.mxu0 %v533
    %v2692 = vpop.f32.mrf.mxu0
    %v2693 = vadd.f32 %v2679, %v2692
    %v2694 = vpop.f32.mrf.mxu0
    %v2695 = vadd.f32 %v2681, %v2694
    %2696 = vdwg.mxu0
    %2697 = vmatpush.bf16.msra.mxu0 %v1973
    %2698 = vmatpush.bf16.msra.mxu0 %v1971
    %2699 = vmatpush.bf16.msra.mxu0 %v1969
    %2700 = vmatpush.bf16.msra.mxu0 %v1967
    %2701 = vmatpush.bf16.msra.mxu0 %v1965
    %2702 = vmatpush.bf16.msra.mxu0 %v1963
    %2703 = vmatpush.bf16.msra.mxu0 %v1961
    %2704 = vmatpush.bf16.msra.mxu0 %v1959
    %2705 = vmatmul.bf16.gmra.mxu0 %v534
    %v2706 = vpop.f32.mrf.mxu0
    %v2707 = vadd.f32 %v2693, %v2706
    %v2708 = vpop.f32.mrf.mxu0
    %v2709 = vadd.f32 %v2695, %v2708
    %2710 = vdwg.mxu0
    %2711 = vmatpush.bf16.msra.mxu0 %v1989
    %2712 = vmatpush.bf16.msra.mxu0 %v1987
    %2713 = vmatpush.bf16.msra.mxu0 %v1985
    %2714 = vmatpush.bf16.msra.mxu0 %v1983
    %2715 = vmatpush.bf16.msra.mxu0 %v1981
    %2716 = vmatpush.bf16.msra.mxu0 %v1979
    %2717 = vmatpush.bf16.msra.mxu0 %v1977
    %2718 = vmatpush.bf16.msra.mxu0 %v1975
    %2719 = vmatmul.bf16.gmra.mxu0 %v535
    %v2720 = vpop.f32.mrf.mxu0
    %v2721 = vadd.f32 %v2707, %v2720
    %v2722 = vpop.f32.mrf.mxu0
    %v2723 = vadd.f32 %v2709, %v2722
    %2724 = vdwg.mxu0
    %2725 = vmatpush.bf16.msra.mxu0 %v2005
    %2726 = vmatpush.bf16.msra.mxu0 %v2003
    %2727 = vmatpush.bf16.msra.mxu0 %v2001
    %2728 = vmatpush.bf16.msra.mxu0 %v1999
    %2729 = vmatpush.bf16.msra.mxu0 %v1997
    %2730 = vmatpush.bf16.msra.mxu0 %v1995
    %2731 = vmatpush.bf16.msra.mxu0 %v1993
    %2732 = vmatpush.bf16.msra.mxu0 %v1991
    %2733 = vmatmul.bf16.gmra.mxu0 %v536
    %v2734 = vpop.f32.mrf.mxu0
    %v2735 = vadd.f32 %v2721, %v2734
    %v2736 = vpop.f32.mrf.mxu0
    %v2737 = vadd.f32 %v2723, %v2736
    %2738 = vdwg.mxu0
    %2739 = vmatpush.bf16.msra.mxu0 %v2021
    %2740 = vmatpush.bf16.msra.mxu0 %v2019
    %2741 = vmatpush.bf16.msra.mxu0 %v2017
    %2742 = vmatpush.bf16.msra.mxu0 %v2015
    %2743 = vmatpush.bf16.msra.mxu0 %v2013
    %2744 = vmatpush.bf16.msra.mxu0 %v2011
    %2745 = vmatpush.bf16.msra.mxu0 %v2009
    %2746 = vmatpush.bf16.msra.mxu0 %v2007
    %2747 = vmatmul.bf16.gmra.mxu0 %v537
    %v2748 = vpop.f32.mrf.mxu0
    %v2749 = vadd.f32 %v2735, %v2748
    %v2750 = vpop.f32.mrf.mxu0
    %v2751 = vadd.f32 %v2737, %v2750
    %2752 = vdwg.mxu0
    %2753 = vmatpush.bf16.msra.mxu0 %v2037
    %2754 = vmatpush.bf16.msra.mxu0 %v2035
    %2755 = vmatpush.bf16.msra.mxu0 %v2033
    %2756 = vmatpush.bf16.msra.mxu0 %v2031
    %2757 = vmatpush.bf16.msra.mxu0 %v2029
    %2758 = vmatpush.bf16.msra.mxu0 %v2027
    %2759 = vmatpush.bf16.msra.mxu0 %v2025
    %2760 = vmatpush.bf16.msra.mxu0 %v2023
    %2761 = vmatmul.bf16.gmra.mxu0 %v538
    %v2762 = vpop.f32.mrf.mxu0
    %v2763 = vadd.f32 %v2749, %v2762
    %v2764 = vpop.f32.mrf.mxu0
    %v2765 = vadd.f32 %v2751, %v2764
    %2766 = vdwg.mxu0
    %2767 = vmatpush.bf16.msra.mxu0 %v2053
    %2768 = vmatpush.bf16.msra.mxu0 %v2051
    %2769 = vmatpush.bf16.msra.mxu0 %v2049
    %2770 = vmatpush.bf16.msra.mxu0 %v2047
    %2771 = vmatpush.bf16.msra.mxu0 %v2045
    %2772 = vmatpush.bf16.msra.mxu0 %v2043
    %2773 = vmatpush.bf16.msra.mxu0 %v2041
    %2774 = vmatpush.bf16.msra.mxu0 %v2039
    %2775 = vmatmul.bf16.gmra.mxu0 %v539
    %v2776 = vpop.f32.mrf.mxu0
    %v2777 = vadd.f32 %v2763, %v2776
    %v2778 = vpop.f32.mrf.mxu0
    %v2779 = vadd.f32 %v2765, %v2778
    %2780 = vdwg.mxu0
    %2781 = vmatpush.bf16.msra.mxu0 %v2069
    %2782 = vmatpush.bf16.msra.mxu0 %v2067
    %2783 = vmatpush.bf16.msra.mxu0 %v2065
    %2784 = vmatpush.bf16.msra.mxu0 %v2063
    %2785 = vmatpush.bf16.msra.mxu0 %v2061
    %2786 = vmatpush.bf16.msra.mxu0 %v2059
    %2787 = vmatpush.bf16.msra.mxu0 %v2057
    %2788 = vmatpush.bf16.msra.mxu0 %v2055
    %2789 = vmatmul.bf16.gmra.mxu0 %v540
    %v2790 = vpop.f32.mrf.mxu0
    %v2791 = vadd.f32 %v2777, %v2790
    %v2792 = vpop.f32.mrf.mxu0
    %v2793 = vadd.f32 %v2779, %v2792
    %2794 = vdwg.mxu0
    %2795 = vmatpush.bf16.msra.mxu0 %v2085
    %2796 = vmatpush.bf16.msra.mxu0 %v2083
    %2797 = vmatpush.bf16.msra.mxu0 %v2081
    %2798 = vmatpush.bf16.msra.mxu0 %v2079
    %2799 = vmatpush.bf16.msra.mxu0 %v2077
    %2800 = vmatpush.bf16.msra.mxu0 %v2075
    %2801 = vmatpush.bf16.msra.mxu0 %v2073
    %2802 = vmatpush.bf16.msra.mxu0 %v2071
    %2803 = vmatmul.bf16.gmra.mxu0 %v541
    %v2804 = vpop.f32.mrf.mxu0
    %v2805 = vadd.f32 %v2791, %v2804
    %v2806 = vpop.f32.mrf.mxu0
    %v2807 = vadd.f32 %v2793, %v2806
    %2808 = vdwg.mxu0
    %2809 = vmatpush.bf16.msra.mxu0 %v2101
    %2810 = vmatpush.bf16.msra.mxu0 %v2099
    %2811 = vmatpush.bf16.msra.mxu0 %v2097
    %2812 = vmatpush.bf16.msra.mxu0 %v2095
    %2813 = vmatpush.bf16.msra.mxu0 %v2093
    %2814 = vmatpush.bf16.msra.mxu0 %v2091
    %2815 = vmatpush.bf16.msra.mxu0 %v2089
    %2816 = vmatpush.bf16.msra.mxu0 %v2087
    %2817 = vmatmul.bf16.gmra.mxu0 %v542
    %v2818 = vpop.f32.mrf.mxu0
    %v2819 = vadd.f32 %v2805, %v2818
    %v2820 = vpop.f32.mrf.mxu0
    %v2821 = vadd.f32 %v2807, %v2820
    %2822 = vdwg.mxu0
    %2823 = vmatpush.bf16.msra.mxu0 %v1734
    %2824 = vmatpush.bf16.msra.mxu0 %v1732
    %2825 = vmatpush.bf16.msra.mxu0 %v1730
    %2826 = vmatpush.bf16.msra.mxu0 %v1728
    %2827 = vmatpush.bf16.msra.mxu0 %v1726
    %2828 = vmatpush.bf16.msra.mxu0 %v1724
    %2829 = vmatpush.bf16.msra.mxu0 %v1722
    %2830 = vmatpush.bf16.msra.mxu0 %v1720
    %2831 = vmatmul.bf16.gmra.mxu0 %v519
    %v2832 = vpop.f32.mrf.mxu0
    %v2833 = vadd.f32 %v444, %v2832
    %v2834 = vpop.f32.mrf.mxu0
    %v2835 = vadd.f32 %v444, %v2834
    %2836 = vdwg.mxu0
    %2837 = vmatpush.bf16.msra.mxu0 %v1750
    %2838 = vmatpush.bf16.msra.mxu0 %v1748
    %2839 = vmatpush.bf16.msra.mxu0 %v1746
    %2840 = vmatpush.bf16.msra.mxu0 %v1744
    %2841 = vmatpush.bf16.msra.mxu0 %v1742
    %2842 = vmatpush.bf16.msra.mxu0 %v1740
    %2843 = vmatpush.bf16.msra.mxu0 %v1738
    %2844 = vmatpush.bf16.msra.mxu0 %v1736
    %2845 = vmatmul.bf16.gmra.mxu0 %v520
    %v2846 = vpop.f32.mrf.mxu0
    %v2847 = vadd.f32 %v2833, %v2846
    %v2848 = vpop.f32.mrf.mxu0
    %v2849 = vadd.f32 %v2835, %v2848
    %2850 = vdwg.mxu0
    %2851 = vmatpush.bf16.msra.mxu0 %v1766
    %2852 = vmatpush.bf16.msra.mxu0 %v1764
    %2853 = vmatpush.bf16.msra.mxu0 %v1762
    %2854 = vmatpush.bf16.msra.mxu0 %v1760
    %2855 = vmatpush.bf16.msra.mxu0 %v1758
    %2856 = vmatpush.bf16.msra.mxu0 %v1756
    %2857 = vmatpush.bf16.msra.mxu0 %v1754
    %2858 = vmatpush.bf16.msra.mxu0 %v1752
    %2859 = vmatmul.bf16.gmra.mxu0 %v521
    %v2860 = vpop.f32.mrf.mxu0
    %v2861 = vadd.f32 %v2847, %v2860
    %v2862 = vpop.f32.mrf.mxu0
    %v2863 = vadd.f32 %v2849, %v2862
    %2864 = vdwg.mxu0
    %2865 = vmatpush.bf16.msra.mxu0 %v1782
    %2866 = vmatpush.bf16.msra.mxu0 %v1780
    %2867 = vmatpush.bf16.msra.mxu0 %v1778
    %2868 = vmatpush.bf16.msra.mxu0 %v1776
    %2869 = vmatpush.bf16.msra.mxu0 %v1774
    %2870 = vmatpush.bf16.msra.mxu0 %v1772
    %2871 = vmatpush.bf16.msra.mxu0 %v1770
    %2872 = vmatpush.bf16.msra.mxu0 %v1768
    %2873 = vmatmul.bf16.gmra.mxu0 %v522
    %v2874 = vpop.f32.mrf.mxu0
    %v2875 = vadd.f32 %v2861, %v2874
    %v2876 = vpop.f32.mrf.mxu0
    %v2877 = vadd.f32 %v2863, %v2876
    %2878 = vdwg.mxu0
    %2879 = vmatpush.bf16.msra.mxu0 %v1798
    %2880 = vmatpush.bf16.msra.mxu0 %v1796
    %2881 = vmatpush.bf16.msra.mxu0 %v1794
    %2882 = vmatpush.bf16.msra.mxu0 %v1792
    %2883 = vmatpush.bf16.msra.mxu0 %v1790
    %2884 = vmatpush.bf16.msra.mxu0 %v1788
    %2885 = vmatpush.bf16.msra.mxu0 %v1786
    %2886 = vmatpush.bf16.msra.mxu0 %v1784
    %2887 = vmatmul.bf16.gmra.mxu0 %v523
    %v2888 = vpop.f32.mrf.mxu0
    %v2889 = vadd.f32 %v2875, %v2888
    %v2890 = vpop.f32.mrf.mxu0
    %v2891 = vadd.f32 %v2877, %v2890
    %2892 = vdwg.mxu0
    %2893 = vmatpush.bf16.msra.mxu0 %v1814
    %2894 = vmatpush.bf16.msra.mxu0 %v1812
    %2895 = vmatpush.bf16.msra.mxu0 %v1810
    %2896 = vmatpush.bf16.msra.mxu0 %v1808
    %2897 = vmatpush.bf16.msra.mxu0 %v1806
    %2898 = vmatpush.bf16.msra.mxu0 %v1804
    %2899 = vmatpush.bf16.msra.mxu0 %v1802
    %2900 = vmatpush.bf16.msra.mxu0 %v1800
    %2901 = vmatmul.bf16.gmra.mxu0 %v524
    %v2902 = vpop.f32.mrf.mxu0
    %v2903 = vadd.f32 %v2889, %v2902
    %v2904 = vpop.f32.mrf.mxu0
    %v2905 = vadd.f32 %v2891, %v2904
    %2906 = vdwg.mxu0
    %2907 = vmatpush.bf16.msra.mxu0 %v1830
    %2908 = vmatpush.bf16.msra.mxu0 %v1828
    %2909 = vmatpush.bf16.msra.mxu0 %v1826
    %2910 = vmatpush.bf16.msra.mxu0 %v1824
    %2911 = vmatpush.bf16.msra.mxu0 %v1822
    %2912 = vmatpush.bf16.msra.mxu0 %v1820
    %2913 = vmatpush.bf16.msra.mxu0 %v1818
    %2914 = vmatpush.bf16.msra.mxu0 %v1816
    %2915 = vmatmul.bf16.gmra.mxu0 %v525
    %v2916 = vpop.f32.mrf.mxu0
    %v2917 = vadd.f32 %v2903, %v2916
    %v2918 = vpop.f32.mrf.mxu0
    %v2919 = vadd.f32 %v2905, %v2918
    %2920 = vdwg.mxu0
    %2921 = vmatpush.bf16.msra.mxu0 %v1846
    %2922 = vmatpush.bf16.msra.mxu0 %v1844
    %2923 = vmatpush.bf16.msra.mxu0 %v1842
    %2924 = vmatpush.bf16.msra.mxu0 %v1840
    %2925 = vmatpush.bf16.msra.mxu0 %v1838
    %2926 = vmatpush.bf16.msra.mxu0 %v1836
    %2927 = vmatpush.bf16.msra.mxu0 %v1834
    %2928 = vmatpush.bf16.msra.mxu0 %v1832
    %2929 = vmatmul.bf16.gmra.mxu0 %v526
    %v2930 = vpop.f32.mrf.mxu0
    %v2931 = vadd.f32 %v2917, %v2930
    %v2932 = vpop.f32.mrf.mxu0
    %v2933 = vadd.f32 %v2919, %v2932
    %2934 = vdwg.mxu0
    %2935 = vmatpush.bf16.msra.mxu0 %v1862
    %2936 = vmatpush.bf16.msra.mxu0 %v1860
    %2937 = vmatpush.bf16.msra.mxu0 %v1858
    %2938 = vmatpush.bf16.msra.mxu0 %v1856
    %2939 = vmatpush.bf16.msra.mxu0 %v1854
    %2940 = vmatpush.bf16.msra.mxu0 %v1852
    %2941 = vmatpush.bf16.msra.mxu0 %v1850
    %2942 = vmatpush.bf16.msra.mxu0 %v1848
    %2943 = vmatmul.bf16.gmra.mxu0 %v527
    %v2944 = vpop.f32.mrf.mxu0
    %v2945 = vadd.f32 %v2931, %v2944
    %v2946 = vpop.f32.mrf.mxu0
    %v2947 = vadd.f32 %v2933, %v2946
    %2948 = vdwg.mxu0
    %2949 = vmatpush.bf16.msra.mxu0 %v1878
    %2950 = vmatpush.bf16.msra.mxu0 %v1876
    %2951 = vmatpush.bf16.msra.mxu0 %v1874
    %2952 = vmatpush.bf16.msra.mxu0 %v1872
    %2953 = vmatpush.bf16.msra.mxu0 %v1870
    %2954 = vmatpush.bf16.msra.mxu0 %v1868
    %2955 = vmatpush.bf16.msra.mxu0 %v1866
    %2956 = vmatpush.bf16.msra.mxu0 %v1864
    %2957 = vmatmul.bf16.gmra.mxu0 %v528
    %v2958 = vpop.f32.mrf.mxu0
    %v2959 = vadd.f32 %v2945, %v2958
    %v2960 = vpop.f32.mrf.mxu0
    %v2961 = vadd.f32 %v2947, %v2960
    %2962 = vdwg.mxu0
    %2963 = vmatpush.bf16.msra.mxu0 %v1894
    %2964 = vmatpush.bf16.msra.mxu0 %v1892
    %2965 = vmatpush.bf16.msra.mxu0 %v1890
    %2966 = vmatpush.bf16.msra.mxu0 %v1888
    %2967 = vmatpush.bf16.msra.mxu0 %v1886
    %2968 = vmatpush.bf16.msra.mxu0 %v1884
    %2969 = vmatpush.bf16.msra.mxu0 %v1882
    %2970 = vmatpush.bf16.msra.mxu0 %v1880
    %2971 = vmatmul.bf16.gmra.mxu0 %v529
    %v2972 = vpop.f32.mrf.mxu0
    %v2973 = vadd.f32 %v2959, %v2972
    %v2974 = vpop.f32.mrf.mxu0
    %v2975 = vadd.f32 %v2961, %v2974
    %2976 = vdwg.mxu0
    %2977 = vmatpush.bf16.msra.mxu0 %v1910
    %2978 = vmatpush.bf16.msra.mxu0 %v1908
    %2979 = vmatpush.bf16.msra.mxu0 %v1906
    %2980 = vmatpush.bf16.msra.mxu0 %v1904
    %2981 = vmatpush.bf16.msra.mxu0 %v1902
    %2982 = vmatpush.bf16.msra.mxu0 %v1900
    %2983 = vmatpush.bf16.msra.mxu0 %v1898
    %2984 = vmatpush.bf16.msra.mxu0 %v1896
    %2985 = vmatmul.bf16.gmra.mxu0 %v530
    %v2986 = vpop.f32.mrf.mxu0
    %v2987 = vadd.f32 %v2973, %v2986
    %v2988 = vpop.f32.mrf.mxu0
    %v2989 = vadd.f32 %v2975, %v2988
    %2990 = vdwg.mxu0
    %2991 = vmatpush.bf16.msra.mxu0 %v1926
    %2992 = vmatpush.bf16.msra.mxu0 %v1924
    %2993 = vmatpush.bf16.msra.mxu0 %v1922
    %2994 = vmatpush.bf16.msra.mxu0 %v1920
    %2995 = vmatpush.bf16.msra.mxu0 %v1918
    %2996 = vmatpush.bf16.msra.mxu0 %v1916
    %2997 = vmatpush.bf16.msra.mxu0 %v1914
    %2998 = vmatpush.bf16.msra.mxu0 %v1912
    %2999 = vmatmul.bf16.gmra.mxu0 %v531
    %v3000 = vpop.f32.mrf.mxu0
    %v3001 = vadd.f32 %v2987, %v3000
    %v3002 = vpop.f32.mrf.mxu0
    %v3003 = vadd.f32 %v2989, %v3002
    %3004 = vdwg.mxu0
    %3005 = vmatpush.bf16.msra.mxu0 %v1942
    %3006 = vmatpush.bf16.msra.mxu0 %v1940
    %3007 = vmatpush.bf16.msra.mxu0 %v1938
    %3008 = vmatpush.bf16.msra.mxu0 %v1936
    %3009 = vmatpush.bf16.msra.mxu0 %v1934
    %3010 = vmatpush.bf16.msra.mxu0 %v1932
    %3011 = vmatpush.bf16.msra.mxu0 %v1930
    %3012 = vmatpush.bf16.msra.mxu0 %v1928
    %3013 = vmatmul.bf16.gmra.mxu0 %v532
    %v3014 = vpop.f32.mrf.mxu0
    %v3015 = vadd.f32 %v3001, %v3014
    %v3016 = vpop.f32.mrf.mxu0
    %v3017 = vadd.f32 %v3003, %v3016
    %3018 = vdwg.mxu0
    %3019 = vmatpush.bf16.msra.mxu0 %v1958
    %3020 = vmatpush.bf16.msra.mxu0 %v1956
    %3021 = vmatpush.bf16.msra.mxu0 %v1954
    %3022 = vmatpush.bf16.msra.mxu0 %v1952
    %3023 = vmatpush.bf16.msra.mxu0 %v1950
    %3024 = vmatpush.bf16.msra.mxu0 %v1948
    %3025 = vmatpush.bf16.msra.mxu0 %v1946
    %3026 = vmatpush.bf16.msra.mxu0 %v1944
    %3027 = vmatmul.bf16.gmra.mxu0 %v533
    %v3028 = vpop.f32.mrf.mxu0
    %v3029 = vadd.f32 %v3015, %v3028
    %v3030 = vpop.f32.mrf.mxu0
    %v3031 = vadd.f32 %v3017, %v3030
    %3032 = vdwg.mxu0
    %3033 = vmatpush.bf16.msra.mxu0 %v1974
    %3034 = vmatpush.bf16.msra.mxu0 %v1972
    %3035 = vmatpush.bf16.msra.mxu0 %v1970
    %3036 = vmatpush.bf16.msra.mxu0 %v1968
    %3037 = vmatpush.bf16.msra.mxu0 %v1966
    %3038 = vmatpush.bf16.msra.mxu0 %v1964
    %3039 = vmatpush.bf16.msra.mxu0 %v1962
    %3040 = vmatpush.bf16.msra.mxu0 %v1960
    %3041 = vmatmul.bf16.gmra.mxu0 %v534
    %v3042 = vpop.f32.mrf.mxu0
    %v3043 = vadd.f32 %v3029, %v3042
    %v3044 = vpop.f32.mrf.mxu0
    %v3045 = vadd.f32 %v3031, %v3044
    %3046 = vdwg.mxu0
    %3047 = vmatpush.bf16.msra.mxu0 %v1990
    %3048 = vmatpush.bf16.msra.mxu0 %v1988
    %3049 = vmatpush.bf16.msra.mxu0 %v1986
    %3050 = vmatpush.bf16.msra.mxu0 %v1984
    %3051 = vmatpush.bf16.msra.mxu0 %v1982
    %3052 = vmatpush.bf16.msra.mxu0 %v1980
    %3053 = vmatpush.bf16.msra.mxu0 %v1978
    %3054 = vmatpush.bf16.msra.mxu0 %v1976
    %3055 = vmatmul.bf16.gmra.mxu0 %v535
    %v3056 = vpop.f32.mrf.mxu0
    %v3057 = vadd.f32 %v3043, %v3056
    %v3058 = vpop.f32.mrf.mxu0
    %v3059 = vadd.f32 %v3045, %v3058
    %3060 = vdwg.mxu0
    %3061 = vmatpush.bf16.msra.mxu0 %v2006
    %3062 = vmatpush.bf16.msra.mxu0 %v2004
    %3063 = vmatpush.bf16.msra.mxu0 %v2002
    %3064 = vmatpush.bf16.msra.mxu0 %v2000
    %3065 = vmatpush.bf16.msra.mxu0 %v1998
    %3066 = vmatpush.bf16.msra.mxu0 %v1996
    %3067 = vmatpush.bf16.msra.mxu0 %v1994
    %3068 = vmatpush.bf16.msra.mxu0 %v1992
    %3069 = vmatmul.bf16.gmra.mxu0 %v536
    %v3070 = vpop.f32.mrf.mxu0
    %v3071 = vadd.f32 %v3057, %v3070
    %v3072 = vpop.f32.mrf.mxu0
    %v3073 = vadd.f32 %v3059, %v3072
    %3074 = vdwg.mxu0
    %3075 = vmatpush.bf16.msra.mxu0 %v2022
    %3076 = vmatpush.bf16.msra.mxu0 %v2020
    %3077 = vmatpush.bf16.msra.mxu0 %v2018
    %3078 = vmatpush.bf16.msra.mxu0 %v2016
    %3079 = vmatpush.bf16.msra.mxu0 %v2014
    %3080 = vmatpush.bf16.msra.mxu0 %v2012
    %3081 = vmatpush.bf16.msra.mxu0 %v2010
    %3082 = vmatpush.bf16.msra.mxu0 %v2008
    %3083 = vmatmul.bf16.gmra.mxu0 %v537
    %v3084 = vpop.f32.mrf.mxu0
    %v3085 = vadd.f32 %v3071, %v3084
    %v3086 = vpop.f32.mrf.mxu0
    %v3087 = vadd.f32 %v3073, %v3086
    %3088 = vdwg.mxu0
    %3089 = vmatpush.bf16.msra.mxu0 %v2038
    %3090 = vmatpush.bf16.msra.mxu0 %v2036
    %3091 = vmatpush.bf16.msra.mxu0 %v2034
    %3092 = vmatpush.bf16.msra.mxu0 %v2032
    %3093 = vmatpush.bf16.msra.mxu0 %v2030
    %3094 = vmatpush.bf16.msra.mxu0 %v2028
    %3095 = vmatpush.bf16.msra.mxu0 %v2026
    %3096 = vmatpush.bf16.msra.mxu0 %v2024
    %3097 = vmatmul.bf16.gmra.mxu0 %v538
    %v3098 = vpop.f32.mrf.mxu0
    %v3099 = vadd.f32 %v3085, %v3098
    %v3100 = vpop.f32.mrf.mxu0
    %v3101 = vadd.f32 %v3087, %v3100
    %3102 = vdwg.mxu0
    %3103 = vmatpush.bf16.msra.mxu0 %v2054
    %3104 = vmatpush.bf16.msra.mxu0 %v2052
    %3105 = vmatpush.bf16.msra.mxu0 %v2050
    %3106 = vmatpush.bf16.msra.mxu0 %v2048
    %3107 = vmatpush.bf16.msra.mxu0 %v2046
    %3108 = vmatpush.bf16.msra.mxu0 %v2044
    %3109 = vmatpush.bf16.msra.mxu0 %v2042
    %3110 = vmatpush.bf16.msra.mxu0 %v2040
    %3111 = vmatmul.bf16.gmra.mxu0 %v539
    %v3112 = vpop.f32.mrf.mxu0
    %v3113 = vadd.f32 %v3099, %v3112
    %v3114 = vpop.f32.mrf.mxu0
    %v3115 = vadd.f32 %v3101, %v3114
    %3116 = vdwg.mxu0
    %3117 = vmatpush.bf16.msra.mxu0 %v2070
    %3118 = vmatpush.bf16.msra.mxu0 %v2068
    %3119 = vmatpush.bf16.msra.mxu0 %v2066
    %3120 = vmatpush.bf16.msra.mxu0 %v2064
    %3121 = vmatpush.bf16.msra.mxu0 %v2062
    %3122 = vmatpush.bf16.msra.mxu0 %v2060
    %3123 = vmatpush.bf16.msra.mxu0 %v2058
    %3124 = vmatpush.bf16.msra.mxu0 %v2056
    %3125 = vmatmul.bf16.gmra.mxu0 %v540
    %v3126 = vpop.f32.mrf.mxu0
    %v3127 = vadd.f32 %v3113, %v3126
    %v3128 = vpop.f32.mrf.mxu0
    %v3129 = vadd.f32 %v3115, %v3128
    %3130 = vdwg.mxu0
    %3131 = vmatpush.bf16.msra.mxu0 %v2086
    %3132 = vmatpush.bf16.msra.mxu0 %v2084
    %3133 = vmatpush.bf16.msra.mxu0 %v2082
    %3134 = vmatpush.bf16.msra.mxu0 %v2080
    %3135 = vmatpush.bf16.msra.mxu0 %v2078
    %3136 = vmatpush.bf16.msra.mxu0 %v2076
    %3137 = vmatpush.bf16.msra.mxu0 %v2074
    %3138 = vmatpush.bf16.msra.mxu0 %v2072
    %3139 = vmatmul.bf16.gmra.mxu0 %v541
    %v3140 = vpop.f32.mrf.mxu0
    %v3141 = vadd.f32 %v3127, %v3140
    %v3142 = vpop.f32.mrf.mxu0
    %v3143 = vadd.f32 %v3129, %v3142
    %3144 = vdwg.mxu0
    %3145 = vmatpush.bf16.msra.mxu0 %v2102
    %3146 = vmatpush.bf16.msra.mxu0 %v2100
    %3147 = vmatpush.bf16.msra.mxu0 %v2098
    %3148 = vmatpush.bf16.msra.mxu0 %v2096
    %3149 = vmatpush.bf16.msra.mxu0 %v2094
    %3150 = vmatpush.bf16.msra.mxu0 %v2092
    %3151 = vmatpush.bf16.msra.mxu0 %v2090
    %3152 = vmatpush.bf16.msra.mxu0 %v2088
    %3153 = vmatmul.bf16.gmra.mxu0 %v542
    %v3154 = vpop.f32.mrf.mxu0
    %v3155 = vadd.f32 %v3141, %v3154
    %v3156 = vpop.f32.mrf.mxu0
    %v3157 = vadd.f32 %v3143, %v3156
    %3158 = vdwg.mxu0
    %v3159 = vmax.f32 %v2819, 0.0
    %v3160 = vmax.f32 %v3155, 0.0
    %v3161 = vmax.f32 %v2821, 0.0
    %v3162 = vmax.f32 %v3157, 0.0
    %v3163 = vpack.c.bf16 %v3161, %v3159
    %v3164 = vpack.c.bf16 %v3162, %v3160
    %v3165 = vld [vmem:[%s3] sm:$0xff]
    %v3166 = vld [vmem:[%s3 + $0x8] sm:$0xff]
    %v3167 = vld [vmem:[%s3 + $0x10] sm:$0xff]
    %v3168 = vld [vmem:[%s3 + $0x18] sm:$0xff]
    %v3169 = vld [vmem:[%s3 + $0x20] sm:$0xff]
    %v3170 = vld [vmem:[%s3 + $0x28] sm:$0xff]
    %v3171 = vld [vmem:[%s3 + $0x30] sm:$0xff]
    %v3172 = vld [vmem:[%s3 + $0x38] sm:$0xff]
    %v3173 = vld [vmem:[%s3 + $0x40] sm:$0xff]
    %v3174 = vld [vmem:[%s3 + $0x48] sm:$0xff]
    %v3175 = vld [vmem:[%s3 + $0x50] sm:$0xff]
    %v3176 = vld [vmem:[%s3 + $0x58] sm:$0xff]
    %v3177 = vld [vmem:[%s3 + $0x60] sm:$0xff]
    %v3178 = vld [vmem:[%s3 + $0x68] sm:$0xff]
    %v3179 = vld [vmem:[%s3 + $0x70] sm:$0xff]
    %v3180 = vld [vmem:[%s3 + $0x78] sm:$0xff]
    %v3181 = vld [vmem:[%s3 + $0x80] sm:$0xff]
    %v3182 = vld [vmem:[%s3 + $0x88] sm:$0xff]
    %v3183 = vld [vmem:[%s3 + $0x90] sm:$0xff]
    %v3184 = vld [vmem:[%s3 + $0x98] sm:$0xff]
    %v3185 = vld [vmem:[%s3 + $0xa0] sm:$0xff]
    %v3186 = vld [vmem:[%s3 + $0xa8] sm:$0xff]
    %v3187 = vld [vmem:[%s3 + $0xb0] sm:$0xff]
    %v3188 = vld [vmem:[%s3 + $0xb8] sm:$0xff]
    %v3189 = vld [vmem:[%s3 + $0xc0] sm:$0xff]
    %v3190 = vld [vmem:[%s3 + $0xc8] sm:$0xff]
    %v3191 = vld [vmem:[%s3 + $0xd0] sm:$0xff]
    %v3192 = vld [vmem:[%s3 + $0xd8] sm:$0xff]
    %v3193 = vld [vmem:[%s3 + $0xe0] sm:$0xff]
    %v3194 = vld [vmem:[%s3 + $0xe8] sm:$0xff]
    %v3195 = vld [vmem:[%s3 + $0xf0] sm:$0xff]
    %v3196 = vld [vmem:[%s3 + $0xf8] sm:$0xff]
    %v3197 = vld [vmem:[%s4] sm:$0x3]
    %v3199 = vperm.slane %v3197, 0
    %v3200 = vperm.slane %v3197, 1
    %v3235 = vunpack.c.l.b16 %v3165
    %v3236 = vunpack.c.h.b16 %v3165
    %v3237 = vunpack.c.l.b16 %v3166
    %v3238 = vunpack.c.h.b16 %v3166
    %v3239 = vunpack.c.l.b16 %v3167
    %v3240 = vunpack.c.h.b16 %v3167
    %v3241 = vunpack.c.l.b16 %v3168
    %v3242 = vunpack.c.h.b16 %v3168
    %v3243 = vunpack.c.l.b16 %v3169
    %v3244 = vunpack.c.h.b16 %v3169
    %v3245 = vunpack.c.l.b16 %v3170
    %v3246 = vunpack.c.h.b16 %v3170
    %v3247 = vunpack.c.l.b16 %v3171
    %v3248 = vunpack.c.h.b16 %v3171
    %v3249 = vunpack.c.l.b16 %v3172
    %v3250 = vunpack.c.h.b16 %v3172
    %v3251 = vunpack.c.l.b16 %v3173
    %v3252 = vunpack.c.h.b16 %v3173
    %v3253 = vunpack.c.l.b16 %v3174
    %v3254 = vunpack.c.h.b16 %v3174
    %v3255 = vunpack.c.l.b16 %v3175
    %v3256 = vunpack.c.h.b16 %v3175
    %v3257 = vunpack.c.l.b16 %v3176
    %v3258 = vunpack.c.h.b16 %v3176
    %v3259 = vunpack.c.l.b16 %v3177
    %v3260 = vunpack.c.h.b16 %v3177
    %v3261 = vunpack.c.l.b16 %v3178
    %v3262 = vunpack.c.h.b16 %v3178
    %v3263 = vunpack.c.l.b16 %v3179
    %v3264 = vunpack.c.h.b16 %v3179
    %v3265 = vunpack.c.l.b16 %v3180
    %v3266 = vunpack.c.h.b16 %v3180
    %v3267 = vunpack.c.l.b16 %v3181
    %v3268 = vunpack.c.h.b16 %v3181
    %v3269 = vunpack.c.l.b16 %v3182
    %v3270 = vunpack.c.h.b16 %v3182
    %v3271 = vunpack.c.l.b16 %v3183
    %v3272 = vunpack.c.h.b16 %v3183
    %v3273 = vunpack.c.l.b16 %v3184
    %v3274 = vunpack.c.h.b16 %v3184
    %v3275 = vunpack.c.l.b16 %v3185
    %v3276 = vunpack.c.h.b16 %v3185
    %v3277 = vunpack.c.l.b16 %v3186
    %v3278 = vunpack.c.h.b16 %v3186
    %v3279 = vunpack.c.l.b16 %v3187
    %v3280 = vunpack.c.h.b16 %v3187
    %v3281 = vunpack.c.l.b16 %v3188
    %v3282 = vunpack.c.h.b16 %v3188
    %v3283 = vunpack.c.l.b16 %v3189
    %v3284 = vunpack.c.h.b16 %v3189
    %v3285 = vunpack.c.l.b16 %v3190
    %v3286 = vunpack.c.h.b16 %v3190
    %v3287 = vunpack.c.l.b16 %v3191
    %v3288 = vunpack.c.h.b16 %v3191
    %v3289 = vunpack.c.l.b16 %v3192
    %v3290 = vunpack.c.h.b16 %v3192
    %v3291 = vunpack.c.l.b16 %v3193
    %v3292 = vunpack.c.h.b16 %v3193
    %v3293 = vunpack.c.l.b16 %v3194
    %v3294 = vunpack.c.h.b16 %v3194
    %v3295 = vunpack.c.l.b16 %v3195
    %v3296 = vunpack.c.h.b16 %v3195
    %v3297 = vunpack.c.l.b16 %v3196
    %v3298 = vunpack.c.h.b16 %v3196
    %v3299 = vpack.c.b16 %v3237, %v3235
    %v3300 = vpack.c.b16 %v3238, %v3236
    %v3301 = vpack.c.b16 %v3241, %v3239
    %v3302 = vpack.c.b16 %v3242, %v3240
    %v3303 = vpack.c.b16 %v3245, %v3243
    %v3304 = vpack.c.b16 %v3246, %v3244
    %v3305 = vpack.c.b16 %v3249, %v3247
    %v3306 = vpack.c.b16 %v3250, %v3248
    %v3307 = vpack.c.b16 %v3253, %v3251
    %v3308 = vpack.c.b16 %v3254, %v3252
    %v3309 = vpack.c.b16 %v3257, %v3255
    %v3310 = vpack.c.b16 %v3258, %v3256
    %v3311 = vpack.c.b16 %v3261, %v3259
    %v3312 = vpack.c.b16 %v3262, %v3260
    %v3313 = vpack.c.b16 %v3265, %v3263
    %v3314 = vpack.c.b16 %v3266, %v3264
    %v3315 = vpack.c.b16 %v3269, %v3267
    %v3316 = vpack.c.b16 %v3270, %v3268
    %v3317 = vpack.c.b16 %v3273, %v3271
    %v3318 = vpack.c.b16 %v3274, %v3272
    %v3319 = vpack.c.b16 %v3277, %v3275
    %v3320 = vpack.c.b16 %v3278, %v3276
    %v3321 = vpack.c.b16 %v3281, %v3279
    %v3322 = vpack.c.b16 %v3282, %v3280
    %v3323 = vpack.c.b16 %v3285, %v3283
    %v3324 = vpack.c.b16 %v3286, %v3284
    %v3325 = vpack.c.b16 %v3289, %v3287
    %v3326 = vpack.c.b16 %v3290, %v3288
    %v3327 = vpack.c.b16 %v3293, %v3291
    %v3328 = vpack.c.b16 %v3294, %v3292
    %v3329 = vpack.c.b16 %v3297, %v3295
    %v3330 = vpack.c.b16 %v3298, %v3296
    %3363 = vmatpush.bf16.msra.mxu0 %v3313
    %3364 = vmatpush.bf16.msra.mxu0 %v3311
    %3365 = vmatpush.bf16.msra.mxu0 %v3309
    %3366 = vmatpush.bf16.msra.mxu0 %v3307
    %3367 = vmatpush.bf16.msra.mxu0 %v3305
    %3368 = vmatpush.bf16.msra.mxu0 %v3303
    %3369 = vmatpush.bf16.msra.mxu0 %v3301
    %3370 = vmatpush.bf16.msra.mxu0 %v3299
    %3371 = vmatmul.bf16.gmra.mxu0 %v3163
    %v3372 = vpop.f32.mrf.mxu0
    %v3373 = vadd.f32 %v3199, %v3372
    %v3374 = vpop.f32.mrf.mxu0
    %v3375 = vadd.f32 %v3199, %v3374
    %3376 = vdwg.mxu0
    %3377 = vmatpush.bf16.msra.mxu0 %v3329
    %3378 = vmatpush.bf16.msra.mxu0 %v3327
    %3379 = vmatpush.bf16.msra.mxu0 %v3325
    %3380 = vmatpush.bf16.msra.mxu0 %v3323
    %3381 = vmatpush.bf16.msra.mxu0 %v3321
    %3382 = vmatpush.bf16.msra.mxu0 %v3319
    %3383 = vmatpush.bf16.msra.mxu0 %v3317
    %3384 = vmatpush.bf16.msra.mxu0 %v3315
    %3385 = vmatmul.bf16.gmra.mxu0 %v3164
    %v3386 = vpop.f32.mrf.mxu0
    %v3387 = vadd.f32 %v3373, %v3386
    %v3388 = vpop.f32.mrf.mxu0
    %v3389 = vadd.f32 %v3375, %v3388
    %3390 = vdwg.mxu0
    %3391 = vmatpush.bf16.msra.mxu0 %v3314
    %3392 = vmatpush.bf16.msra.mxu0 %v3312
    %3393 = vmatpush.bf16.msra.mxu0 %v3310
    %3394 = vmatpush.bf16.msra.mxu0 %v3308
    %3395 = vmatpush.bf16.msra.mxu0 %v3306
    %3396 = vmatpush.bf16.msra.mxu0 %v3304
    %3397 = vmatpush.bf16.msra.mxu0 %v3302
    %3398 = vmatpush.bf16.msra.mxu0 %v3300
    %3399 = vmatmul.bf16.gmra.mxu0 %v3163
    %v3400 = vpop.f32.mrf.mxu0
    %v3401 = vadd.f32 %v3200, %v3400
    %v3402 = vpop.f32.mrf.mxu0
    %v3403 = vadd.f32 %v3200, %v3402
    %3404 = vdwg.mxu0
    %3405 = vmatpush.bf16.msra.mxu0 %v3330
    %3406 = vmatpush.bf16.msra.mxu0 %v3328
    %3407 = vmatpush.bf16.msra.mxu0 %v3326
    %3408 = vmatpush.bf16.msra.mxu0 %v3324
    %3409 = vmatpush.bf16.msra.mxu0 %v3322
    %3410 = vmatpush.bf16.msra.mxu0 %v3320
    %3411 = vmatpush.bf16.msra.mxu0 %v3318
    %3412 = vmatpush.bf16.msra.mxu0 %v3316
    %3413 = vmatmul.bf16.gmra.mxu0 %v3164
    %v3414 = vpop.f32.mrf.mxu0
    %v3415 = vadd.f32 %v3401, %v3414
    %v3416 = vpop.f32.mrf.mxu0
    %v3417 = vadd.f32 %v3403, %v3416
    %3418 = vdwg.mxu0
    %v3419 = vmax.f32 %v3387, 0.0
    %v3420 = vmax.f32 %v3415, 0.0
    %v3421 = vmax.f32 %v3389, 0.0
    %v3422 = vmax.f32 %v3417, 0.0
    %v3423 = vpack.c.bf16 %v3421, %v3419
    %v3424 = vpack.c.bf16 %v3422, %v3420
    %v3425 = vld [vmem:[%s5] sm:$0xff]
    %v3426 = vld [vmem:[%s5 + $0x8] sm:$0xff]
    %v3427 = vld [vmem:[%s5 + $0x10] sm:$0xff]
    %v3428 = vld [vmem:[%s5 + $0x18] sm:$0xff]
    %v3429 = vld [vmem:[%s5 + $0x20] sm:$0xff]
    %v3430 = vld [vmem:[%s5 + $0x28] sm:$0xff]
    %v3431 = vld [vmem:[%s5 + $0x30] sm:$0xff]
    %v3432 = vld [vmem:[%s5 + $0x38] sm:$0xff]
    %v3433 = vld [vmem:[%s5 + $0x40] sm:$0xff]
    %v3434 = vld [vmem:[%s5 + $0x48] sm:$0xff]
    %v3435 = vld [vmem:[%s5 + $0x50] sm:$0xff]
    %v3436 = vld [vmem:[%s5 + $0x58] sm:$0xff]
    %v3437 = vld [vmem:[%s5 + $0x60] sm:$0xff]
    %v3438 = vld [vmem:[%s5 + $0x68] sm:$0xff]
    %v3439 = vld [vmem:[%s5 + $0x70] sm:$0xff]
    %v3440 = vld [vmem:[%s5 + $0x78] sm:$0xff]
    %v3441 = vld [vmem:[%s5 + $0x80] sm:$0xff]
    %v3442 = vld [vmem:[%s5 + $0x88] sm:$0xff]
    %v3443 = vld [vmem:[%s5 + $0x90] sm:$0xff]
    %v3444 = vld [vmem:[%s5 + $0x98] sm:$0xff]
    %v3445 = vld [vmem:[%s5 + $0xa0] sm:$0xff]
    %v3446 = vld [vmem:[%s5 + $0xa8] sm:$0xff]
    %v3447 = vld [vmem:[%s5 + $0xb0] sm:$0xff]
    %v3448 = vld [vmem:[%s5 + $0xb8] sm:$0xff]
    %v3449 = vld [vmem:[%s5 + $0xc0] sm:$0xff]
    %v3450 = vld [vmem:[%s5 + $0xc8] sm:$0xff]
    %v3451 = vld [vmem:[%s5 + $0xd0] sm:$0xff]
    %v3452 = vld [vmem:[%s5 + $0xd8] sm:$0xff]
    %v3453 = vld [vmem:[%s5 + $0xe0] sm:$0xff]
    %v3454 = vld [vmem:[%s5 + $0xe8] sm:$0xff]
    %v3455 = vld [vmem:[%s5 + $0xf0] sm:$0xff]
    %v3456 = vld [vmem:[%s5 + $0xf8] sm:$0xff]
    %v3457 = vld [vmem:[%s6] sm:$0x3]
    %v3459 = vperm.slane %v3457, 0
    %v3460 = vperm.slane %v3457, 1
    %v3495 = vunpack.c.l.b16 %v3425
    %v3496 = vunpack.c.h.b16 %v3425
    %v3497 = vunpack.c.l.b16 %v3426
    %v3498 = vunpack.c.h.b16 %v3426
    %v3499 = vunpack.c.l.b16 %v3427
    %v3500 = vunpack.c.h.b16 %v3427
    %v3501 = vunpack.c.l.b16 %v3428
    %v3502 = vunpack.c.h.b16 %v3428
    %v3503 = vunpack.c.l.b16 %v3429
    %v3504 = vunpack.c.h.b16 %v3429
    %v3505 = vunpack.c.l.b16 %v3430
    %v3506 = vunpack.c.h.b16 %v3430
    %v3507 = vunpack.c.l.b16 %v3431
    %v3508 = vunpack.c.h.b16 %v3431
    %v3509 = vunpack.c.l.b16 %v3432
    %v3510 = vunpack.c.h.b16 %v3432
    %v3511 = vunpack.c.l.b16 %v3433
    %v3512 = vunpack.c.h.b16 %v3433
    %v3513 = vunpack.c.l.b16 %v3434
    %v3514 = vunpack.c.h.b16 %v3434
    %v3515 = vunpack.c.l.b16 %v3435
    %v3516 = vunpack.c.h.b16 %v3435
    %v3517 = vunpack.c.l.b16 %v3436
    %v3518 = vunpack.c.h.b16 %v3436
    %v3519 = vunpack.c.l.b16 %v3437
    %v3520 = vunpack.c.h.b16 %v3437
    %v3521 = vunpack.c.l.b16 %v3438
    %v3522 = vunpack.c.h.b16 %v3438
    %v3523 = vunpack.c.l.b16 %v3439
    %v3524 = vunpack.c.h.b16 %v3439
    %v3525 = vunpack.c.l.b16 %v3440
    %v3526 = vunpack.c.h.b16 %v3440
    %v3527 = vunpack.c.l.b16 %v3441
    %v3528 = vunpack.c.h.b16 %v3441
    %v3529 = vunpack.c.l.b16 %v3442
    %v3530 = vunpack.c.h.b16 %v3442
    %v3531 = vunpack.c.l.b16 %v3443
    %v3532 = vunpack.c.h.b16 %v3443
    %v3533 = vunpack.c.l.b16 %v3444
    %v3534 = vunpack.c.h.b16 %v3444
    %v3535 = vunpack.c.l.b16 %v3445
    %v3536 = vunpack.c.h.b16 %v3445
    %v3537 = vunpack.c.l.b16 %v3446
    %v3538 = vunpack.c.h.b16 %v3446
    %v3539 = vunpack.c.l.b16 %v3447
    %v3540 = vunpack.c.h.b16 %v3447
    %v3541 = vunpack.c.l.b16 %v3448
    %v3542 = vunpack.c.h.b16 %v3448
    %v3543 = vunpack.c.l.b16 %v3449
    %v3544 = vunpack.c.h.b16 %v3449
    %v3545 = vunpack.c.l.b16 %v3450
    %v3546 = vunpack.c.h.b16 %v3450
    %v3547 = vunpack.c.l.b16 %v3451
    %v3548 = vunpack.c.h.b16 %v3451
    %v3549 = vunpack.c.l.b16 %v3452
    %v3550 = vunpack.c.h.b16 %v3452
    %v3551 = vunpack.c.l.b16 %v3453
    %v3552 = vunpack.c.h.b16 %v3453
    %v3553 = vunpack.c.l.b16 %v3454
    %v3554 = vunpack.c.h.b16 %v3454
    %v3555 = vunpack.c.l.b16 %v3455
    %v3556 = vunpack.c.h.b16 %v3455
    %v3557 = vunpack.c.l.b16 %v3456
    %v3558 = vunpack.c.h.b16 %v3456
    %v3559 = vpack.c.b16 %v3497, %v3495
    %v3560 = vpack.c.b16 %v3498, %v3496
    %v3561 = vpack.c.b16 %v3501, %v3499
    %v3562 = vpack.c.b16 %v3502, %v3500
    %v3563 = vpack.c.b16 %v3505, %v3503
    %v3564 = vpack.c.b16 %v3506, %v3504
    %v3565 = vpack.c.b16 %v3509, %v3507
    %v3566 = vpack.c.b16 %v3510, %v3508
    %v3567 = vpack.c.b16 %v3513, %v3511
    %v3568 = vpack.c.b16 %v3514, %v3512
    %v3569 = vpack.c.b16 %v3517, %v3515
    %v3570 = vpack.c.b16 %v3518, %v3516
    %v3571 = vpack.c.b16 %v3521, %v3519
    %v3572 = vpack.c.b16 %v3522, %v3520
    %v3573 = vpack.c.b16 %v3525, %v3523
    %v3574 = vpack.c.b16 %v3526, %v3524
    %v3575 = vpack.c.b16 %v3529, %v3527
    %v3576 = vpack.c.b16 %v3530, %v3528
    %v3577 = vpack.c.b16 %v3533, %v3531
    %v3578 = vpack.c.b16 %v3534, %v3532
    %v3579 = vpack.c.b16 %v3537, %v3535
    %v3580 = vpack.c.b16 %v3538, %v3536
    %v3581 = vpack.c.b16 %v3541, %v3539
    %v3582 = vpack.c.b16 %v3542, %v3540
    %v3583 = vpack.c.b16 %v3545, %v3543
    %v3584 = vpack.c.b16 %v3546, %v3544
    %v3585 = vpack.c.b16 %v3549, %v3547
    %v3586 = vpack.c.b16 %v3550, %v3548
    %v3587 = vpack.c.b16 %v3553, %v3551
    %v3588 = vpack.c.b16 %v3554, %v3552
    %v3589 = vpack.c.b16 %v3557, %v3555
    %v3590 = vpack.c.b16 %v3558, %v3556
    %3623 = vmatpush.bf16.msra.mxu0 %v3573
    %3624 = vmatpush.bf16.msra.mxu0 %v3571
    %3625 = vmatpush.bf16.msra.mxu0 %v3569
    %3626 = vmatpush.bf16.msra.mxu0 %v3567
    %3627 = vmatpush.bf16.msra.mxu0 %v3565
    %3628 = vmatpush.bf16.msra.mxu0 %v3563
    %3629 = vmatpush.bf16.msra.mxu0 %v3561
    %3630 = vmatpush.bf16.msra.mxu0 %v3559
    %3631 = vmatmul.bf16.gmra.mxu0 %v3423
    %v3632 = vpop.f32.mrf.mxu0
    %v3633 = vadd.f32 %v3459, %v3632
    %v3634 = vpop.f32.mrf.mxu0
    %v3635 = vadd.f32 %v3459, %v3634
    %3636 = vdwg.mxu0
    %3637 = vmatpush.bf16.msra.mxu0 %v3589
    %3638 = vmatpush.bf16.msra.mxu0 %v3587
    %3639 = vmatpush.bf16.msra.mxu0 %v3585
    %3640 = vmatpush.bf16.msra.mxu0 %v3583
    %3641 = vmatpush.bf16.msra.mxu0 %v3581
    %3642 = vmatpush.bf16.msra.mxu0 %v3579
    %3643 = vmatpush.bf16.msra.mxu0 %v3577
    %3644 = vmatpush.bf16.msra.mxu0 %v3575
    %3645 = vmatmul.bf16.gmra.mxu0 %v3424
    %v3646 = vpop.f32.mrf.mxu0
    %v3647 = vadd.f32 %v3633, %v3646
    %v3648 = vpop.f32.mrf.mxu0
    %v3649 = vadd.f32 %v3635, %v3648
    %3650 = vdwg.mxu0
    %3651 = vmatpush.bf16.msra.mxu0 %v3574
    %3652 = vmatpush.bf16.msra.mxu0 %v3572
    %3653 = vmatpush.bf16.msra.mxu0 %v3570
    %3654 = vmatpush.bf16.msra.mxu0 %v3568
    %3655 = vmatpush.bf16.msra.mxu0 %v3566
    %3656 = vmatpush.bf16.msra.mxu0 %v3564
    %3657 = vmatpush.bf16.msra.mxu0 %v3562
    %3658 = vmatpush.bf16.msra.mxu0 %v3560
    %3659 = vmatmul.bf16.gmra.mxu0 %v3423
    %v3660 = vpop.f32.mrf.mxu0
    %v3661 = vadd.f32 %v3460, %v3660
    %v3662 = vpop.f32.mrf.mxu0
    %v3663 = vadd.f32 %v3460, %v3662
    %3664 = vdwg.mxu0
    %3665 = vmatpush.bf16.msra.mxu0 %v3590
    %3666 = vmatpush.bf16.msra.mxu0 %v3588
    %3667 = vmatpush.bf16.msra.mxu0 %v3586
    %3668 = vmatpush.bf16.msra.mxu0 %v3584
    %3669 = vmatpush.bf16.msra.mxu0 %v3582
    %3670 = vmatpush.bf16.msra.mxu0 %v3580
    %3671 = vmatpush.bf16.msra.mxu0 %v3578
    %3672 = vmatpush.bf16.msra.mxu0 %v3576
    %3673 = vmatmul.bf16.gmra.mxu0 %v3424
    %v3674 = vpop.f32.mrf.mxu0
    %v3675 = vadd.f32 %v3661, %v3674
    %v3676 = vpop.f32.mrf.mxu0
    %v3677 = vadd.f32 %v3663, %v3676
    %3678 = vdwg.mxu0
    %v3679 = vmax.f32 %v3647, 0.0
    %v3680 = vmax.f32 %v3675, 0.0
    %v3681 = vmax.f32 %v3649, 0.0
    %v3682 = vmax.f32 %v3677, 0.0
    %v3683 = vpack.c.bf16 %v3681, %v3679
    %v3684 = vpack.c.bf16 %v3682, %v3680
    %v3685 = vld [vmem:[%s7] sm:$0xf]
    %v3686 = vld [vmem:[%s7 + $0x4] sm:$0xf]
    %v3687 = vld [vmem:[%s7 + $0x8] sm:$0xf]
    %v3688 = vld [vmem:[%s7 + $0xc] sm:$0xf]
    %v3689 = vld [vmem:[%s7 + $0x10] sm:$0xf]
    %v3690 = vld [vmem:[%s7 + $0x14] sm:$0xf]
    %v3691 = vld [vmem:[%s7 + $0x18] sm:$0xf]
    %v3692 = vld [vmem:[%s7 + $0x1c] sm:$0xf]
    %v3693 = vld [vmem:[%s7 + $0x20] sm:$0xf]
    %v3694 = vld [vmem:[%s7 + $0x24] sm:$0xf]
    %v3695 = vld [vmem:[%s7 + $0x28] sm:$0xf]
    %v3696 = vld [vmem:[%s7 + $0x2c] sm:$0xf]
    %v3697 = vld [vmem:[%s7 + $0x30] sm:$0xf]
    %v3698 = vld [vmem:[%s7 + $0x34] sm:$0xf]
    %v3699 = vld [vmem:[%s7 + $0x38] sm:$0xf]
    %v3700 = vld [vmem:[%s7 + $0x3c] sm:$0xf]
    %v3701 = vld [vmem:[%s7 + $0x40] sm:$0xf]
    %v3702 = vld [vmem:[%s7 + $0x44] sm:$0xf]
    %v3703 = vld [vmem:[%s7 + $0x48] sm:$0xf]
    %v3704 = vld [vmem:[%s7 + $0x4c] sm:$0xf]
    %v3705 = vld [vmem:[%s7 + $0x50] sm:$0xf]
    %v3706 = vld [vmem:[%s7 + $0x54] sm:$0xf]
    %v3707 = vld [vmem:[%s7 + $0x58] sm:$0xf]
    %v3708 = vld [vmem:[%s7 + $0x5c] sm:$0xf]
    %v3709 = vld [vmem:[%s7 + $0x60] sm:$0xf]
    %v3710 = vld [vmem:[%s7 + $0x64] sm:$0xf]
    %v3711 = vld [vmem:[%s7 + $0x68] sm:$0xf]
    %v3712 = vld [vmem:[%s7 + $0x6c] sm:$0xf]
    %v3713 = vld [vmem:[%s7 + $0x70] sm:$0xf]
    %v3714 = vld [vmem:[%s7 + $0x74] sm:$0xf]
    %v3715 = vld [vmem:[%s7 + $0x78] sm:$0xf]
    %v3716 = vld [vmem:[%s7 + $0x7c] sm:$0xf]
    %v3717 = vld [vmem:[%s8] sm:$0x1]
    %v3719 = vperm.slane %v3717, 0
    %v3753 = vunpack.c.l.b16 %v3685
    %v3754 = vunpack.c.l.b16 %v3686
    %v3755 = vunpack.c.l.b16 %v3687
    %v3756 = vunpack.c.l.b16 %v3688
    %v3757 = vunpack.c.l.b16 %v3689
    %v3758 = vunpack.c.l.b16 %v3690
    %v3759 = vunpack.c.l.b16 %v3691
    %v3760 = vunpack.c.l.b16 %v3692
    %v3761 = vunpack.c.l.b16 %v3693
    %v3762 = vunpack.c.l.b16 %v3694
    %v3763 = vunpack.c.l.b16 %v3695
    %v3764 = vunpack.c.l.b16 %v3696
    %v3765 = vunpack.c.l.b16 %v3697
    %v3766 = vunpack.c.l.b16 %v3698
    %v3767 = vunpack.c.l.b16 %v3699
    %v3768 = vunpack.c.l.b16 %v3700
    %v3769 = vunpack.c.l.b16 %v3701
    %v3770 = vunpack.c.l.b16 %v3702
    %v3771 = vunpack.c.l.b16 %v3703
    %v3772 = vunpack.c.l.b16 %v3704
    %v3773 = vunpack.c.l.b16 %v3705
    %v3774 = vunpack.c.l.b16 %v3706
    %v3775 = vunpack.c.l.b16 %v3707
    %v3776 = vunpack.c.l.b16 %v3708
    %v3777 = vunpack.c.l.b16 %v3709
    %v3778 = vunpack.c.l.b16 %v3710
    %v3779 = vunpack.c.l.b16 %v3711
    %v3780 = vunpack.c.l.b16 %v3712
    %v3781 = vunpack.c.l.b16 %v3713
    %v3782 = vunpack.c.l.b16 %v3714
    %v3783 = vunpack.c.l.b16 %v3715
    %v3784 = vunpack.c.l.b16 %v3716
    %v3785 = vpack.c.b16 %v3754, %v3753
    %v3786 = vpack.c.b16 %v3756, %v3755
    %v3787 = vpack.c.b16 %v3758, %v3757
    %v3788 = vpack.c.b16 %v3760, %v3759
    %v3789 = vpack.c.b16 %v3762, %v3761
    %v3790 = vpack.c.b16 %v3764, %v3763
    %v3791 = vpack.c.b16 %v3766, %v3765
    %v3792 = vpack.c.b16 %v3768, %v3767
    %v3793 = vpack.c.b16 %v3770, %v3769
    %v3794 = vpack.c.b16 %v3772, %v3771
    %v3795 = vpack.c.b16 %v3774, %v3773
    %v3796 = vpack.c.b16 %v3776, %v3775
    %v3797 = vpack.c.b16 %v3778, %v3777
    %v3798 = vpack.c.b16 %v3780, %v3779
    %v3799 = vpack.c.b16 %v3782, %v3781
    %v3800 = vpack.c.b16 %v3784, %v3783
    %3817 = vmatpush.bf16.msra.mxu0 %v3792
    %3818 = vmatpush.bf16.msra.mxu0 %v3791
    %3819 = vmatpush.bf16.msra.mxu0 %v3790
    %3820 = vmatpush.bf16.msra.mxu0 %v3789
    %3821 = vmatpush.bf16.msra.mxu0 %v3788
    %3822 = vmatpush.bf16.msra.mxu0 %v3787
    %3823 = vmatpush.bf16.msra.mxu0 %v3786
    %3824 = vmatpush.bf16.msra.mxu0 %v3785
    %3825 = vmatmul.bf16.gmra.mxu0 %v3683
    %v3826 = vpop.f32.mrf.mxu0
    %v3827 = vadd.f32 %v3719, %v3826
    %v3828 = vpop.f32.mrf.mxu0
    %v3829 = vadd.f32 %v3719, %v3828
    %3830 = vdwg.mxu0
    %3831 = vmatpush.bf16.msra.mxu0 %v3800
    %3832 = vmatpush.bf16.msra.mxu0 %v3799
    %3833 = vmatpush.bf16.msra.mxu0 %v3798
    %3834 = vmatpush.bf16.msra.mxu0 %v3797
    %3835 = vmatpush.bf16.msra.mxu0 %v3796
    %3836 = vmatpush.bf16.msra.mxu0 %v3795
    %3837 = vmatpush.bf16.msra.mxu0 %v3794
    %3838 = vmatpush.bf16.msra.mxu0 %v3793
    %3839 = vmatmul.bf16.gmra.mxu0 %v3684
    %v3840 = vpop.f32.mrf.mxu0
    %v3841 = vadd.f32 %v3827, %v3840
    %v3842 = vpop.f32.mrf.mxu0
    %v3843 = vadd.f32 %v3829, %v3842
    %3844 = vdwg.mxu0
    %3845 = vst [vmem:[#allocation2] sm:$0xff] %v3841
    %3846 = vst [vmem:[#allocation2 + $0x8] sm:$0xff] %v3843
    // Predicated region
    $region38: #{neural_net_forward.1} parent=1 // pred_check
      _
    $region39: #{neural_net_forward.1} parent=1 // pred_check_branch
      %3848 = sbr.rel (0) target = $region41
    $region40: #{neural_net_forward.1} parent=1 // pred_region
      %3850 = vsyncadd [#allocation3], 0
      %s3851 = sshll.u32 [#allocation2], 4
      %s3852 = int_to_ptr.vmem [resolvable:$true] %s3851
      %s3853 = sshll.u32 %s9, 4
      %s3854 = int_to_ptr.hbm [resolvable:$true] %s3853
      %3859 = dma.vmem_to_hbm [thread:$0]  %s3852, 256, %s3854, [#allocation3], 128, 128, 8
    $region41: #{neural_net_forward.1} parent=1 // pred_fallthru
      _
    // Predicated region
    $region42: #{neural_net_forward.1} parent=1 // pred_check
      _
    $region43: #{neural_net_forward.1} parent=1 // pred_check_branch
      %3861 = sbr.rel (0) target = $region45
    $region44: #{neural_net_forward.1} parent=1 // pred_region
      %3863 = dma.done [#allocation3], 256
    $region45: #{neural_net_forward.1} parent=1 // pred_fallthru
      _
    %3864 = vsyncpa [#allocation3], 1

</llo_original>
